<compile_context>
chip_gen: v7x
topology: tpu7x:2x2x1
jax: 0.10.0
libtpu: 0.0.40
codegen_flags: <defaults>
</compile_context>

<pallas_src>
import functools

import jax
import jax.numpy as jnp
from jax import lax
from jax.experimental import pallas as pl
from jax.experimental.pallas import tpu as pltpu


# ----------------------------- helpers (host side) ---------------------------
def _round_up(x, m):
    return ((x + m - 1) // m) * m


# Destination gate-block -> PyTorch gate index.  PyTorch stacks (i, f, g, o);
# we pack as (i, f, o, g) so the three sigmoid gates are contiguous lanes.
_GATE_PERM = (0, 1, 3, 2)


def _pack_gates_T(w, d_in_p, h_p):
    """PyTorch (4H, Din) gate-stacked weight -> padded transposed (Dp, 4*Hp).

    Each destination gate block is placed at [:Din, d*Hp : d*Hp + H] so gate
    slices in the kernel are lane-aligned views.
    """
    h4, d_in = w.shape
    h = h4 // 4
    out = jnp.zeros((d_in_p, 4 * h_p), jnp.float32)
    for dst, src in enumerate(_GATE_PERM):
        blk = jnp.asarray(w[src * h:(src + 1) * h, :], jnp.float32).T  # (Din, H)
        out = out.at[:d_in, dst * h_p:dst * h_p + h].set(blk)
    return out


def _pack_bias(b_ih, b_hh, h_p):
    h = b_ih.shape[0] // 4
    b = jnp.asarray(b_ih + b_hh, jnp.float32)
    out = jnp.zeros((1, 4 * h_p), jnp.float32)
    for dst, src in enumerate(_GATE_PERM):
        out = out.at[0, dst * h_p:dst * h_p + h].set(b[src * h:(src + 1) * h])
    return out


# ------------------------------- fused kernel --------------------------------
def _make_fused_kernel(num_layers, T, Bp, Hp):
    """Kernel refs:
        x_ref                       (T*Bp, Dp)    flattened time-major input
        [wih_l, whh_l, b_l] * L     (Din_p, 4Hp), (Hp, 4Hp), (1, 4Hp)
        fcw_ref, fcb_ref            (Hp, Cp), (1, Cp)
        out_ref                     (Bp, Cp)
      scratch:
        gates_scr (T*Bp, 4Hp), hs_scr (T*Bp, Hp)
    """

    def kernel(*refs):
        x_ref = refs[0]
        layer_refs = refs[1:1 + 3 * num_layers]
        fcw_ref = refs[1 + 3 * num_layers]
        fcb_ref = refs[2 + 3 * num_layers]
        out_ref = refs[3 + 3 * num_layers]
        gates_scr, hs_scr = refs[4 + 3 * num_layers:]

        h_last = None
        for layer in range(num_layers):
            wih_ref = layer_refs[3 * layer + 0]
            whh_ref = layer_refs[3 * layer + 1]
            b_ref = layer_refs[3 * layer + 2]
            store_hs = layer < num_layers - 1

            # ---- hoisted input projection: one big MXU matmul for all steps.
            inp = x_ref[...] if layer == 0 else hs_scr[...]
            gates_scr[...] = (
                jnp.dot(inp, wih_ref[...], preferred_element_type=jnp.float32)
                + b_ref[...]
            )

            # ---- recurrence (h0 = c0 = 0, matches torch.zeros in forward).
            whh = whh_ref[...]                      # load once per layer
            h0 = jnp.zeros((Bp, Hp), jnp.float32)
            c0 = jnp.zeros((Bp, Hp), jnp.float32)

            def step(t, carry, whh=whh, store_hs=store_hs):
                h, c = carry
                row = pl.multiple_of(t * Bp, Bp)
                g = gates_scr[pl.ds(row, Bp), :] + jnp.dot(
                    h, whh, preferred_element_type=jnp.float32)
                # gate column order: (i, f, o, g) -> one EUP sigmoid slab.
                sig = jax.nn.sigmoid(g[:, 0:3 * Hp])
                i_g = sig[:, 0 * Hp:1 * Hp]
                f_g = sig[:, 1 * Hp:2 * Hp]
                o_g = sig[:, 2 * Hp:3 * Hp]
                g_g = jnp.tanh(g[:, 3 * Hp:4 * Hp])
                c_new = f_g * c + i_g * g_g
                h_new = o_g * jnp.tanh(c_new)
                if store_hs:  # last layer only needs h_T
                    hs_scr[pl.ds(row, Bp), :] = h_new
                return (h_new, c_new)

            h_last, _ = lax.fori_loop(0, T, step, (h0, c0), unroll=True)

        # ---- fused FC head on the last timestep's hidden state.
        out_ref[...] = (
            jnp.dot(h_last, fcw_ref[...], preferred_element_type=jnp.float32)
            + fcb_ref[...]
        ).astype(out_ref.dtype)

    return kernel


# ------------------------------- model wrapper --------------------------------
@functools.partial(jax.jit, static_argnames=())
def lstm_model_forward(params, x_btd):
    """x_btd: (B, T, D) as in the PyTorch batch_first module -> (B, num_classes)."""
    B, T, D = x_btd.shape
    H = params["lstm"][0]["w_hh"].shape[1]
    C = params["fc"]["w"].shape[0]
    num_layers = len(params["lstm"])

    Bp = _round_up(max(B, 8), 8)      # f32 sublane
    Hp = _round_up(H, 128)            # lane-aligned gate blocks
    Dp = _round_up(D, 128)
    Cp = _round_up(C, 128)            # lane-dense output store

    # time-major, pad (B, D) -> (Bp, Dp), flatten (T, Bp) -> T*Bp rows.
    x_tbd = jnp.transpose(x_btd.astype(jnp.float32), (1, 0, 2))     # (T, B, D)
    x_pad = jnp.zeros((T, Bp, Dp), jnp.float32).at[:, :B, :D].set(x_tbd)
    x_flat = x_pad.reshape(T * Bp, Dp)

    args = [x_flat]
    for layer, lp in enumerate(params["lstm"]):
        d_in_p = Dp if layer == 0 else Hp
        args.append(_pack_gates_T(lp["w_ih"], d_in_p, Hp))     # (Din_p, 4Hp)
        args.append(_pack_gates_T(lp["w_hh"], Hp, Hp))         # (Hp,   4Hp)
        args.append(_pack_bias(lp["b_ih"], lp["b_hh"], Hp))    # (1,    4Hp)

    fcw = jnp.zeros((Hp, Cp), jnp.float32).at[:H, :C].set(
        jnp.asarray(params["fc"]["w"], jnp.float32).T)
    fcb = jnp.zeros((1, Cp), jnp.float32).at[0, :C].set(
        jnp.asarray(params["fc"]["b"], jnp.float32))
    args += [fcw, fcb]

    kernel = _make_fused_kernel(num_layers, T, Bp, Hp)

    out_pad = pl.pallas_call(
        kernel,
        out_shape=jax.ShapeDtypeStruct((Bp, Cp), jnp.float32),
        in_specs=[pl.BlockSpec(memory_space=pltpu.MemorySpace.VMEM)] * len(args),
        out_specs=pl.BlockSpec(memory_space=pltpu.MemorySpace.VMEM),
        scratch_shapes=[
            pltpu.VMEM((T * Bp, 4 * Hp), jnp.float32),   # hoisted gate slab
            pltpu.VMEM((T * Bp, Hp), jnp.float32),       # inter-layer hidden states
        ],
        compiler_params=pltpu.CompilerParams(vmem_limit_bytes=64 << 20),
    )(*args)

    return out_pad[:B, :C]


# ------------------------------- init & reference ----------------------------
def init_params(key, input_size, hidden_size, num_layers, num_classes):
    """PyTorch-style uniform(-1/sqrt(H), 1/sqrt(H)) init, deterministic."""
    params = {"lstm": [], "fc": None}
    k = 1.0 / jnp.sqrt(jnp.float32(hidden_size))
    for layer in range(num_layers):
        d_in = input_size if layer == 0 else hidden_size
        key, k1, k2, k3, k4 = jax.random.split(key, 5)
        params["lstm"].append(dict(
            w_ih=jax.random.uniform(k1, (4 * hidden_size, d_in), jnp.float32, -k, k),
            w_hh=jax.random.uniform(k2, (4 * hidden_size, hidden_size), jnp.float32, -k, k),
            b_ih=jax.random.uniform(k3, (4 * hidden_size,), jnp.float32, -k, k),
            b_hh=jax.random.uniform(k4, (4 * hidden_size,), jnp.float32, -k, k),
        ))
    key, k1, k2 = jax.random.split(key, 3)
    params["fc"] = dict(
        w=jax.random.uniform(k1, (num_classes, hidden_size), jnp.float32, -k, k),
        b=jax.random.uniform(k2, (num_classes,), jnp.float32, -k, k),
    )
    return params


def lstm_reference(params, x_btd):
    """Pure-JAX mirror of the PyTorch forward, for correctness checking."""
    x = jnp.transpose(x_btd.astype(jnp.float32), (1, 0, 2))   # (T, B, D)
    T, B, _ = x.shape
    H = params["lstm"][0]["w_hh"].shape[1]
    for lp in params["lstm"]:
        b = lp["b_ih"] + lp["b_hh"]
        h = jnp.zeros((B, H), jnp.float32)
        c = jnp.zeros((B, H), jnp.float32)
        outs = []
        for t in range(T):
            g = x[t] @ lp["w_ih"].T + h @ lp["w_hh"].T + b
            i_g = jax.nn.sigmoid(g[:, 0 * H:1 * H])
            f_g = jax.nn.sigmoid(g[:, 1 * H:2 * H])
            g_g = jnp.tanh(g[:, 2 * H:3 * H])
            o_g = jax.nn.sigmoid(g[:, 3 * H:4 * H])
            c = f_g * c + i_g * g_g
            h = o_g * jnp.tanh(c)
            outs.append(h)
        x = jnp.stack(outs, axis=0)
    return x[-1] @ params["fc"]["w"].T + params["fc"]["b"]


# ----------------------------------- main -------------------------------------
if __name__ == "__main__":
    input_size, hidden_size, num_layers, num_classes = 16, 32, 2, 4
    batch, seq = 2, 8

    key = jax.random.PRNGKey(0)
    key, kx, kp = jax.random.split(key, 3)
    x = jax.random.normal(kx, (batch, seq, input_size), jnp.float32)
    params = init_params(kp, input_size, hidden_size, num_layers, num_classes)

    out = lstm_model_forward(params, x)
    out = jax.block_until_ready(out)
    assert out.shape == (batch, num_classes)

    ref = jax.block_until_ready(lstm_reference(params, x))
    assert jnp.all(jnp.isfinite(out))
    assert jnp.allclose(out, ref, atol=2e-2, rtol=2e-2)

    print("KERNEL_OK")
</pallas_src>

<mosaic_0001>
module attributes {stable_mosaic.version = 11 : i64} {
  func.func @kernel(%arg0: memref<64x128xf32, #tpu.memory_space<vmem>>, %arg1: memref<128x512xf32, #tpu.memory_space<vmem>>, %arg2: memref<128x512xf32, #tpu.memory_space<vmem>>, %arg3: memref<1x512xf32, #tpu.memory_space<vmem>>, %arg4: memref<128x512xf32, #tpu.memory_space<vmem>>, %arg5: memref<128x512xf32, #tpu.memory_space<vmem>>, %arg6: memref<1x512xf32, #tpu.memory_space<vmem>>, %arg7: memref<128x128xf32, #tpu.memory_space<vmem>>, %arg8: memref<1x128xf32, #tpu.memory_space<vmem>>, %arg9: memref<8x128xf32, #tpu.memory_space<vmem>>, %arg10: memref<64x512xf32, #tpu.memory_space<vmem>>, %arg11: memref<64x128xf32, #tpu.memory_space<vmem>>) attributes {dimension_semantics = [], scalar_prefetch = 0 : i64, scratch_operands = 2 : i64, tpu.core_type = #tpu.core_type<tc>} {
    %c0 = arith.constant 0 : index
    %c0_0 = arith.constant 0 : index
    %0 = vector.load %arg0[%c0, %c0_0] : memref<64x128xf32, #tpu.memory_space<vmem>>, vector<64x128xf32>
    %c0_1 = arith.constant 0 : index
    %c0_2 = arith.constant 0 : index
    %1 = vector.load %arg1[%c0_1, %c0_2] : memref<128x512xf32, #tpu.memory_space<vmem>>, vector<128x512xf32>
    %cst = arith.constant dense<0.000000e+00> : vector<64x512xf32>
    %2 = tpu.matmul %0, %1, %cst {dimension_numbers = #tpu.dot_dimension_numbers<[1], [0], [0], [1], [0, 0, 1, 1], [], []>} : vector<64x128xf32>, vector<128x512xf32>, vector<64x512xf32> -> vector<64x512xf32>
    %c0_3 = arith.constant 0 : index
    %c0_4 = arith.constant 0 : index
    %3 = vector.load %arg3[%c0_3, %c0_4] : memref<1x512xf32, #tpu.memory_space<vmem>>, vector<1x512xf32>
    %4 = vector.broadcast %3 : vector<1x512xf32> to vector<64x512xf32>
    %5 = arith.addf %2, %4 : vector<64x512xf32>
    %c0_5 = arith.constant 0 : index
    %c0_6 = arith.constant 0 : index
    %6 = vector.load %arg10[%c0_5, %c0_6] : memref<64x512xf32, #tpu.memory_space<vmem>>, vector<64x512xf32>
    tpu.vector_store %arg10[%c0_5, %c0_6], %5 {strides = array<i32>} : memref<64x512xf32, #tpu.memory_space<vmem>>, vector<64x512xf32>,
    %c0_7 = arith.constant 0 : index
    %c0_8 = arith.constant 0 : index
    %7 = vector.load %arg2[%c0_7, %c0_8] : memref<128x512xf32, #tpu.memory_space<vmem>>, vector<128x512xf32>
    %cst_9 = arith.constant 0.000000e+00 : f32
    %8 = vector.broadcast %cst_9 : f32 to vector<8x128xf32>
    %cst_10 = arith.constant 0.000000e+00 : f32
    %9 = vector.broadcast %cst_10 : f32 to vector<8x128xf32>
    %c0_i32 = arith.constant 0 : i32
    %c8_i32 = arith.constant 8 : i32
    %10 = arith.muli %c0_i32, %c8_i32 : i32
    %11 = tpu.assume_multiple %10, 8 : i32
    %12 = arith.index_cast %11 : i32 to index
    %c0_11 = arith.constant 0 : index
    %13 = vector.load %arg10[%12, %c0_11] : memref<64x512xf32, #tpu.memory_space<vmem>>, vector<8x512xf32>
    %cst_12 = arith.constant dense<0.000000e+00> : vector<8x512xf32>
    %14 = tpu.matmul %8, %7, %cst_12 {dimension_numbers = #tpu.dot_dimension_numbers<[1], [0], [0], [1], [0, 0, 1, 1], [], []>} : vector<8x128xf32>, vector<128x512xf32>, vector<8x512xf32> -> vector<8x512xf32>
    %15 = arith.addf %13, %14 : vector<8x512xf32>
    %16 = vector.extract_strided_slice %15 {offsets = [0, 0], sizes = [8, 384], strides = [1, 1]} : vector<8x512xf32> to vector<8x384xf32>
    %17 = arith.negf %16 : vector<8x384xf32>
    %18 = math.exp %17 : vector<8x384xf32>
    %cst_13 = arith.constant 1.000000e+00 : f32
    %19 = vector.broadcast %cst_13 : f32 to vector<8x384xf32>
    %20 = arith.addf %19, %18 : vector<8x384xf32>
    %21 = arith.divf %19, %20 : vector<8x384xf32>
    %22 = vector.extract_strided_slice %21 {offsets = [0, 0], sizes = [8, 128], strides = [1, 1]} : vector<8x384xf32> to vector<8x128xf32>
    %23 = vector.extract_strided_slice %21 {offsets = [0, 128], sizes = [8, 128], strides = [1, 1]} : vector<8x384xf32> to vector<8x128xf32>
    %24 = vector.extract_strided_slice %21 {offsets = [0, 256], sizes = [8, 128], strides = [1, 1]} : vector<8x384xf32> to vector<8x128xf32>
    %25 = vector.extract_strided_slice %15 {offsets = [0, 384], sizes = [8, 128], strides = [1, 1]} : vector<8x512xf32> to vector<8x128xf32>
    %26 = math.tanh %25 : vector<8x128xf32>
    %27 = arith.mulf %23, %9 : vector<8x128xf32>
    %28 = arith.mulf %22, %26 : vector<8x128xf32>
    %29 = arith.addf %27, %28 : vector<8x128xf32>
    %30 = math.tanh %29 : vector<8x128xf32>
    %31 = arith.mulf %24, %30 : vector<8x128xf32>
    %32 = arith.index_cast %11 : i32 to index
    %c0_14 = arith.constant 0 : index
    %33 = vector.load %arg11[%32, %c0_14] : memref<64x128xf32, #tpu.memory_space<vmem>>, vector<8x128xf32>
    tpu.vector_store %arg11[%32, %c0_14], %31 {strides = array<i32>} : memref<64x128xf32, #tpu.memory_space<vmem>>, vector<8x128xf32>,
    %c1_i32 = arith.constant 1 : i32
    %c8_i32_15 = arith.constant 8 : i32
    %34 = arith.muli %c1_i32, %c8_i32_15 : i32
    %35 = tpu.assume_multiple %34, 8 : i32
    %36 = arith.index_cast %35 : i32 to index
    %c0_16 = arith.constant 0 : index
    %37 = vector.load %arg10[%36, %c0_16] : memref<64x512xf32, #tpu.memory_space<vmem>>, vector<8x512xf32>
    %cst_17 = arith.constant dense<0.000000e+00> : vector<8x512xf32>
    %38 = tpu.matmul %31, %7, %cst_17 {dimension_numbers = #tpu.dot_dimension_numbers<[1], [0], [0], [1], [0, 0, 1, 1], [], []>} : vector<8x128xf32>, vector<128x512xf32>, vector<8x512xf32> -> vector<8x512xf32>
    %39 = arith.addf %37, %38 : vector<8x512xf32>
    %40 = vector.extract_strided_slice %39 {offsets = [0, 0], sizes = [8, 384], strides = [1, 1]} : vector<8x512xf32> to vector<8x384xf32>
    %41 = arith.negf %40 : vector<8x384xf32>
    %42 = math.exp %41 : vector<8x384xf32>
    %cst_18 = arith.constant 1.000000e+00 : f32
    %43 = vector.broadcast %cst_18 : f32 to vector<8x384xf32>
    %44 = arith.addf %43, %42 : vector<8x384xf32>
    %45 = arith.divf %43, %44 : vector<8x384xf32>
    %46 = vector.extract_strided_slice %45 {offsets = [0, 0], sizes = [8, 128], strides = [1, 1]} : vector<8x384xf32> to vector<8x128xf32>
    %47 = vector.extract_strided_slice %45 {offsets = [0, 128], sizes = [8, 128], strides = [1, 1]} : vector<8x384xf32> to vector<8x128xf32>
    %48 = vector.extract_strided_slice %45 {offsets = [0, 256], sizes = [8, 128], strides = [1, 1]} : vector<8x384xf32> to vector<8x128xf32>
    %49 = vector.extract_strided_slice %39 {offsets = [0, 384], sizes = [8, 128], strides = [1, 1]} : vector<8x512xf32> to vector<8x128xf32>
    %50 = math.tanh %49 : vector<8x128xf32>
    %51 = arith.mulf %47, %29 : vector<8x128xf32>
    %52 = arith.mulf %46, %50 : vector<8x128xf32>
    %53 = arith.addf %51, %52 : vector<8x128xf32>
    %54 = math.tanh %53 : vector<8x128xf32>
    %55 = arith.mulf %48, %54 : vector<8x128xf32>
    %56 = arith.index_cast %35 : i32 to index
    %c0_19 = arith.constant 0 : index
    %57 = vector.load %arg11[%56, %c0_19] : memref<64x128xf32, #tpu.memory_space<vmem>>, vector<8x128xf32>
    tpu.vector_store %arg11[%56, %c0_19], %55 {strides = array<i32>} : memref<64x128xf32, #tpu.memory_space<vmem>>, vector<8x128xf32>,
    %c2_i32 = arith.constant 2 : i32
    %c8_i32_20 = arith.constant 8 : i32
    %58 = arith.muli %c2_i32, %c8_i32_20 : i32
    %59 = tpu.assume_multiple %58, 8 : i32
    %60 = arith.index_cast %59 : i32 to index
    %c0_21 = arith.constant 0 : index
    %61 = vector.load %arg10[%60, %c0_21] : memref<64x512xf32, #tpu.memory_space<vmem>>, vector<8x512xf32>
    %cst_22 = arith.constant dense<0.000000e+00> : vector<8x512xf32>
    %62 = tpu.matmul %55, %7, %cst_22 {dimension_numbers = #tpu.dot_dimension_numbers<[1], [0], [0], [1], [0, 0, 1, 1], [], []>} : vector<8x128xf32>, vector<128x512xf32>, vector<8x512xf32> -> vector<8x512xf32>
    %63 = arith.addf %61, %62 : vector<8x512xf32>
    %64 = vector.extract_strided_slice %63 {offsets = [0, 0], sizes = [8, 384], strides = [1, 1]} : vector<8x512xf32> to vector<8x384xf32>
    %65 = arith.negf %64 : vector<8x384xf32>
    %66 = math.exp %65 : vector<8x384xf32>
    %cst_23 = arith.constant 1.000000e+00 : f32
    %67 = vector.broadcast %cst_23 : f32 to vector<8x384xf32>
    %68 = arith.addf %67, %66 : vector<8x384xf32>
    %69 = arith.divf %67, %68 : vector<8x384xf32>
    %70 = vector.extract_strided_slice %69 {offsets = [0, 0], sizes = [8, 128], strides = [1, 1]} : vector<8x384xf32> to vector<8x128xf32>
    %71 = vector.extract_strided_slice %69 {offsets = [0, 128], sizes = [8, 128], strides = [1, 1]} : vector<8x384xf32> to vector<8x128xf32>
    %72 = vector.extract_strided_slice %69 {offsets = [0, 256], sizes = [8, 128], strides = [1, 1]} : vector<8x384xf32> to vector<8x128xf32>
    %73 = vector.extract_strided_slice %63 {offsets = [0, 384], sizes = [8, 128], strides = [1, 1]} : vector<8x512xf32> to vector<8x128xf32>
    %74 = math.tanh %73 : vector<8x128xf32>
    %75 = arith.mulf %71, %53 : vector<8x128xf32>
    %76 = arith.mulf %70, %74 : vector<8x128xf32>
    %77 = arith.addf %75, %76 : vector<8x128xf32>
    %78 = math.tanh %77 : vector<8x128xf32>
    %79 = arith.mulf %72, %78 : vector<8x128xf32>
    %80 = arith.index_cast %59 : i32 to index
    %c0_24 = arith.constant 0 : index
    %81 = vector.load %arg11[%80, %c0_24] : memref<64x128xf32, #tpu.memory_space<vmem>>, vector<8x128xf32>
    tpu.vector_store %arg11[%80, %c0_24], %79 {strides = array<i32>} : memref<64x128xf32, #tpu.memory_space<vmem>>, vector<8x128xf32>,
    %c3_i32 = arith.constant 3 : i32
    %c8_i32_25 = arith.constant 8 : i32
    %82 = arith.muli %c3_i32, %c8_i32_25 : i32
    %83 = tpu.assume_multiple %82, 8 : i32
    %84 = arith.index_cast %83 : i32 to index
    %c0_26 = arith.constant 0 : index
    %85 = vector.load %arg10[%84, %c0_26] : memref<64x512xf32, #tpu.memory_space<vmem>>, vector<8x512xf32>
    %cst_27 = arith.constant dense<0.000000e+00> : vector<8x512xf32>
    %86 = tpu.matmul %79, %7, %cst_27 {dimension_numbers = #tpu.dot_dimension_numbers<[1], [0], [0], [1], [0, 0, 1, 1], [], []>} : vector<8x128xf32>, vector<128x512xf32>, vector<8x512xf32> -> vector<8x512xf32>
    %87 = arith.addf %85, %86 : vector<8x512xf32>
    %88 = vector.extract_strided_slice %87 {offsets = [0, 0], sizes = [8, 384], strides = [1, 1]} : vector<8x512xf32> to vector<8x384xf32>
    %89 = arith.negf %88 : vector<8x384xf32>
    %90 = math.exp %89 : vector<8x384xf32>
    %cst_28 = arith.constant 1.000000e+00 : f32
    %91 = vector.broadcast %cst_28 : f32 to vector<8x384xf32>
    %92 = arith.addf %91, %90 : vector<8x384xf32>
    %93 = arith.divf %91, %92 : vector<8x384xf32>
    %94 = vector.extract_strided_slice %93 {offsets = [0, 0], sizes = [8, 128], strides = [1, 1]} : vector<8x384xf32> to vector<8x128xf32>
    %95 = vector.extract_strided_slice %93 {offsets = [0, 128], sizes = [8, 128], strides = [1, 1]} : vector<8x384xf32> to vector<8x128xf32>
    %96 = vector.extract_strided_slice %93 {offsets = [0, 256], sizes = [8, 128], strides = [1, 1]} : vector<8x384xf32> to vector<8x128xf32>
    %97 = vector.extract_strided_slice %87 {offsets = [0, 384], sizes = [8, 128], strides = [1, 1]} : vector<8x512xf32> to vector<8x128xf32>
    %98 = math.tanh %97 : vector<8x128xf32>
    %99 = arith.mulf %95, %77 : vector<8x128xf32>
    %100 = arith.mulf %94, %98 : vector<8x128xf32>
    %101 = arith.addf %99, %100 : vector<8x128xf32>
    %102 = math.tanh %101 : vector<8x128xf32>
    %103 = arith.mulf %96, %102 : vector<8x128xf32>
    %104 = arith.index_cast %83 : i32 to index
    %c0_29 = arith.constant 0 : index
    %105 = vector.load %arg11[%104, %c0_29] : memref<64x128xf32, #tpu.memory_space<vmem>>, vector<8x128xf32>
    tpu.vector_store %arg11[%104, %c0_29], %103 {strides = array<i32>} : memref<64x128xf32, #tpu.memory_space<vmem>>, vector<8x128xf32>,
    %c4_i32 = arith.constant 4 : i32
    %c8_i32_30 = arith.constant 8 : i32
    %106 = arith.muli %c4_i32, %c8_i32_30 : i32
    %107 = tpu.assume_multiple %106, 8 : i32
    %108 = arith.index_cast %107 : i32 to index
    %c0_31 = arith.constant 0 : index
    %109 = vector.load %arg10[%108, %c0_31] : memref<64x512xf32, #tpu.memory_space<vmem>>, vector<8x512xf32>
    %cst_32 = arith.constant dense<0.000000e+00> : vector<8x512xf32>
    %110 = tpu.matmul %103, %7, %cst_32 {dimension_numbers = #tpu.dot_dimension_numbers<[1], [0], [0], [1], [0, 0, 1, 1], [], []>} : vector<8x128xf32>, vector<128x512xf32>, vector<8x512xf32> -> vector<8x512xf32>
    %111 = arith.addf %109, %110 : vector<8x512xf32>
    %112 = vector.extract_strided_slice %111 {offsets = [0, 0], sizes = [8, 384], strides = [1, 1]} : vector<8x512xf32> to vector<8x384xf32>
    %113 = arith.negf %112 : vector<8x384xf32>
    %114 = math.exp %113 : vector<8x384xf32>
    %cst_33 = arith.constant 1.000000e+00 : f32
    %115 = vector.broadcast %cst_33 : f32 to vector<8x384xf32>
    %116 = arith.addf %115, %114 : vector<8x384xf32>
    %117 = arith.divf %115, %116 : vector<8x384xf32>
    %118 = vector.extract_strided_slice %117 {offsets = [0, 0], sizes = [8, 128], strides = [1, 1]} : vector<8x384xf32> to vector<8x128xf32>
    %119 = vector.extract_strided_slice %117 {offsets = [0, 128], sizes = [8, 128], strides = [1, 1]} : vector<8x384xf32> to vector<8x128xf32>
    %120 = vector.extract_strided_slice %117 {offsets = [0, 256], sizes = [8, 128], strides = [1, 1]} : vector<8x384xf32> to vector<8x128xf32>
    %121 = vector.extract_strided_slice %111 {offsets = [0, 384], sizes = [8, 128], strides = [1, 1]} : vector<8x512xf32> to vector<8x128xf32>
    %122 = math.tanh %121 : vector<8x128xf32>
    %123 = arith.mulf %119, %101 : vector<8x128xf32>
    %124 = arith.mulf %118, %122 : vector<8x128xf32>
    %125 = arith.addf %123, %124 : vector<8x128xf32>
    %126 = math.tanh %125 : vector<8x128xf32>
    %127 = arith.mulf %120, %126 : vector<8x128xf32>
    %128 = arith.index_cast %107 : i32 to index
    %c0_34 = arith.constant 0 : index
    %129 = vector.load %arg11[%128, %c0_34] : memref<64x128xf32, #tpu.memory_space<vmem>>, vector<8x128xf32>
    tpu.vector_store %arg11[%128, %c0_34], %127 {strides = array<i32>} : memref<64x128xf32, #tpu.memory_space<vmem>>, vector<8x128xf32>,
    %c5_i32 = arith.constant 5 : i32
    %c8_i32_35 = arith.constant 8 : i32
    %130 = arith.muli %c5_i32, %c8_i32_35 : i32
    %131 = tpu.assume_multiple %130, 8 : i32
    %132 = arith.index_cast %131 : i32 to index
    %c0_36 = arith.constant 0 : index
    %133 = vector.load %arg10[%132, %c0_36] : memref<64x512xf32, #tpu.memory_space<vmem>>, vector<8x512xf32>
    %cst_37 = arith.constant dense<0.000000e+00> : vector<8x512xf32>
    %134 = tpu.matmul %127, %7, %cst_37 {dimension_numbers = #tpu.dot_dimension_numbers<[1], [0], [0], [1], [0, 0, 1, 1], [], []>} : vector<8x128xf32>, vector<128x512xf32>, vector<8x512xf32> -> vector<8x512xf32>
    %135 = arith.addf %133, %134 : vector<8x512xf32>
    %136 = vector.extract_strided_slice %135 {offsets = [0, 0], sizes = [8, 384], strides = [1, 1]} : vector<8x512xf32> to vector<8x384xf32>
    %137 = arith.negf %136 : vector<8x384xf32>
    %138 = math.exp %137 : vector<8x384xf32>
    %cst_38 = arith.constant 1.000000e+00 : f32
    %139 = vector.broadcast %cst_38 : f32 to vector<8x384xf32>
    %140 = arith.addf %139, %138 : vector<8x384xf32>
    %141 = arith.divf %139, %140 : vector<8x384xf32>
    %142 = vector.extract_strided_slice %141 {offsets = [0, 0], sizes = [8, 128], strides = [1, 1]} : vector<8x384xf32> to vector<8x128xf32>
    %143 = vector.extract_strided_slice %141 {offsets = [0, 128], sizes = [8, 128], strides = [1, 1]} : vector<8x384xf32> to vector<8x128xf32>
    %144 = vector.extract_strided_slice %141 {offsets = [0, 256], sizes = [8, 128], strides = [1, 1]} : vector<8x384xf32> to vector<8x128xf32>
    %145 = vector.extract_strided_slice %135 {offsets = [0, 384], sizes = [8, 128], strides = [1, 1]} : vector<8x512xf32> to vector<8x128xf32>
    %146 = math.tanh %145 : vector<8x128xf32>
    %147 = arith.mulf %143, %125 : vector<8x128xf32>
    %148 = arith.mulf %142, %146 : vector<8x128xf32>
    %149 = arith.addf %147, %148 : vector<8x128xf32>
    %150 = math.tanh %149 : vector<8x128xf32>
    %151 = arith.mulf %144, %150 : vector<8x128xf32>
    %152 = arith.index_cast %131 : i32 to index
    %c0_39 = arith.constant 0 : index
    %153 = vector.load %arg11[%152, %c0_39] : memref<64x128xf32, #tpu.memory_space<vmem>>, vector<8x128xf32>
    tpu.vector_store %arg11[%152, %c0_39], %151 {strides = array<i32>} : memref<64x128xf32, #tpu.memory_space<vmem>>, vector<8x128xf32>,
    %c6_i32 = arith.constant 6 : i32
    %c8_i32_40 = arith.constant 8 : i32
    %154 = arith.muli %c6_i32, %c8_i32_40 : i32
    %155 = tpu.assume_multiple %154, 8 : i32
    %156 = arith.index_cast %155 : i32 to index
    %c0_41 = arith.constant 0 : index
    %157 = vector.load %arg10[%156, %c0_41] : memref<64x512xf32, #tpu.memory_space<vmem>>, vector<8x512xf32>
    %cst_42 = arith.constant dense<0.000000e+00> : vector<8x512xf32>
    %158 = tpu.matmul %151, %7, %cst_42 {dimension_numbers = #tpu.dot_dimension_numbers<[1], [0], [0], [1], [0, 0, 1, 1], [], []>} : vector<8x128xf32>, vector<128x512xf32>, vector<8x512xf32> -> vector<8x512xf32>
    %159 = arith.addf %157, %158 : vector<8x512xf32>
    %160 = vector.extract_strided_slice %159 {offsets = [0, 0], sizes = [8, 384], strides = [1, 1]} : vector<8x512xf32> to vector<8x384xf32>
    %161 = arith.negf %160 : vector<8x384xf32>
    %162 = math.exp %161 : vector<8x384xf32>
    %cst_43 = arith.constant 1.000000e+00 : f32
    %163 = vector.broadcast %cst_43 : f32 to vector<8x384xf32>
    %164 = arith.addf %163, %162 : vector<8x384xf32>
    %165 = arith.divf %163, %164 : vector<8x384xf32>
    %166 = vector.extract_strided_slice %165 {offsets = [0, 0], sizes = [8, 128], strides = [1, 1]} : vector<8x384xf32> to vector<8x128xf32>
    %167 = vector.extract_strided_slice %165 {offsets = [0, 128], sizes = [8, 128], strides = [1, 1]} : vector<8x384xf32> to vector<8x128xf32>
    %168 = vector.extract_strided_slice %165 {offsets = [0, 256], sizes = [8, 128], strides = [1, 1]} : vector<8x384xf32> to vector<8x128xf32>
    %169 = vector.extract_strided_slice %159 {offsets = [0, 384], sizes = [8, 128], strides = [1, 1]} : vector<8x512xf32> to vector<8x128xf32>
    %170 = math.tanh %169 : vector<8x128xf32>
    %171 = arith.mulf %167, %149 : vector<8x128xf32>
    %172 = arith.mulf %166, %170 : vector<8x128xf32>
    %173 = arith.addf %171, %172 : vector<8x128xf32>
    %174 = math.tanh %173 : vector<8x128xf32>
    %175 = arith.mulf %168, %174 : vector<8x128xf32>
    %176 = arith.index_cast %155 : i32 to index
    %c0_44 = arith.constant 0 : index
    %177 = vector.load %arg11[%176, %c0_44] : memref<64x128xf32, #tpu.memory_space<vmem>>, vector<8x128xf32>
    tpu.vector_store %arg11[%176, %c0_44], %175 {strides = array<i32>} : memref<64x128xf32, #tpu.memory_space<vmem>>, vector<8x128xf32>,
    %c7_i32 = arith.constant 7 : i32
    %c8_i32_45 = arith.constant 8 : i32
    %178 = arith.muli %c7_i32, %c8_i32_45 : i32
    %179 = tpu.assume_multiple %178, 8 : i32
    %180 = arith.index_cast %179 : i32 to index
    %c0_46 = arith.constant 0 : index
    %181 = vector.load %arg10[%180, %c0_46] : memref<64x512xf32, #tpu.memory_space<vmem>>, vector<8x512xf32>
    %cst_47 = arith.constant dense<0.000000e+00> : vector<8x512xf32>
    %182 = tpu.matmul %175, %7, %cst_47 {dimension_numbers = #tpu.dot_dimension_numbers<[1], [0], [0], [1], [0, 0, 1, 1], [], []>} : vector<8x128xf32>, vector<128x512xf32>, vector<8x512xf32> -> vector<8x512xf32>
    %183 = arith.addf %181, %182 : vector<8x512xf32>
    %184 = vector.extract_strided_slice %183 {offsets = [0, 0], sizes = [8, 384], strides = [1, 1]} : vector<8x512xf32> to vector<8x384xf32>
    %185 = arith.negf %184 : vector<8x384xf32>
    %186 = math.exp %185 : vector<8x384xf32>
    %cst_48 = arith.constant 1.000000e+00 : f32
    %187 = vector.broadcast %cst_48 : f32 to vector<8x384xf32>
    %188 = arith.addf %187, %186 : vector<8x384xf32>
    %189 = arith.divf %187, %188 : vector<8x384xf32>
    %190 = vector.extract_strided_slice %189 {offsets = [0, 0], sizes = [8, 128], strides = [1, 1]} : vector<8x384xf32> to vector<8x128xf32>
    %191 = vector.extract_strided_slice %189 {offsets = [0, 128], sizes = [8, 128], strides = [1, 1]} : vector<8x384xf32> to vector<8x128xf32>
    %192 = vector.extract_strided_slice %189 {offsets = [0, 256], sizes = [8, 128], strides = [1, 1]} : vector<8x384xf32> to vector<8x128xf32>
    %193 = vector.extract_strided_slice %183 {offsets = [0, 384], sizes = [8, 128], strides = [1, 1]} : vector<8x512xf32> to vector<8x128xf32>
    %194 = math.tanh %193 : vector<8x128xf32>
    %195 = arith.mulf %191, %173 : vector<8x128xf32>
    %196 = arith.mulf %190, %194 : vector<8x128xf32>
    %197 = arith.addf %195, %196 : vector<8x128xf32>
    %198 = math.tanh %197 : vector<8x128xf32>
    %199 = arith.mulf %192, %198 : vector<8x128xf32>
    %200 = arith.index_cast %179 : i32 to index
    %c0_49 = arith.constant 0 : index
    %201 = vector.load %arg11[%200, %c0_49] : memref<64x128xf32, #tpu.memory_space<vmem>>, vector<8x128xf32>
    tpu.vector_store %arg11[%200, %c0_49], %199 {strides = array<i32>} : memref<64x128xf32, #tpu.memory_space<vmem>>, vector<8x128xf32>,
    %c8_i32_50 = arith.constant 8 : i32
    %c0_51 = arith.constant 0 : index
    %c0_52 = arith.constant 0 : index
    %202 = vector.load %arg11[%c0_51, %c0_52] : memref<64x128xf32, #tpu.memory_space<vmem>>, vector<64x128xf32>
    %c0_53 = arith.constant 0 : index
    %c0_54 = arith.constant 0 : index
    %203 = vector.load %arg4[%c0_53, %c0_54] : memref<128x512xf32, #tpu.memory_space<vmem>>, vector<128x512xf32>
    %cst_55 = arith.constant dense<0.000000e+00> : vector<64x512xf32>
    %204 = tpu.matmul %202, %203, %cst_55 {dimension_numbers = #tpu.dot_dimension_numbers<[1], [0], [0], [1], [0, 0, 1, 1], [], []>} : vector<64x128xf32>, vector<128x512xf32>, vector<64x512xf32> -> vector<64x512xf32>
    %c0_56 = arith.constant 0 : index
    %c0_57 = arith.constant 0 : index
    %205 = vector.load %arg6[%c0_56, %c0_57] : memref<1x512xf32, #tpu.memory_space<vmem>>, vector<1x512xf32>
    %206 = vector.broadcast %205 : vector<1x512xf32> to vector<64x512xf32>
    %207 = arith.addf %204, %206 : vector<64x512xf32>
    %c0_58 = arith.constant 0 : index
    %c0_59 = arith.constant 0 : index
    %208 = vector.load %arg10[%c0_58, %c0_59] : memref<64x512xf32, #tpu.memory_space<vmem>>, vector<64x512xf32>
    tpu.vector_store %arg10[%c0_58, %c0_59], %207 {strides = array<i32>} : memref<64x512xf32, #tpu.memory_space<vmem>>, vector<64x512xf32>,
    %c0_60 = arith.constant 0 : index
    %c0_61 = arith.constant 0 : index
    %209 = vector.load %arg5[%c0_60, %c0_61] : memref<128x512xf32, #tpu.memory_space<vmem>>, vector<128x512xf32>
    %cst_62 = arith.constant 0.000000e+00 : f32
    %210 = vector.broadcast %cst_62 : f32 to vector<8x128xf32>
    %cst_63 = arith.constant 0.000000e+00 : f32
    %211 = vector.broadcast %cst_63 : f32 to vector<8x128xf32>
    %c0_i32_64 = arith.constant 0 : i32
    %c8_i32_65 = arith.constant 8 : i32
    %212 = arith.muli %c0_i32_64, %c8_i32_65 : i32
    %213 = tpu.assume_multiple %212, 8 : i32
    %214 = arith.index_cast %213 : i32 to index
    %c0_66 = arith.constant 0 : index
    %215 = vector.load %arg10[%214, %c0_66] : memref<64x512xf32, #tpu.memory_space<vmem>>, vector<8x512xf32>
    %cst_67 = arith.constant dense<0.000000e+00> : vector<8x512xf32>
    %216 = tpu.matmul %210, %209, %cst_67 {dimension_numbers = #tpu.dot_dimension_numbers<[1], [0], [0], [1], [0, 0, 1, 1], [], []>} : vector<8x128xf32>, vector<128x512xf32>, vector<8x512xf32> -> vector<8x512xf32>
    %217 = arith.addf %215, %216 : vector<8x512xf32>
    %218 = vector.extract_strided_slice %217 {offsets = [0, 0], sizes = [8, 384], strides = [1, 1]} : vector<8x512xf32> to vector<8x384xf32>
    %219 = arith.negf %218 : vector<8x384xf32>
    %220 = math.exp %219 : vector<8x384xf32>
    %cst_68 = arith.constant 1.000000e+00 : f32
    %221 = vector.broadcast %cst_68 : f32 to vector<8x384xf32>
    %222 = arith.addf %221, %220 : vector<8x384xf32>
    %223 = arith.divf %221, %222 : vector<8x384xf32>
    %224 = vector.extract_strided_slice %223 {offsets = [0, 0], sizes = [8, 128], strides = [1, 1]} : vector<8x384xf32> to vector<8x128xf32>
    %225 = vector.extract_strided_slice %223 {offsets = [0, 128], sizes = [8, 128], strides = [1, 1]} : vector<8x384xf32> to vector<8x128xf32>
    %226 = vector.extract_strided_slice %223 {offsets = [0, 256], sizes = [8, 128], strides = [1, 1]} : vector<8x384xf32> to vector<8x128xf32>
    %227 = vector.extract_strided_slice %217 {offsets = [0, 384], sizes = [8, 128], strides = [1, 1]} : vector<8x512xf32> to vector<8x128xf32>
    %228 = math.tanh %227 : vector<8x128xf32>
    %229 = arith.mulf %225, %211 : vector<8x128xf32>
    %230 = arith.mulf %224, %228 : vector<8x128xf32>
    %231 = arith.addf %229, %230 : vector<8x128xf32>
    %232 = math.tanh %231 : vector<8x128xf32>
    %233 = arith.mulf %226, %232 : vector<8x128xf32>
    %c1_i32_69 = arith.constant 1 : i32
    %c8_i32_70 = arith.constant 8 : i32
    %234 = arith.muli %c1_i32_69, %c8_i32_70 : i32
    %235 = tpu.assume_multiple %234, 8 : i32
    %236 = arith.index_cast %235 : i32 to index
    %c0_71 = arith.constant 0 : index
    %237 = vector.load %arg10[%236, %c0_71] : memref<64x512xf32, #tpu.memory_space<vmem>>, vector<8x512xf32>
    %cst_72 = arith.constant dense<0.000000e+00> : vector<8x512xf32>
    %238 = tpu.matmul %233, %209, %cst_72 {dimension_numbers = #tpu.dot_dimension_numbers<[1], [0], [0], [1], [0, 0, 1, 1], [], []>} : vector<8x128xf32>, vector<128x512xf32>, vector<8x512xf32> -> vector<8x512xf32>
    %239 = arith.addf %237, %238 : vector<8x512xf32>
    %240 = vector.extract_strided_slice %239 {offsets = [0, 0], sizes = [8, 384], strides = [1, 1]} : vector<8x512xf32> to vector<8x384xf32>
    %241 = arith.negf %240 : vector<8x384xf32>
    %242 = math.exp %241 : vector<8x384xf32>
    %cst_73 = arith.constant 1.000000e+00 : f32
    %243 = vector.broadcast %cst_73 : f32 to vector<8x384xf32>
    %244 = arith.addf %243, %242 : vector<8x384xf32>
    %245 = arith.divf %243, %244 : vector<8x384xf32>
    %246 = vector.extract_strided_slice %245 {offsets = [0, 0], sizes = [8, 128], strides = [1, 1]} : vector<8x384xf32> to vector<8x128xf32>
    %247 = vector.extract_strided_slice %245 {offsets = [0, 128], sizes = [8, 128], strides = [1, 1]} : vector<8x384xf32> to vector<8x128xf32>
    %248 = vector.extract_strided_slice %245 {offsets = [0, 256], sizes = [8, 128], strides = [1, 1]} : vector<8x384xf32> to vector<8x128xf32>
    %249 = vector.extract_strided_slice %239 {offsets = [0, 384], sizes = [8, 128], strides = [1, 1]} : vector<8x512xf32> to vector<8x128xf32>
    %250 = math.tanh %249 : vector<8x128xf32>
    %251 = arith.mulf %247, %231 : vector<8x128xf32>
    %252 = arith.mulf %246, %250 : vector<8x128xf32>
    %253 = arith.addf %251, %252 : vector<8x128xf32>
    %254 = math.tanh %253 : vector<8x128xf32>
    %255 = arith.mulf %248, %254 : vector<8x128xf32>
    %c2_i32_74 = arith.constant 2 : i32
    %c8_i32_75 = arith.constant 8 : i32
    %256 = arith.muli %c2_i32_74, %c8_i32_75 : i32
    %257 = tpu.assume_multiple %256, 8 : i32
    %258 = arith.index_cast %257 : i32 to index
    %c0_76 = arith.constant 0 : index
    %259 = vector.load %arg10[%258, %c0_76] : memref<64x512xf32, #tpu.memory_space<vmem>>, vector<8x512xf32>
    %cst_77 = arith.constant dense<0.000000e+00> : vector<8x512xf32>
    %260 = tpu.matmul %255, %209, %cst_77 {dimension_numbers = #tpu.dot_dimension_numbers<[1], [0], [0], [1], [0, 0, 1, 1], [], []>} : vector<8x128xf32>, vector<128x512xf32>, vector<8x512xf32> -> vector<8x512xf32>
    %261 = arith.addf %259, %260 : vector<8x512xf32>
    %262 = vector.extract_strided_slice %261 {offsets = [0, 0], sizes = [8, 384], strides = [1, 1]} : vector<8x512xf32> to vector<8x384xf32>
    %263 = arith.negf %262 : vector<8x384xf32>
    %264 = math.exp %263 : vector<8x384xf32>
    %cst_78 = arith.constant 1.000000e+00 : f32
    %265 = vector.broadcast %cst_78 : f32 to vector<8x384xf32>
    %266 = arith.addf %265, %264 : vector<8x384xf32>
    %267 = arith.divf %265, %266 : vector<8x384xf32>
    %268 = vector.extract_strided_slice %267 {offsets = [0, 0], sizes = [8, 128], strides = [1, 1]} : vector<8x384xf32> to vector<8x128xf32>
    %269 = vector.extract_strided_slice %267 {offsets = [0, 128], sizes = [8, 128], strides = [1, 1]} : vector<8x384xf32> to vector<8x128xf32>
    %270 = vector.extract_strided_slice %267 {offsets = [0, 256], sizes = [8, 128], strides = [1, 1]} : vector<8x384xf32> to vector<8x128xf32>
    %271 = vector.extract_strided_slice %261 {offsets = [0, 384], sizes = [8, 128], strides = [1, 1]} : vector<8x512xf32> to vector<8x128xf32>
    %272 = math.tanh %271 : vector<8x128xf32>
    %273 = arith.mulf %269, %253 : vector<8x128xf32>
    %274 = arith.mulf %268, %272 : vector<8x128xf32>
    %275 = arith.addf %273, %274 : vector<8x128xf32>
    %276 = math.tanh %275 : vector<8x128xf32>
    %277 = arith.mulf %270, %276 : vector<8x128xf32>
    %c3_i32_79 = arith.constant 3 : i32
    %c8_i32_80 = arith.constant 8 : i32
    %278 = arith.muli %c3_i32_79, %c8_i32_80 : i32
    %279 = tpu.assume_multiple %278, 8 : i32
    %280 = arith.index_cast %279 : i32 to index
    %c0_81 = arith.constant 0 : index
    %281 = vector.load %arg10[%280, %c0_81] : memref<64x512xf32, #tpu.memory_space<vmem>>, vector<8x512xf32>
    %cst_82 = arith.constant dense<0.000000e+00> : vector<8x512xf32>
    %282 = tpu.matmul %277, %209, %cst_82 {dimension_numbers = #tpu.dot_dimension_numbers<[1], [0], [0], [1], [0, 0, 1, 1], [], []>} : vector<8x128xf32>, vector<128x512xf32>, vector<8x512xf32> -> vector<8x512xf32>
    %283 = arith.addf %281, %282 : vector<8x512xf32>
    %284 = vector.extract_strided_slice %283 {offsets = [0, 0], sizes = [8, 384], strides = [1, 1]} : vector<8x512xf32> to vector<8x384xf32>
    %285 = arith.negf %284 : vector<8x384xf32>
    %286 = math.exp %285 : vector<8x384xf32>
    %cst_83 = arith.constant 1.000000e+00 : f32
    %287 = vector.broadcast %cst_83 : f32 to vector<8x384xf32>
    %288 = arith.addf %287, %286 : vector<8x384xf32>
    %289 = arith.divf %287, %288 : vector<8x384xf32>
    %290 = vector.extract_strided_slice %289 {offsets = [0, 0], sizes = [8, 128], strides = [1, 1]} : vector<8x384xf32> to vector<8x128xf32>
    %291 = vector.extract_strided_slice %289 {offsets = [0, 128], sizes = [8, 128], strides = [1, 1]} : vector<8x384xf32> to vector<8x128xf32>
    %292 = vector.extract_strided_slice %289 {offsets = [0, 256], sizes = [8, 128], strides = [1, 1]} : vector<8x384xf32> to vector<8x128xf32>
    %293 = vector.extract_strided_slice %283 {offsets = [0, 384], sizes = [8, 128], strides = [1, 1]} : vector<8x512xf32> to vector<8x128xf32>
    %294 = math.tanh %293 : vector<8x128xf32>
    %295 = arith.mulf %291, %275 : vector<8x128xf32>
    %296 = arith.mulf %290, %294 : vector<8x128xf32>
    %297 = arith.addf %295, %296 : vector<8x128xf32>
    %298 = math.tanh %297 : vector<8x128xf32>
    %299 = arith.mulf %292, %298 : vector<8x128xf32>
    %c4_i32_84 = arith.constant 4 : i32
    %c8_i32_85 = arith.constant 8 : i32
    %300 = arith.muli %c4_i32_84, %c8_i32_85 : i32
    %301 = tpu.assume_multiple %300, 8 : i32
    %302 = arith.index_cast %301 : i32 to index
    %c0_86 = arith.constant 0 : index
    %303 = vector.load %arg10[%302, %c0_86] : memref<64x512xf32, #tpu.memory_space<vmem>>, vector<8x512xf32>
    %cst_87 = arith.constant dense<0.000000e+00> : vector<8x512xf32>
    %304 = tpu.matmul %299, %209, %cst_87 {dimension_numbers = #tpu.dot_dimension_numbers<[1], [0], [0], [1], [0, 0, 1, 1], [], []>} : vector<8x128xf32>, vector<128x512xf32>, vector<8x512xf32> -> vector<8x512xf32>
    %305 = arith.addf %303, %304 : vector<8x512xf32>
    %306 = vector.extract_strided_slice %305 {offsets = [0, 0], sizes = [8, 384], strides = [1, 1]} : vector<8x512xf32> to vector<8x384xf32>
    %307 = arith.negf %306 : vector<8x384xf32>
    %308 = math.exp %307 : vector<8x384xf32>
    %cst_88 = arith.constant 1.000000e+00 : f32
    %309 = vector.broadcast %cst_88 : f32 to vector<8x384xf32>
    %310 = arith.addf %309, %308 : vector<8x384xf32>
    %311 = arith.divf %309, %310 : vector<8x384xf32>
    %312 = vector.extract_strided_slice %311 {offsets = [0, 0], sizes = [8, 128], strides = [1, 1]} : vector<8x384xf32> to vector<8x128xf32>
    %313 = vector.extract_strided_slice %311 {offsets = [0, 128], sizes = [8, 128], strides = [1, 1]} : vector<8x384xf32> to vector<8x128xf32>
    %314 = vector.extract_strided_slice %311 {offsets = [0, 256], sizes = [8, 128], strides = [1, 1]} : vector<8x384xf32> to vector<8x128xf32>
    %315 = vector.extract_strided_slice %305 {offsets = [0, 384], sizes = [8, 128], strides = [1, 1]} : vector<8x512xf32> to vector<8x128xf32>
    %316 = math.tanh %315 : vector<8x128xf32>
    %317 = arith.mulf %313, %297 : vector<8x128xf32>
    %318 = arith.mulf %312, %316 : vector<8x128xf32>
    %319 = arith.addf %317, %318 : vector<8x128xf32>
    %320 = math.tanh %319 : vector<8x128xf32>
    %321 = arith.mulf %314, %320 : vector<8x128xf32>
    %c5_i32_89 = arith.constant 5 : i32
    %c8_i32_90 = arith.constant 8 : i32
    %322 = arith.muli %c5_i32_89, %c8_i32_90 : i32
    %323 = tpu.assume_multiple %322, 8 : i32
    %324 = arith.index_cast %323 : i32 to index
    %c0_91 = arith.constant 0 : index
    %325 = vector.load %arg10[%324, %c0_91] : memref<64x512xf32, #tpu.memory_space<vmem>>, vector<8x512xf32>
    %cst_92 = arith.constant dense<0.000000e+00> : vector<8x512xf32>
    %326 = tpu.matmul %321, %209, %cst_92 {dimension_numbers = #tpu.dot_dimension_numbers<[1], [0], [0], [1], [0, 0, 1, 1], [], []>} : vector<8x128xf32>, vector<128x512xf32>, vector<8x512xf32> -> vector<8x512xf32>
    %327 = arith.addf %325, %326 : vector<8x512xf32>
    %328 = vector.extract_strided_slice %327 {offsets = [0, 0], sizes = [8, 384], strides = [1, 1]} : vector<8x512xf32> to vector<8x384xf32>
    %329 = arith.negf %328 : vector<8x384xf32>
    %330 = math.exp %329 : vector<8x384xf32>
    %cst_93 = arith.constant 1.000000e+00 : f32
    %331 = vector.broadcast %cst_93 : f32 to vector<8x384xf32>
    %332 = arith.addf %331, %330 : vector<8x384xf32>
    %333 = arith.divf %331, %332 : vector<8x384xf32>
    %334 = vector.extract_strided_slice %333 {offsets = [0, 0], sizes = [8, 128], strides = [1, 1]} : vector<8x384xf32> to vector<8x128xf32>
    %335 = vector.extract_strided_slice %333 {offsets = [0, 128], sizes = [8, 128], strides = [1, 1]} : vector<8x384xf32> to vector<8x128xf32>
    %336 = vector.extract_strided_slice %333 {offsets = [0, 256], sizes = [8, 128], strides = [1, 1]} : vector<8x384xf32> to vector<8x128xf32>
    %337 = vector.extract_strided_slice %327 {offsets = [0, 384], sizes = [8, 128], strides = [1, 1]} : vector<8x512xf32> to vector<8x128xf32>
    %338 = math.tanh %337 : vector<8x128xf32>
    %339 = arith.mulf %335, %319 : vector<8x128xf32>
    %340 = arith.mulf %334, %338 : vector<8x128xf32>
    %341 = arith.addf %339, %340 : vector<8x128xf32>
    %342 = math.tanh %341 : vector<8x128xf32>
    %343 = arith.mulf %336, %342 : vector<8x128xf32>
    %c6_i32_94 = arith.constant 6 : i32
    %c8_i32_95 = arith.constant 8 : i32
    %344 = arith.muli %c6_i32_94, %c8_i32_95 : i32
    %345 = tpu.assume_multiple %344, 8 : i32
    %346 = arith.index_cast %345 : i32 to index
    %c0_96 = arith.constant 0 : index
    %347 = vector.load %arg10[%346, %c0_96] : memref<64x512xf32, #tpu.memory_space<vmem>>, vector<8x512xf32>
    %cst_97 = arith.constant dense<0.000000e+00> : vector<8x512xf32>
    %348 = tpu.matmul %343, %209, %cst_97 {dimension_numbers = #tpu.dot_dimension_numbers<[1], [0], [0], [1], [0, 0, 1, 1], [], []>} : vector<8x128xf32>, vector<128x512xf32>, vector<8x512xf32> -> vector<8x512xf32>
    %349 = arith.addf %347, %348 : vector<8x512xf32>
    %350 = vector.extract_strided_slice %349 {offsets = [0, 0], sizes = [8, 384], strides = [1, 1]} : vector<8x512xf32> to vector<8x384xf32>
    %351 = arith.negf %350 : vector<8x384xf32>
    %352 = math.exp %351 : vector<8x384xf32>
    %cst_98 = arith.constant 1.000000e+00 : f32
    %353 = vector.broadcast %cst_98 : f32 to vector<8x384xf32>
    %354 = arith.addf %353, %352 : vector<8x384xf32>
    %355 = arith.divf %353, %354 : vector<8x384xf32>
    %356 = vector.extract_strided_slice %355 {offsets = [0, 0], sizes = [8, 128], strides = [1, 1]} : vector<8x384xf32> to vector<8x128xf32>
    %357 = vector.extract_strided_slice %355 {offsets = [0, 128], sizes = [8, 128], strides = [1, 1]} : vector<8x384xf32> to vector<8x128xf32>
    %358 = vector.extract_strided_slice %355 {offsets = [0, 256], sizes = [8, 128], strides = [1, 1]} : vector<8x384xf32> to vector<8x128xf32>
    %359 = vector.extract_strided_slice %349 {offsets = [0, 384], sizes = [8, 128], strides = [1, 1]} : vector<8x512xf32> to vector<8x128xf32>
    %360 = math.tanh %359 : vector<8x128xf32>
    %361 = arith.mulf %357, %341 : vector<8x128xf32>
    %362 = arith.mulf %356, %360 : vector<8x128xf32>
    %363 = arith.addf %361, %362 : vector<8x128xf32>
    %364 = math.tanh %363 : vector<8x128xf32>
    %365 = arith.mulf %358, %364 : vector<8x128xf32>
    %c7_i32_99 = arith.constant 7 : i32
    %c8_i32_100 = arith.constant 8 : i32
    %366 = arith.muli %c7_i32_99, %c8_i32_100 : i32
    %367 = tpu.assume_multiple %366, 8 : i32
    %368 = arith.index_cast %367 : i32 to index
    %c0_101 = arith.constant 0 : index
    %369 = vector.load %arg10[%368, %c0_101] : memref<64x512xf32, #tpu.memory_space<vmem>>, vector<8x512xf32>
    %cst_102 = arith.constant dense<0.000000e+00> : vector<8x512xf32>
    %370 = tpu.matmul %365, %209, %cst_102 {dimension_numbers = #tpu.dot_dimension_numbers<[1], [0], [0], [1], [0, 0, 1, 1], [], []>} : vector<8x128xf32>, vector<128x512xf32>, vector<8x512xf32> -> vector<8x512xf32>
    %371 = arith.addf %369, %370 : vector<8x512xf32>
    %372 = vector.extract_strided_slice %371 {offsets = [0, 0], sizes = [8, 384], strides = [1, 1]} : vector<8x512xf32> to vector<8x384xf32>
    %373 = arith.negf %372 : vector<8x384xf32>
    %374 = math.exp %373 : vector<8x384xf32>
    %cst_103 = arith.constant 1.000000e+00 : f32
    %375 = vector.broadcast %cst_103 : f32 to vector<8x384xf32>
    %376 = arith.addf %375, %374 : vector<8x384xf32>
    %377 = arith.divf %375, %376 : vector<8x384xf32>
    %378 = vector.extract_strided_slice %377 {offsets = [0, 0], sizes = [8, 128], strides = [1, 1]} : vector<8x384xf32> to vector<8x128xf32>
    %379 = vector.extract_strided_slice %377 {offsets = [0, 128], sizes = [8, 128], strides = [1, 1]} : vector<8x384xf32> to vector<8x128xf32>
    %380 = vector.extract_strided_slice %377 {offsets = [0, 256], sizes = [8, 128], strides = [1, 1]} : vector<8x384xf32> to vector<8x128xf32>
    %381 = vector.extract_strided_slice %371 {offsets = [0, 384], sizes = [8, 128], strides = [1, 1]} : vector<8x512xf32> to vector<8x128xf32>
    %382 = math.tanh %381 : vector<8x128xf32>
    %383 = arith.mulf %379, %363 : vector<8x128xf32>
    %384 = arith.mulf %378, %382 : vector<8x128xf32>
    %385 = arith.addf %383, %384 : vector<8x128xf32>
    %386 = math.tanh %385 : vector<8x128xf32>
    %387 = arith.mulf %380, %386 : vector<8x128xf32>
    %c8_i32_104 = arith.constant 8 : i32
    %c0_105 = arith.constant 0 : index
    %c0_106 = arith.constant 0 : index
    %388 = vector.load %arg7[%c0_105, %c0_106] : memref<128x128xf32, #tpu.memory_space<vmem>>, vector<128x128xf32>
    %cst_107 = arith.constant dense<0.000000e+00> : vector<8x128xf32>
    %389 = tpu.matmul %387, %388, %cst_107 {dimension_numbers = #tpu.dot_dimension_numbers<[1], [0], [0], [1], [0, 0, 1, 1], [], []>} : vector<8x128xf32>, vector<128x128xf32>, vector<8x128xf32> -> vector<8x128xf32>
    %c0_108 = arith.constant 0 : index
    %c0_109 = arith.constant 0 : index
    %390 = vector.load %arg8[%c0_108, %c0_109] : memref<1x128xf32, #tpu.memory_space<vmem>>, vector<1x128xf32>
    %391 = vector.broadcast %390 : vector<1x128xf32> to vector<8x128xf32>
    %392 = arith.addf %389, %391 : vector<8x128xf32>
    %c0_110 = arith.constant 0 : index
    %c0_111 = arith.constant 0 : index
    %393 = vector.load %arg9[%c0_110, %c0_111] : memref<8x128xf32, #tpu.memory_space<vmem>>, vector<8x128xf32>
    tpu.vector_store %arg9[%c0_110, %c0_111], %392 {strides = array<i32>} : memref<8x128xf32, #tpu.memory_space<vmem>>, vector<8x128xf32>,
    return
  }
}

</mosaic_0001>

<llo_original>
// kernel: lstm_model_forward.1
$region0: #{lstm_model_forward.1}
  #allocation0 [shape = 'u32[]', space=smem, size = 0x4, offset = 0x4, fixed_abs, tag = 'smem constant byte address 0x4 - core index']
  #allocation1 [shape = 'u32[144,128]{1,0:T(1,128)}', space=vmem, size = 0x12000, scoped, tag = 'internal scratch']
  #allocation2 [shape = 'f32[64,512]{1,0:T(8,128)}', space=vmem, size = 0x20000, scoped, tag = 'scratch operand']
  #allocation3 [shape = 'f32[64,128]{1,0:T(8,128)}', space=vmem, size = 0x8000, scoped, tag = 'scratch operand']
  %s0 = inlined_call_operand.hbm [shape: f32[64,128], index: 0, kind: input, shape index: {}]
  %s1 = inlined_call_operand.hbm [shape: f32[128,512], index: 1, kind: input, shape index: {}]
  %s2 = inlined_call_operand.hbm [shape: f32[128,512], index: 2, kind: input, shape index: {}]
  %s3 = inlined_call_operand.hbm [shape: f32[1,512], index: 3, kind: input, shape index: {}]
  %s4 = inlined_call_operand.hbm [shape: f32[128,512], index: 4, kind: input, shape index: {}]
  %s5 = inlined_call_operand.hbm [shape: f32[128,512], index: 5, kind: input, shape index: {}]
  %s6 = inlined_call_operand.hbm [shape: f32[1,512], index: 6, kind: input, shape index: {}]
  %s7 = inlined_call_operand.hbm [shape: f32[128,128], index: 7, kind: input, shape index: {}]
  %s8 = inlined_call_operand.hbm [shape: f32[1,128], index: 8, kind: input, shape index: {}]
  %s9 = inlined_call_operand.hbm [shape: f32[8,128], index: 9, kind: output, shape index: {}]
  %s10 = sld [smem:[#allocation0]]
  $region82: #{lstm_model_forward.1} parent=0
    _
  %s12 = ssub.s32 1, %s10
  %s13 = scalar_select 0, %s12, %s10
  $region1: #{lstm_model_forward.1} parent=0
    #allocation4 [shape = 'u8[32768]{0}', space=vmem, size = 0x8000, scoped, tag = 'input window, operand 0, single buffered']
    #allocation5 [shape = 's32[1]{0}', space=sflag, size = 0x4, scoped, tag = 'scoped memory for lstm_model_forward.1']
    #allocation6 [shape = 's32[1]{0}', space=sflag, size = 0x4, scoped, tag = 'scoped memory for lstm_model_forward.1']
    #allocation7 [shape = 'u8[262144]{0}', space=vmem, size = 0x40000, scoped, tag = 'input window, operand 1, single buffered']
    #allocation8 [shape = 's32[1]{0}', space=sflag, size = 0x4, scoped, tag = 'scoped memory for lstm_model_forward.1']
    #allocation9 [shape = 'u8[262144]{0}', space=vmem, size = 0x40000, scoped, tag = 'input window, operand 2, single buffered']
    #allocation10 [shape = 'u8[2048]{0}', space=vmem, size = 0x800, scoped, tag = 'input window, operand 3, single buffered']
    #allocation11 [shape = 's32[1]{0}', space=sflag, size = 0x4, scoped, tag = 'scoped memory for lstm_model_forward.1']
    #allocation12 [shape = 'u8[262144]{0}', space=vmem, size = 0x40000, scoped, tag = 'input window, operand 4, single buffered']
    #allocation13 [shape = 'u8[262144]{0}', space=vmem, size = 0x40000, scoped, tag = 'input window, operand 5, single buffered']
    #allocation14 [shape = 's32[1]{0}', space=sflag, size = 0x4, scoped, tag = 'scoped memory for lstm_model_forward.1']
    #allocation15 [shape = 'u8[2048]{0}', space=vmem, size = 0x800, scoped, tag = 'input window, operand 6, single buffered']
    #allocation16 [shape = 'u8[65536]{0}', space=vmem, size = 0x10000, scoped, tag = 'input window, operand 7, single buffered']
    #allocation17 [shape = 's32[1]{0}', space=sflag, size = 0x4, scoped, tag = 'scoped memory for lstm_model_forward.1']
    #allocation18 [shape = 'u8[512]{0}', space=vmem, size = 0x400, scoped, tag = 'input window, operand 8, single buffered']
    #allocation19 [shape = 'u8[4096]{0}', space=vmem, size = 0x1000, scoped, tag = 'output window, operand 0, single buffered']
    %14 = vsyncpa [#allocation5], 0
    %15 = vsyncpa [#allocation8], 0
    %16 = vsyncpa [#allocation11], 0
    %17 = vsyncpa [#allocation14], 0
    %18 = vsyncpa [#allocation17], 0
    %19 = vsyncpa [#allocation6], 0
    // Predicated region
    $region2: #{lstm_model_forward.1} parent=1 // pred_check
      _
    $region3: #{lstm_model_forward.1} parent=1 // pred_check_branch
      %21 = sbr.rel (0) target = $region5
    $region4: #{lstm_model_forward.1} parent=1 // pred_region
      %s23 = ssub.s32 1024, 1024
      %24 = vsyncadd [#allocation5], %s23
      %s25 = sshll.u32 [#allocation4], 4
      %s26 = int_to_ptr.vmem [resolvable:$true] %s25
      %31 = dma.hbm_to_vmem [thread:$0]  %s0, 1024, %s26, [#allocation5], 128, 128, 8
    $region5: #{lstm_model_forward.1} parent=1 // pred_fallthru
      _
    // Predicated region
    $region6: #{lstm_model_forward.1} parent=1 // pred_check
      _
    $region7: #{lstm_model_forward.1} parent=1 // pred_check_branch
      %33 = sbr.rel (0) target = $region9
    $region8: #{lstm_model_forward.1} parent=1 // pred_region
      %s35 = ssub.s32 8192, 8192
      %36 = vsyncadd [#allocation8], %s35
      %s37 = sshll.u32 [#allocation7], 4
      %s38 = int_to_ptr.vmem [resolvable:$true] %s37
      %43 = dma.hbm_to_vmem [thread:$0]  %s1, 8192, %s38, [#allocation8], 512, 512, 32
    $region9: #{lstm_model_forward.1} parent=1 // pred_fallthru
      _
    // Predicated region
    $region10: #{lstm_model_forward.1} parent=1 // pred_check
      _
    $region11: #{lstm_model_forward.1} parent=1 // pred_check_branch
      %45 = sbr.rel (0) target = $region13
    $region12: #{lstm_model_forward.1} parent=1 // pred_region
      %s47 = ssub.s32 8192, 8192
      %48 = vsyncadd [#allocation8], %s47
      %s49 = sshll.u32 [#allocation9], 4
      %s50 = int_to_ptr.vmem [resolvable:$true] %s49
      %55 = dma.hbm_to_vmem [thread:$0]  %s2, 8192, %s50, [#allocation8], 512, 512, 32
    $region13: #{lstm_model_forward.1} parent=1 // pred_fallthru
      _
    // Predicated region
    $region14: #{lstm_model_forward.1} parent=1 // pred_check
      _
    $region15: #{lstm_model_forward.1} parent=1 // pred_check_branch
      %57 = sbr.rel (0) target = $region17
    $region16: #{lstm_model_forward.1} parent=1 // pred_region
      %s59 = ssub.s32 64, 64
      %60 = vsyncadd [#allocation11], %s59
      %s62 = sshll.u32 [#allocation10], 4
      %s63 = int_to_ptr.vmem [resolvable:$true] %s62
      %65 = dma.hbm_to_vmem [thread:$0]  %s3, 64, %s63, [#allocation11]
    $region17: #{lstm_model_forward.1} parent=1 // pred_fallthru
      _
    // Predicated region
    $region18: #{lstm_model_forward.1} parent=1 // pred_check
      _
    $region19: #{lstm_model_forward.1} parent=1 // pred_check_branch
      %67 = sbr.rel (0) target = $region21
    $region20: #{lstm_model_forward.1} parent=1 // pred_region
      %s69 = ssub.s32 8192, 8192
      %70 = vsyncadd [#allocation11], %s69
      %s71 = sshll.u32 [#allocation12], 4
      %s72 = int_to_ptr.vmem [resolvable:$true] %s71
      %77 = dma.hbm_to_vmem [thread:$0]  %s4, 8192, %s72, [#allocation11], 512, 512, 32
    $region21: #{lstm_model_forward.1} parent=1 // pred_fallthru
      _
    // Predicated region
    $region22: #{lstm_model_forward.1} parent=1 // pred_check
      _
    $region23: #{lstm_model_forward.1} parent=1 // pred_check_branch
      %79 = sbr.rel (0) target = $region25
    $region24: #{lstm_model_forward.1} parent=1 // pred_region
      %s81 = ssub.s32 8192, 8192
      %82 = vsyncadd [#allocation14], %s81
      %s83 = sshll.u32 [#allocation13], 4
      %s84 = int_to_ptr.vmem [resolvable:$true] %s83
      %89 = dma.hbm_to_vmem [thread:$0]  %s5, 8192, %s84, [#allocation14], 512, 512, 32
    $region25: #{lstm_model_forward.1} parent=1 // pred_fallthru
      _
    // Predicated region
    $region26: #{lstm_model_forward.1} parent=1 // pred_check
      _
    $region27: #{lstm_model_forward.1} parent=1 // pred_check_branch
      %91 = sbr.rel (0) target = $region29
    $region28: #{lstm_model_forward.1} parent=1 // pred_region
      %s93 = ssub.s32 64, 64
      %94 = vsyncadd [#allocation14], %s93
      %s96 = sshll.u32 [#allocation15], 4
      %s97 = int_to_ptr.vmem [resolvable:$true] %s96
      %99 = dma.hbm_to_vmem [thread:$0]  %s6, 64, %s97, [#allocation14]
    $region29: #{lstm_model_forward.1} parent=1 // pred_fallthru
      _
    // Predicated region
    $region30: #{lstm_model_forward.1} parent=1 // pred_check
      _
    $region31: #{lstm_model_forward.1} parent=1 // pred_check_branch
      %101 = sbr.rel (0) target = $region33
    $region32: #{lstm_model_forward.1} parent=1 // pred_region
      %s103 = ssub.s32 2048, 2048
      %104 = vsyncadd [#allocation17], %s103
      %s105 = sshll.u32 [#allocation16], 4
      %s106 = int_to_ptr.vmem [resolvable:$true] %s105
      %111 = dma.hbm_to_vmem [thread:$0]  %s7, 2048, %s106, [#allocation17], 128, 128, 8
    $region33: #{lstm_model_forward.1} parent=1 // pred_fallthru
      _
    // Predicated region
    $region34: #{lstm_model_forward.1} parent=1 // pred_check
      _
    $region35: #{lstm_model_forward.1} parent=1 // pred_check_branch
      %113 = sbr.rel (0) target = $region37
    $region36: #{lstm_model_forward.1} parent=1 // pred_region
      %s115 = ssub.s32 16, 16
      %116 = vsyncadd [#allocation17], %s115
      %s118 = sshll.u32 [#allocation18], 4
      %s119 = int_to_ptr.vmem [resolvable:$true] %s118
      %121 = dma.hbm_to_vmem [thread:$0]  %s8, 16, %s119, [#allocation17]
    $region37: #{lstm_model_forward.1} parent=1 // pred_fallthru
      _
    // Predicated region
    $region38: #{lstm_model_forward.1} parent=1 // pred_check
      _
    $region39: #{lstm_model_forward.1} parent=1 // pred_check_branch
      %123 = sbr.rel (0) target = $region41
    $region40: #{lstm_model_forward.1} parent=1 // pred_region
      %124 = dma.done [#allocation5], 1024
    $region41: #{lstm_model_forward.1} parent=1 // pred_fallthru
      _
    // Predicated region
    $region42: #{lstm_model_forward.1} parent=1 // pred_check
      _
    $region43: #{lstm_model_forward.1} parent=1 // pred_check_branch
      %126 = sbr.rel (0) target = $region45
    $region44: #{lstm_model_forward.1} parent=1 // pred_region
      %127 = dma.done [#allocation8], 8192
    $region45: #{lstm_model_forward.1} parent=1 // pred_fallthru
      _
    // Predicated region
    $region46: #{lstm_model_forward.1} parent=1 // pred_check
      _
    $region47: #{lstm_model_forward.1} parent=1 // pred_check_branch
      %129 = sbr.rel (0) target = $region49
    $region48: #{lstm_model_forward.1} parent=1 // pred_region
      %130 = dma.done [#allocation8], 8192
    $region49: #{lstm_model_forward.1} parent=1 // pred_fallthru
      _
    // Predicated region
    $region50: #{lstm_model_forward.1} parent=1 // pred_check
      _
    $region51: #{lstm_model_forward.1} parent=1 // pred_check_branch
      %132 = sbr.rel (0) target = $region53
    $region52: #{lstm_model_forward.1} parent=1 // pred_region
      %133 = dma.done [#allocation11], 64
    $region53: #{lstm_model_forward.1} parent=1 // pred_fallthru
      _
    // Predicated region
    $region54: #{lstm_model_forward.1} parent=1 // pred_check
      _
    $region55: #{lstm_model_forward.1} parent=1 // pred_check_branch
      %135 = sbr.rel (0) target = $region57
    $region56: #{lstm_model_forward.1} parent=1 // pred_region
      %136 = dma.done [#allocation11], 8192
    $region57: #{lstm_model_forward.1} parent=1 // pred_fallthru
      _
    // Predicated region
    $region58: #{lstm_model_forward.1} parent=1 // pred_check
      _
    $region59: #{lstm_model_forward.1} parent=1 // pred_check_branch
      %138 = sbr.rel (0) target = $region61
    $region60: #{lstm_model_forward.1} parent=1 // pred_region
      %139 = dma.done [#allocation14], 8192
    $region61: #{lstm_model_forward.1} parent=1 // pred_fallthru
      _
    // Predicated region
    $region62: #{lstm_model_forward.1} parent=1 // pred_check
      _
    $region63: #{lstm_model_forward.1} parent=1 // pred_check_branch
      %141 = sbr.rel (0) target = $region65
    $region64: #{lstm_model_forward.1} parent=1 // pred_region
      %142 = dma.done [#allocation14], 64
    $region65: #{lstm_model_forward.1} parent=1 // pred_fallthru
      _
    // Predicated region
    $region66: #{lstm_model_forward.1} parent=1 // pred_check
      _
    $region67: #{lstm_model_forward.1} parent=1 // pred_check_branch
      %144 = sbr.rel (0) target = $region69
    $region68: #{lstm_model_forward.1} parent=1 // pred_region
      %145 = dma.done [#allocation17], 2048
    $region69: #{lstm_model_forward.1} parent=1 // pred_fallthru
      _
    // Predicated region
    $region70: #{lstm_model_forward.1} parent=1 // pred_check
      _
    $region71: #{lstm_model_forward.1} parent=1 // pred_check_branch
      %147 = sbr.rel (0) target = $region73
    $region72: #{lstm_model_forward.1} parent=1 // pred_region
      %148 = dma.done [#allocation17], 16
    $region73: #{lstm_model_forward.1} parent=1 // pred_fallthru
      _
    %v149 = vld [vmem:[#allocation4] sm:$0xff]
    %v150 = vld [vmem:[#allocation4 + $0x8] sm:$0xff]
    %v151 = vld [vmem:[#allocation4 + $0x10] sm:$0xff]
    %v152 = vld [vmem:[#allocation4 + $0x18] sm:$0xff]
    %v153 = vld [vmem:[#allocation4 + $0x20] sm:$0xff]
    %v154 = vld [vmem:[#allocation4 + $0x28] sm:$0xff]
    %v155 = vld [vmem:[#allocation4 + $0x30] sm:$0xff]
    %v156 = vld [vmem:[#allocation4 + $0x38] sm:$0xff]
    %v157 = vld [vmem:[#allocation7] sm:$0xff]
    %v158 = vld [vmem:[#allocation7 + $0x8] sm:$0xff]
    %v159 = vld [vmem:[#allocation7 + $0x10] sm:$0xff]
    %v160 = vld [vmem:[#allocation7 + $0x18] sm:$0xff]
    %v161 = vld [vmem:[#allocation7 + $0x20] sm:$0xff]
    %v162 = vld [vmem:[#allocation7 + $0x28] sm:$0xff]
    %v163 = vld [vmem:[#allocation7 + $0x30] sm:$0xff]
    %v164 = vld [vmem:[#allocation7 + $0x38] sm:$0xff]
    %v165 = vld [vmem:[#allocation7 + $0x40] sm:$0xff]
    %v166 = vld [vmem:[#allocation7 + $0x48] sm:$0xff]
    %v167 = vld [vmem:[#allocation7 + $0x50] sm:$0xff]
    %v168 = vld [vmem:[#allocation7 + $0x58] sm:$0xff]
    %v169 = vld [vmem:[#allocation7 + $0x60] sm:$0xff]
    %v170 = vld [vmem:[#allocation7 + $0x68] sm:$0xff]
    %v171 = vld [vmem:[#allocation7 + $0x70] sm:$0xff]
    %v172 = vld [vmem:[#allocation7 + $0x78] sm:$0xff]
    %v173 = vld [vmem:[#allocation7 + $0x80] sm:$0xff]
    %v174 = vld [vmem:[#allocation7 + $0x88] sm:$0xff]
    %v175 = vld [vmem:[#allocation7 + $0x90] sm:$0xff]
    %v176 = vld [vmem:[#allocation7 + $0x98] sm:$0xff]
    %v177 = vld [vmem:[#allocation7 + $0xa0] sm:$0xff]
    %v178 = vld [vmem:[#allocation7 + $0xa8] sm:$0xff]
    %v179 = vld [vmem:[#allocation7 + $0xb0] sm:$0xff]
    %v180 = vld [vmem:[#allocation7 + $0xb8] sm:$0xff]
    %v181 = vld [vmem:[#allocation7 + $0xc0] sm:$0xff]
    %v182 = vld [vmem:[#allocation7 + $0xc8] sm:$0xff]
    %v183 = vld [vmem:[#allocation7 + $0xd0] sm:$0xff]
    %v184 = vld [vmem:[#allocation7 + $0xd8] sm:$0xff]
    %v185 = vld [vmem:[#allocation7 + $0xe0] sm:$0xff]
    %v186 = vld [vmem:[#allocation7 + $0xe8] sm:$0xff]
    %v187 = vld [vmem:[#allocation7 + $0xf0] sm:$0xff]
    %v188 = vld [vmem:[#allocation7 + $0xf8] sm:$0xff]
    %v189 = vld [vmem:[#allocation7 + $0x100] sm:$0xff]
    %v190 = vld [vmem:[#allocation7 + $0x108] sm:$0xff]
    %v191 = vld [vmem:[#allocation7 + $0x110] sm:$0xff]
    %v192 = vld [vmem:[#allocation7 + $0x118] sm:$0xff]
    %v193 = vld [vmem:[#allocation7 + $0x120] sm:$0xff]
    %v194 = vld [vmem:[#allocation7 + $0x128] sm:$0xff]
    %v195 = vld [vmem:[#allocation7 + $0x130] sm:$0xff]
    %v196 = vld [vmem:[#allocation7 + $0x138] sm:$0xff]
    %v197 = vld [vmem:[#allocation7 + $0x140] sm:$0xff]
    %v198 = vld [vmem:[#allocation7 + $0x148] sm:$0xff]
    %v199 = vld [vmem:[#allocation7 + $0x150] sm:$0xff]
    %v200 = vld [vmem:[#allocation7 + $0x158] sm:$0xff]
    %v201 = vld [vmem:[#allocation7 + $0x160] sm:$0xff]
    %v202 = vld [vmem:[#allocation7 + $0x168] sm:$0xff]
    %v203 = vld [vmem:[#allocation7 + $0x170] sm:$0xff]
    %v204 = vld [vmem:[#allocation7 + $0x178] sm:$0xff]
    %v205 = vld [vmem:[#allocation7 + $0x180] sm:$0xff]
    %v206 = vld [vmem:[#allocation7 + $0x188] sm:$0xff]
    %v207 = vld [vmem:[#allocation7 + $0x190] sm:$0xff]
    %v208 = vld [vmem:[#allocation7 + $0x198] sm:$0xff]
    %v209 = vld [vmem:[#allocation7 + $0x1a0] sm:$0xff]
    %v210 = vld [vmem:[#allocation7 + $0x1a8] sm:$0xff]
    %v211 = vld [vmem:[#allocation7 + $0x1b0] sm:$0xff]
    %v212 = vld [vmem:[#allocation7 + $0x1b8] sm:$0xff]
    %v213 = vld [vmem:[#allocation7 + $0x1c0] sm:$0xff]
    %v214 = vld [vmem:[#allocation7 + $0x1c8] sm:$0xff]
    %v215 = vld [vmem:[#allocation7 + $0x1d0] sm:$0xff]
    %v216 = vld [vmem:[#allocation7 + $0x1d8] sm:$0xff]
    %v217 = vld [vmem:[#allocation7 + $0x1e0] sm:$0xff]
    %v218 = vld [vmem:[#allocation7 + $0x1e8] sm:$0xff]
    %v219 = vld [vmem:[#allocation7 + $0x1f0] sm:$0xff]
    %v220 = vld [vmem:[#allocation7 + $0x1f8] sm:$0xff]
    %v221 = vld [vmem:[#allocation10] sm:$0xf]
    %v223 = vlaneseq
    %v224 = vshrl.u32 %v223, 7
    %v225 = vsub.s32 0, %v224
    %v226 = vrot.slane %v221, %v225
    %v227 = vlaneseq
    %v228 = vshrl.u32 %v227, 7
    %v229 = vsub.s32 1, %v228
    %v230 = vrot.slane %v221, %v229
    %v231 = vlaneseq
    %v232 = vshrl.u32 %v231, 7
    %v233 = vsub.s32 2, %v232
    %v234 = vrot.slane %v221, %v233
    %v235 = vlaneseq
    %v236 = vshrl.u32 %v235, 7
    %v237 = vsub.s32 3, %v236
    %v238 = vrot.slane %v221, %v237
    %243 = vmatprep.subr.mxu0 %v158
    %244 = vmatpush1.msra.mxu0 %v157
    %245 = vmatprep.subr.mxu0 %v162
    %246 = vmatpush1.msra.mxu0 %v161
    %247 = vmatprep.subr.mxu0 %v166
    %248 = vmatpush1.msra.mxu0 %v165
    %249 = vmatprep.subr.mxu0 %v170
    %250 = vmatpush1.msra.mxu0 %v169
    %251 = vmatprep.subr.mxu0 %v174
    %252 = vmatpush1.msra.mxu0 %v173
    %253 = vmatprep.subr.mxu0 %v178
    %254 = vmatpush1.msra.mxu0 %v177
    %255 = vmatprep.subr.mxu0 %v182
    %256 = vmatpush1.msra.mxu0 %v181
    %257 = vmatprep.subr.mxu0 %v186
    %258 = vmatpush1.msra.mxu0 %v185
    %259 = vmatprep.subr.mxu0 %v190
    %260 = vmatpush1.msra.mxu0 %v189
    %261 = vmatprep.subr.mxu0 %v194
    %262 = vmatpush1.msra.mxu0 %v193
    %263 = vmatprep.subr.mxu0 %v198
    %264 = vmatpush1.msra.mxu0 %v197
    %265 = vmatprep.subr.mxu0 %v202
    %266 = vmatpush1.msra.mxu0 %v201
    %267 = vmatprep.subr.mxu0 %v206
    %268 = vmatpush1.msra.mxu0 %v205
    %269 = vmatprep.subr.mxu0 %v210
    %270 = vmatpush1.msra.mxu0 %v209
    %271 = vmatprep.subr.mxu0 %v214
    %272 = vmatpush1.msra.mxu0 %v213
    %273 = vmatprep.subr.mxu0 %v218
    %274 = vmatpush1.msra.mxu0 %v217
    %275 = vmatprep.subr.mxu0 0.0
    %276 = vmatpush1.msra.mxu0 0.0
    %277 = vmatprep.subr.mxu0 0.0
    %278 = vmatpush1.msra.mxu0 0.0
    %279 = vmatprep.subr.mxu0 0.0
    %280 = vmatpush1.msra.mxu0 0.0
    %281 = vmatprep.subr.mxu0 0.0
    %282 = vmatpush1.msra.mxu0 0.0
    %283 = vmatprep.subr.mxu0 0.0
    %284 = vmatpush1.msra.mxu0 0.0
    %285 = vmatprep.subr.mxu0 0.0
    %286 = vmatpush1.msra.mxu0 0.0
    %287 = vmatprep.subr.mxu0 0.0
    %288 = vmatpush1.msra.mxu0 0.0
    %289 = vmatprep.subr.mxu0 0.0
    %290 = vmatpush1.msra.mxu0 0.0
    %291 = vmatprep.subr.mxu0 0.0
    %292 = vmatpush1.msra.mxu0 0.0
    %293 = vmatprep.subr.mxu0 0.0
    %294 = vmatpush1.msra.mxu0 0.0
    %295 = vmatprep.subr.mxu0 0.0
    %296 = vmatpush1.msra.mxu0 0.0
    %297 = vmatprep.subr.mxu0 0.0
    %298 = vmatpush1.msra.mxu0 0.0
    %299 = vmatprep.subr.mxu0 0.0
    %300 = vmatpush1.msra.mxu0 0.0
    %301 = vmatprep.subr.mxu0 0.0
    %302 = vmatpush1.msra.mxu0 0.0
    %303 = vmatprep.subr.mxu0 0.0
    %304 = vmatpush1.msra.mxu0 0.0
    %305 = vmatprep.subr.mxu0 0.0
    %306 = vmatpush1.msra.mxu0 0.0
    %307 = vmatprep.mubr.f32.mxu0 0.0
    %308 = vmatmul.mubr.f32.gmra.mrb[0].mxu0 %v149
    %v309 = vpop.f32.mrb[0].mxu0
    %v310 = vadd.f32 %v226, %v309
    %v311 = vpop.f32.mrb[0].mxu0
    %v312 = vadd.f32 %v230, %v311
    %313 = vmatprep.mubr.f32.mxu0 0.0
    %314 = vmatmul.mubr.f32.gmra.mrb[0].mxu0 %v150
    %v315 = vpop.f32.mrb[0].mxu0
    %v316 = vadd.f32 %v226, %v315
    %v317 = vpop.f32.mrb[0].mxu0
    %v318 = vadd.f32 %v230, %v317
    %319 = vmatprep.mubr.f32.mxu0 0.0
    %320 = vmatmul.mubr.f32.gmra.mrb[0].mxu0 %v151
    %v321 = vpop.f32.mrb[0].mxu0
    %v322 = vadd.f32 %v226, %v321
    %v323 = vpop.f32.mrb[0].mxu0
    %v324 = vadd.f32 %v230, %v323
    %325 = vmatprep.mubr.f32.mxu0 0.0
    %326 = vmatmul.mubr.f32.gmra.mrb[0].mxu0 %v152
    %v327 = vpop.f32.mrb[0].mxu0
    %v328 = vadd.f32 %v226, %v327
    %v329 = vpop.f32.mrb[0].mxu0
    %v330 = vadd.f32 %v230, %v329
    %331 = vmatprep.mubr.f32.mxu0 0.0
    %332 = vmatmul.mubr.f32.gmra.mrb[0].mxu0 %v153
    %v333 = vpop.f32.mrb[0].mxu0
    %v334 = vadd.f32 %v226, %v333
    %v335 = vpop.f32.mrb[0].mxu0
    %v336 = vadd.f32 %v230, %v335
    %337 = vmatprep.mubr.f32.mxu0 0.0
    %338 = vmatmul.mubr.f32.gmra.mrb[0].mxu0 %v154
    %v339 = vpop.f32.mrb[0].mxu0
    %v340 = vadd.f32 %v226, %v339
    %v341 = vpop.f32.mrb[0].mxu0
    %v342 = vadd.f32 %v230, %v341
    %343 = vmatprep.mubr.f32.mxu0 0.0
    %344 = vmatmul.mubr.f32.gmra.mrb[0].mxu0 %v155
    %v345 = vpop.f32.mrb[0].mxu0
    %v346 = vadd.f32 %v226, %v345
    %v347 = vpop.f32.mrb[0].mxu0
    %v348 = vadd.f32 %v230, %v347
    %349 = vmatprep.mubr.f32.mxu0 0.0
    %350 = vmatmul.mubr.f32.gmra.mrb[0].mxu0 %v156
    %v351 = vpop.f32.mrb[0].mxu0
    %v352 = vadd.f32 %v226, %v351
    %v353 = vpop.f32.mrb[0].mxu0
    %v354 = vadd.f32 %v230, %v353
    %355 = vdwg.mxu0
    %356 = vmatprep.subr.mxu0 %v160
    %357 = vmatpush1.msra.mxu0 %v159
    %358 = vmatprep.subr.mxu0 %v164
    %359 = vmatpush1.msra.mxu0 %v163
    %360 = vmatprep.subr.mxu0 %v168
    %361 = vmatpush1.msra.mxu0 %v167
    %362 = vmatprep.subr.mxu0 %v172
    %363 = vmatpush1.msra.mxu0 %v171
    %364 = vmatprep.subr.mxu0 %v176
    %365 = vmatpush1.msra.mxu0 %v175
    %366 = vmatprep.subr.mxu0 %v180
    %367 = vmatpush1.msra.mxu0 %v179
    %368 = vmatprep.subr.mxu0 %v184
    %369 = vmatpush1.msra.mxu0 %v183
    %370 = vmatprep.subr.mxu0 %v188
    %371 = vmatpush1.msra.mxu0 %v187
    %372 = vmatprep.subr.mxu0 %v192
    %373 = vmatpush1.msra.mxu0 %v191
    %374 = vmatprep.subr.mxu0 %v196
    %375 = vmatpush1.msra.mxu0 %v195
    %376 = vmatprep.subr.mxu0 %v200
    %377 = vmatpush1.msra.mxu0 %v199
    %378 = vmatprep.subr.mxu0 %v204
    %379 = vmatpush1.msra.mxu0 %v203
    %380 = vmatprep.subr.mxu0 %v208
    %381 = vmatpush1.msra.mxu0 %v207
    %382 = vmatprep.subr.mxu0 %v212
    %383 = vmatpush1.msra.mxu0 %v211
    %384 = vmatprep.subr.mxu0 %v216
    %385 = vmatpush1.msra.mxu0 %v215
    %386 = vmatprep.subr.mxu0 %v220
    %387 = vmatpush1.msra.mxu0 %v219
    %388 = vmatprep.subr.mxu0 0.0
    %389 = vmatpush1.msra.mxu0 0.0
    %390 = vmatprep.subr.mxu0 0.0
    %391 = vmatpush1.msra.mxu0 0.0
    %392 = vmatprep.subr.mxu0 0.0
    %393 = vmatpush1.msra.mxu0 0.0
    %394 = vmatprep.subr.mxu0 0.0
    %395 = vmatpush1.msra.mxu0 0.0
    %396 = vmatprep.subr.mxu0 0.0
    %397 = vmatpush1.msra.mxu0 0.0
    %398 = vmatprep.subr.mxu0 0.0
    %399 = vmatpush1.msra.mxu0 0.0
    %400 = vmatprep.subr.mxu0 0.0
    %401 = vmatpush1.msra.mxu0 0.0
    %402 = vmatprep.subr.mxu0 0.0
    %403 = vmatpush1.msra.mxu0 0.0
    %404 = vmatprep.subr.mxu0 0.0
    %405 = vmatpush1.msra.mxu0 0.0
    %406 = vmatprep.subr.mxu0 0.0
    %407 = vmatpush1.msra.mxu0 0.0
    %408 = vmatprep.subr.mxu0 0.0
    %409 = vmatpush1.msra.mxu0 0.0
    %410 = vmatprep.subr.mxu0 0.0
    %411 = vmatpush1.msra.mxu0 0.0
    %412 = vmatprep.subr.mxu0 0.0
    %413 = vmatpush1.msra.mxu0 0.0
    %414 = vmatprep.subr.mxu0 0.0
    %415 = vmatpush1.msra.mxu0 0.0
    %416 = vmatprep.subr.mxu0 0.0
    %417 = vmatpush1.msra.mxu0 0.0
    %418 = vmatprep.subr.mxu0 0.0
    %419 = vmatpush1.msra.mxu0 0.0
    %420 = vmatprep.mubr.f32.mxu0 0.0
    %421 = vmatmul.mubr.f32.gmra.mrb[0].mxu0 %v149
    %v422 = vpop.f32.mrb[0].mxu0
    %v423 = vadd.f32 %v234, %v422
    %v424 = vpop.f32.mrb[0].mxu0
    %v425 = vadd.f32 %v238, %v424
    %426 = vmatprep.mubr.f32.mxu0 0.0
    %427 = vmatmul.mubr.f32.gmra.mrb[0].mxu0 %v150
    %v428 = vpop.f32.mrb[0].mxu0
    %v429 = vadd.f32 %v234, %v428
    %v430 = vpop.f32.mrb[0].mxu0
    %v431 = vadd.f32 %v238, %v430
    %432 = vmatprep.mubr.f32.mxu0 0.0
    %433 = vmatmul.mubr.f32.gmra.mrb[0].mxu0 %v151
    %v434 = vpop.f32.mrb[0].mxu0
    %v435 = vadd.f32 %v234, %v434
    %v436 = vpop.f32.mrb[0].mxu0
    %v437 = vadd.f32 %v238, %v436
    %438 = vmatprep.mubr.f32.mxu0 0.0
    %439 = vmatmul.mubr.f32.gmra.mrb[0].mxu0 %v152
    %v440 = vpop.f32.mrb[0].mxu0
    %v441 = vadd.f32 %v234, %v440
    %v442 = vpop.f32.mrb[0].mxu0
    %v443 = vadd.f32 %v238, %v442
    %444 = vmatprep.mubr.f32.mxu0 0.0
    %445 = vmatmul.mubr.f32.gmra.mrb[0].mxu0 %v153
    %v446 = vpop.f32.mrb[0].mxu0
    %v447 = vadd.f32 %v234, %v446
    %v448 = vpop.f32.mrb[0].mxu0
    %v449 = vadd.f32 %v238, %v448
    %450 = vmatprep.mubr.f32.mxu0 0.0
    %451 = vmatmul.mubr.f32.gmra.mrb[0].mxu0 %v154
    %v452 = vpop.f32.mrb[0].mxu0
    %v453 = vadd.f32 %v234, %v452
    %v454 = vpop.f32.mrb[0].mxu0
    %v455 = vadd.f32 %v238, %v454
    %456 = vmatprep.mubr.f32.mxu0 0.0
    %457 = vmatmul.mubr.f32.gmra.mrb[0].mxu0 %v155
    %v458 = vpop.f32.mrb[0].mxu0
    %v459 = vadd.f32 %v234, %v458
    %v460 = vpop.f32.mrb[0].mxu0
    %v461 = vadd.f32 %v238, %v460
    %462 = vmatprep.mubr.f32.mxu0 0.0
    %463 = vmatmul.mubr.f32.gmra.mrb[0].mxu0 %v156
    %v464 = vpop.f32.mrb[0].mxu0
    %v465 = vadd.f32 %v234, %v464
    %v466 = vpop.f32.mrb[0].mxu0
    %v467 = vadd.f32 %v238, %v466
    %468 = vdwg.mxu0
    %469 = vst [vmem:[#allocation2] sm:$0xff] %v310
    %470 = vst [vmem:[#allocation2 + $0x8] sm:$0xff] %v312
    %471 = vst [vmem:[#allocation2 + $0x10] sm:$0xff] %v423
    %472 = vst [vmem:[#allocation2 + $0x18] sm:$0xff] %v425
    %473 = vst [vmem:[#allocation2 + $0x20] sm:$0xff] %v316
    %474 = vst [vmem:[#allocation2 + $0x28] sm:$0xff] %v318
    %475 = vst [vmem:[#allocation2 + $0x30] sm:$0xff] %v429
    %476 = vst [vmem:[#allocation2 + $0x38] sm:$0xff] %v431
    %477 = vst [vmem:[#allocation2 + $0x40] sm:$0xff] %v322
    %478 = vst [vmem:[#allocation2 + $0x48] sm:$0xff] %v324
    %479 = vst [vmem:[#allocation2 + $0x50] sm:$0xff] %v435
    %480 = vst [vmem:[#allocation2 + $0x58] sm:$0xff] %v437
    %481 = vst [vmem:[#allocation2 + $0x60] sm:$0xff] %v328
    %482 = vst [vmem:[#allocation2 + $0x68] sm:$0xff] %v330
    %483 = vst [vmem:[#allocation2 + $0x70] sm:$0xff] %v441
    %484 = vst [vmem:[#allocation2 + $0x78] sm:$0xff] %v443
    %485 = vst [vmem:[#allocation2 + $0x80] sm:$0xff] %v334
    %486 = vst [vmem:[#allocation2 + $0x88] sm:$0xff] %v336
    %487 = vst [vmem:[#allocation2 + $0x90] sm:$0xff] %v447
    %488 = vst [vmem:[#allocation2 + $0x98] sm:$0xff] %v449
    %489 = vst [vmem:[#allocation2 + $0xa0] sm:$0xff] %v340
    %490 = vst [vmem:[#allocation2 + $0xa8] sm:$0xff] %v342
    %491 = vst [vmem:[#allocation2 + $0xb0] sm:$0xff] %v453
    %492 = vst [vmem:[#allocation2 + $0xb8] sm:$0xff] %v455
    %493 = vst [vmem:[#allocation2 + $0xc0] sm:$0xff] %v346
    %494 = vst [vmem:[#allocation2 + $0xc8] sm:$0xff] %v348
    %495 = vst [vmem:[#allocation2 + $0xd0] sm:$0xff] %v459
    %496 = vst [vmem:[#allocation2 + $0xd8] sm:$0xff] %v461
    %497 = vst [vmem:[#allocation2 + $0xe0] sm:$0xff] %v352
    %498 = vst [vmem:[#allocation2 + $0xe8] sm:$0xff] %v354
    %499 = vst [vmem:[#allocation2 + $0xf0] sm:$0xff] %v465
    %500 = vst [vmem:[#allocation2 + $0xf8] sm:$0xff] %v467
    %v501 = vld [vmem:[#allocation9] sm:$0xff]
    %v502 = vld [vmem:[#allocation9 + $0x8] sm:$0xff]
    %v503 = vld [vmem:[#allocation9 + $0x10] sm:$0xff]
    %v504 = vld [vmem:[#allocation9 + $0x18] sm:$0xff]
    %v505 = vld [vmem:[#allocation9 + $0x20] sm:$0xff]
    %v506 = vld [vmem:[#allocation9 + $0x28] sm:$0xff]
    %v507 = vld [vmem:[#allocation9 + $0x30] sm:$0xff]
    %v508 = vld [vmem:[#allocation9 + $0x38] sm:$0xff]
    %v509 = vld [vmem:[#allocation9 + $0x40] sm:$0xff]
    %v510 = vld [vmem:[#allocation9 + $0x48] sm:$0xff]
    %v511 = vld [vmem:[#allocation9 + $0x50] sm:$0xff]
    %v512 = vld [vmem:[#allocation9 + $0x58] sm:$0xff]
    %v513 = vld [vmem:[#allocation9 + $0x60] sm:$0xff]
    %v514 = vld [vmem:[#allocation9 + $0x68] sm:$0xff]
    %v515 = vld [vmem:[#allocation9 + $0x70] sm:$0xff]
    %v516 = vld [vmem:[#allocation9 + $0x78] sm:$0xff]
    %v517 = vld [vmem:[#allocation9 + $0x80] sm:$0xff]
    %v518 = vld [vmem:[#allocation9 + $0x88] sm:$0xff]
    %v519 = vld [vmem:[#allocation9 + $0x90] sm:$0xff]
    %v520 = vld [vmem:[#allocation9 + $0x98] sm:$0xff]
    %v521 = vld [vmem:[#allocation9 + $0xa0] sm:$0xff]
    %v522 = vld [vmem:[#allocation9 + $0xa8] sm:$0xff]
    %v523 = vld [vmem:[#allocation9 + $0xb0] sm:$0xff]
    %v524 = vld [vmem:[#allocation9 + $0xb8] sm:$0xff]
    %v525 = vld [vmem:[#allocation9 + $0xc0] sm:$0xff]
    %v526 = vld [vmem:[#allocation9 + $0xc8] sm:$0xff]
    %v527 = vld [vmem:[#allocation9 + $0xd0] sm:$0xff]
    %v528 = vld [vmem:[#allocation9 + $0xd8] sm:$0xff]
    %v529 = vld [vmem:[#allocation9 + $0xe0] sm:$0xff]
    %v530 = vld [vmem:[#allocation9 + $0xe8] sm:$0xff]
    %v531 = vld [vmem:[#allocation9 + $0xf0] sm:$0xff]
    %v532 = vld [vmem:[#allocation9 + $0xf8] sm:$0xff]
    %v533 = vld [vmem:[#allocation9 + $0x100] sm:$0xff]
    %v534 = vld [vmem:[#allocation9 + $0x108] sm:$0xff]
    %v535 = vld [vmem:[#allocation9 + $0x110] sm:$0xff]
    %v536 = vld [vmem:[#allocation9 + $0x118] sm:$0xff]
    %v537 = vld [vmem:[#allocation9 + $0x120] sm:$0xff]
    %v538 = vld [vmem:[#allocation9 + $0x128] sm:$0xff]
    %v539 = vld [vmem:[#allocation9 + $0x130] sm:$0xff]
    %v540 = vld [vmem:[#allocation9 + $0x138] sm:$0xff]
    %v541 = vld [vmem:[#allocation9 + $0x140] sm:$0xff]
    %v542 = vld [vmem:[#allocation9 + $0x148] sm:$0xff]
    %v543 = vld [vmem:[#allocation9 + $0x150] sm:$0xff]
    %v544 = vld [vmem:[#allocation9 + $0x158] sm:$0xff]
    %v545 = vld [vmem:[#allocation9 + $0x160] sm:$0xff]
    %v546 = vld [vmem:[#allocation9 + $0x168] sm:$0xff]
    %v547 = vld [vmem:[#allocation9 + $0x170] sm:$0xff]
    %v548 = vld [vmem:[#allocation9 + $0x178] sm:$0xff]
    %v549 = vld [vmem:[#allocation9 + $0x180] sm:$0xff]
    %v550 = vld [vmem:[#allocation9 + $0x188] sm:$0xff]
    %v551 = vld [vmem:[#allocation9 + $0x190] sm:$0xff]
    %v552 = vld [vmem:[#allocation9 + $0x198] sm:$0xff]
    %v553 = vld [vmem:[#allocation9 + $0x1a0] sm:$0xff]
    %v554 = vld [vmem:[#allocation9 + $0x1a8] sm:$0xff]
    %v555 = vld [vmem:[#allocation9 + $0x1b0] sm:$0xff]
    %v556 = vld [vmem:[#allocation9 + $0x1b8] sm:$0xff]
    %v557 = vld [vmem:[#allocation9 + $0x1c0] sm:$0xff]
    %v558 = vld [vmem:[#allocation9 + $0x1c8] sm:$0xff]
    %v559 = vld [vmem:[#allocation9 + $0x1d0] sm:$0xff]
    %v560 = vld [vmem:[#allocation9 + $0x1d8] sm:$0xff]
    %v561 = vld [vmem:[#allocation9 + $0x1e0] sm:$0xff]
    %v562 = vld [vmem:[#allocation9 + $0x1e8] sm:$0xff]
    %v563 = vld [vmem:[#allocation9 + $0x1f0] sm:$0xff]
    %v564 = vld [vmem:[#allocation9 + $0x1f8] sm:$0xff]
    %s565 = smul.u32 0, 4
    %s566 = smul.addr %s565, 8
    %s567 = scalar_lea.vmem [#allocation2], %s566
    %v568 = vld [vmem:[%s567] sm:$0xff]
    %v569 = vld [vmem:[%s567 + $0x8] sm:$0xff]
    %v570 = vld [vmem:[%s567 + $0x10] sm:$0xff]
    %v571 = vld [vmem:[%s567 + $0x18] sm:$0xff]
    %572 = vmatprep.subr.mxu0 %v502
    %573 = vmatpush1.msra.mxu0 %v501
    %574 = vmatprep.subr.mxu0 %v506
    %575 = vmatpush1.msra.mxu0 %v505
    %576 = vmatprep.subr.mxu0 %v510
    %577 = vmatpush1.msra.mxu0 %v509
    %578 = vmatprep.subr.mxu0 %v514
    %579 = vmatpush1.msra.mxu0 %v513
    %580 = vmatprep.subr.mxu0 %v518
    %581 = vmatpush1.msra.mxu0 %v517
    %582 = vmatprep.subr.mxu0 %v522
    %583 = vmatpush1.msra.mxu0 %v521
    %584 = vmatprep.subr.mxu0 %v526
    %585 = vmatpush1.msra.mxu0 %v525
    %586 = vmatprep.subr.mxu0 %v530
    %587 = vmatpush1.msra.mxu0 %v529
    %588 = vmatprep.subr.mxu0 %v534
    %589 = vmatpush1.msra.mxu0 %v533
    %590 = vmatprep.subr.mxu0 %v538
    %591 = vmatpush1.msra.mxu0 %v537
    %592 = vmatprep.subr.mxu0 %v542
    %593 = vmatpush1.msra.mxu0 %v541
    %594 = vmatprep.subr.mxu0 %v546
    %595 = vmatpush1.msra.mxu0 %v545
    %596 = vmatprep.subr.mxu0 %v550
    %597 = vmatpush1.msra.mxu0 %v549
    %598 = vmatprep.subr.mxu0 %v554
    %599 = vmatpush1.msra.mxu0 %v553
    %600 = vmatprep.subr.mxu0 %v558
    %601 = vmatpush1.msra.mxu0 %v557
    %602 = vmatprep.subr.mxu0 %v562
    %603 = vmatpush1.msra.mxu0 %v561
    %604 = vmatprep.subr.mxu0 0.0
    %605 = vmatpush1.msra.mxu0 0.0
    %606 = vmatprep.subr.mxu0 0.0
    %607 = vmatpush1.msra.mxu0 0.0
    %608 = vmatprep.subr.mxu0 0.0
    %609 = vmatpush1.msra.mxu0 0.0
    %610 = vmatprep.subr.mxu0 0.0
    %611 = vmatpush1.msra.mxu0 0.0
    %612 = vmatprep.subr.mxu0 0.0
    %613 = vmatpush1.msra.mxu0 0.0
    %614 = vmatprep.subr.mxu0 0.0
    %615 = vmatpush1.msra.mxu0 0.0
    %616 = vmatprep.subr.mxu0 0.0
    %617 = vmatpush1.msra.mxu0 0.0
    %618 = vmatprep.subr.mxu0 0.0
    %619 = vmatpush1.msra.mxu0 0.0
    %620 = vmatprep.subr.mxu0 0.0
    %621 = vmatpush1.msra.mxu0 0.0
    %622 = vmatprep.subr.mxu0 0.0
    %623 = vmatpush1.msra.mxu0 0.0
    %624 = vmatprep.subr.mxu0 0.0
    %625 = vmatpush1.msra.mxu0 0.0
    %626 = vmatprep.subr.mxu0 0.0
    %627 = vmatpush1.msra.mxu0 0.0
    %628 = vmatprep.subr.mxu0 0.0
    %629 = vmatpush1.msra.mxu0 0.0
    %630 = vmatprep.subr.mxu0 0.0
    %631 = vmatpush1.msra.mxu0 0.0
    %632 = vmatprep.subr.mxu0 0.0
    %633 = vmatpush1.msra.mxu0 0.0
    %634 = vmatprep.subr.mxu0 0.0
    %635 = vmatpush1.msra.mxu0 0.0
    %636 = vmatprep.mubr.f32.mxu0 0.0
    %637 = vmatmul.mubr.f32.gmra.mrb[0].mxu0 0.0
    %v638 = vpop.f32.mrb[0].mxu0
    %v639 = vadd.f32 0.0, %v638
    %v640 = vpop.f32.mrb[0].mxu0
    %v641 = vadd.f32 0.0, %v640
    %642 = vdwg.mxu0
    %643 = vmatprep.subr.mxu0 %v504
    %644 = vmatpush1.msra.mxu0 %v503
    %645 = vmatprep.subr.mxu0 %v508
    %646 = vmatpush1.msra.mxu0 %v507
    %647 = vmatprep.subr.mxu0 %v512
    %648 = vmatpush1.msra.mxu0 %v511
    %649 = vmatprep.subr.mxu0 %v516
    %650 = vmatpush1.msra.mxu0 %v515
    %651 = vmatprep.subr.mxu0 %v520
    %652 = vmatpush1.msra.mxu0 %v519
    %653 = vmatprep.subr.mxu0 %v524
    %654 = vmatpush1.msra.mxu0 %v523
    %655 = vmatprep.subr.mxu0 %v528
    %656 = vmatpush1.msra.mxu0 %v527
    %657 = vmatprep.subr.mxu0 %v532
    %658 = vmatpush1.msra.mxu0 %v531
    %659 = vmatprep.subr.mxu0 %v536
    %660 = vmatpush1.msra.mxu0 %v535
    %661 = vmatprep.subr.mxu0 %v540
    %662 = vmatpush1.msra.mxu0 %v539
    %663 = vmatprep.subr.mxu0 %v544
    %664 = vmatpush1.msra.mxu0 %v543
    %665 = vmatprep.subr.mxu0 %v548
    %666 = vmatpush1.msra.mxu0 %v547
    %667 = vmatprep.subr.mxu0 %v552
    %668 = vmatpush1.msra.mxu0 %v551
    %669 = vmatprep.subr.mxu0 %v556
    %670 = vmatpush1.msra.mxu0 %v555
    %671 = vmatprep.subr.mxu0 %v560
    %672 = vmatpush1.msra.mxu0 %v559
    %673 = vmatprep.subr.mxu0 %v564
    %674 = vmatpush1.msra.mxu0 %v563
    %675 = vmatprep.subr.mxu0 0.0
    %676 = vmatpush1.msra.mxu0 0.0
    %677 = vmatprep.subr.mxu0 0.0
    %678 = vmatpush1.msra.mxu0 0.0
    %679 = vmatprep.subr.mxu0 0.0
    %680 = vmatpush1.msra.mxu0 0.0
    %681 = vmatprep.subr.mxu0 0.0
    %682 = vmatpush1.msra.mxu0 0.0
    %683 = vmatprep.subr.mxu0 0.0
    %684 = vmatpush1.msra.mxu0 0.0
    %685 = vmatprep.subr.mxu0 0.0
    %686 = vmatpush1.msra.mxu0 0.0
    %687 = vmatprep.subr.mxu0 0.0
    %688 = vmatpush1.msra.mxu0 0.0
    %689 = vmatprep.subr.mxu0 0.0
    %690 = vmatpush1.msra.mxu0 0.0
    %691 = vmatprep.subr.mxu0 0.0
    %692 = vmatpush1.msra.mxu0 0.0
    %693 = vmatprep.subr.mxu0 0.0
    %694 = vmatpush1.msra.mxu0 0.0
    %695 = vmatprep.subr.mxu0 0.0
    %696 = vmatpush1.msra.mxu0 0.0
    %697 = vmatprep.subr.mxu0 0.0
    %698 = vmatpush1.msra.mxu0 0.0
    %699 = vmatprep.subr.mxu0 0.0
    %700 = vmatpush1.msra.mxu0 0.0
    %701 = vmatprep.subr.mxu0 0.0
    %702 = vmatpush1.msra.mxu0 0.0
    %703 = vmatprep.subr.mxu0 0.0
    %704 = vmatpush1.msra.mxu0 0.0
    %705 = vmatprep.subr.mxu0 0.0
    %706 = vmatpush1.msra.mxu0 0.0
    %707 = vmatprep.mubr.f32.mxu0 0.0
    %708 = vmatmul.mubr.f32.gmra.mrb[0].mxu0 0.0
    %v709 = vpop.f32.mrb[0].mxu0
    %v710 = vadd.f32 0.0, %v709
    %v711 = vpop.f32.mrb[0].mxu0
    %v712 = vadd.f32 0.0, %v711
    %713 = vdwg.mxu0
    %v714 = vadd.f32 %v568, %v639
    %v715 = vadd.f32 %v569, %v641
    %v716 = vadd.f32 %v570, %v710
    %v717 = vadd.f32 %v571, %v712
    %v718 = vxor.u32 %v714, 2147483648
    %v719 = vxor.u32 %v715, 2147483648
    %v720 = vxor.u32 %v716, 2147483648
    %v721 = vmul.f32 %v718, 1.442695
    %v722 = vpow.pop %v721
    %v723 = vmul.f32 %v719, 1.442695
    %v724 = vpow.pop %v723
    %v725 = vmul.f32 %v720, 1.442695
    %v726 = vpow.pop %v725
    %v727 = vadd.f32 %v722, 1.0
    %v728 = vadd.f32 %v724, 1.0
    %v729 = vadd.f32 %v726, 1.0
    %v730 = vrcp.pop %v727
    %v731 = vmul.f32 1.0, %v730
    %v732 = vrcp.pop %v728
    %v733 = vmul.f32 1.0, %v732
    %v734 = vrcp.pop %v729
    %v735 = vmul.f32 1.0, %v734
    %v736 = vtanh.pop %v717
    %v737 = vmul.f32 %v733, 0.0
    %v738 = vmul.f32 %v731, %v736
    %v739 = vadd.f32 %v737, %v738
    %v740 = vtanh.pop %v739
    %v741 = vmul.f32 %v735, %v740
    %742 = vst [vmem:[#allocation3] sm:$0xff] %v741
    %s743 = smul.u32 1, 4
    %s744 = smul.addr %s743, 8
    %s745 = scalar_lea.vmem [#allocation2], %s744
    %v746 = vld [vmem:[%s745] sm:$0xff]
    %v747 = vld [vmem:[%s745 + $0x8] sm:$0xff]
    %v748 = vld [vmem:[%s745 + $0x10] sm:$0xff]
    %v749 = vld [vmem:[%s745 + $0x18] sm:$0xff]
    %750 = vmatprep.subr.mxu0 %v502
    %751 = vmatpush1.msra.mxu0 %v501
    %752 = vmatprep.subr.mxu0 %v506
    %753 = vmatpush1.msra.mxu0 %v505
    %754 = vmatprep.subr.mxu0 %v510
    %755 = vmatpush1.msra.mxu0 %v509
    %756 = vmatprep.subr.mxu0 %v514
    %757 = vmatpush1.msra.mxu0 %v513
    %758 = vmatprep.subr.mxu0 %v518
    %759 = vmatpush1.msra.mxu0 %v517
    %760 = vmatprep.subr.mxu0 %v522
    %761 = vmatpush1.msra.mxu0 %v521
    %762 = vmatprep.subr.mxu0 %v526
    %763 = vmatpush1.msra.mxu0 %v525
    %764 = vmatprep.subr.mxu0 %v530
    %765 = vmatpush1.msra.mxu0 %v529
    %766 = vmatprep.subr.mxu0 %v534
    %767 = vmatpush1.msra.mxu0 %v533
    %768 = vmatprep.subr.mxu0 %v538
    %769 = vmatpush1.msra.mxu0 %v537
    %770 = vmatprep.subr.mxu0 %v542
    %771 = vmatpush1.msra.mxu0 %v541
    %772 = vmatprep.subr.mxu0 %v546
    %773 = vmatpush1.msra.mxu0 %v545
    %774 = vmatprep.subr.mxu0 %v550
    %775 = vmatpush1.msra.mxu0 %v549
    %776 = vmatprep.subr.mxu0 %v554
    %777 = vmatpush1.msra.mxu0 %v553
    %778 = vmatprep.subr.mxu0 %v558
    %779 = vmatpush1.msra.mxu0 %v557
    %780 = vmatprep.subr.mxu0 %v562
    %781 = vmatpush1.msra.mxu0 %v561
    %782 = vmatprep.subr.mxu0 0.0
    %783 = vmatpush1.msra.mxu0 0.0
    %784 = vmatprep.subr.mxu0 0.0
    %785 = vmatpush1.msra.mxu0 0.0
    %786 = vmatprep.subr.mxu0 0.0
    %787 = vmatpush1.msra.mxu0 0.0
    %788 = vmatprep.subr.mxu0 0.0
    %789 = vmatpush1.msra.mxu0 0.0
    %790 = vmatprep.subr.mxu0 0.0
    %791 = vmatpush1.msra.mxu0 0.0
    %792 = vmatprep.subr.mxu0 0.0
    %793 = vmatpush1.msra.mxu0 0.0
    %794 = vmatprep.subr.mxu0 0.0
    %795 = vmatpush1.msra.mxu0 0.0
    %796 = vmatprep.subr.mxu0 0.0
    %797 = vmatpush1.msra.mxu0 0.0
    %798 = vmatprep.subr.mxu0 0.0
    %799 = vmatpush1.msra.mxu0 0.0
    %800 = vmatprep.subr.mxu0 0.0
    %801 = vmatpush1.msra.mxu0 0.0
    %802 = vmatprep.subr.mxu0 0.0
    %803 = vmatpush1.msra.mxu0 0.0
    %804 = vmatprep.subr.mxu0 0.0
    %805 = vmatpush1.msra.mxu0 0.0
    %806 = vmatprep.subr.mxu0 0.0
    %807 = vmatpush1.msra.mxu0 0.0
    %808 = vmatprep.subr.mxu0 0.0
    %809 = vmatpush1.msra.mxu0 0.0
    %810 = vmatprep.subr.mxu0 0.0
    %811 = vmatpush1.msra.mxu0 0.0
    %812 = vmatprep.subr.mxu0 0.0
    %813 = vmatpush1.msra.mxu0 0.0
    %814 = vmatprep.mubr.f32.mxu0 0.0
    %815 = vmatmul.mubr.f32.gmra.mrb[0].mxu0 %v741
    %v816 = vpop.f32.mrb[0].mxu0
    %v817 = vadd.f32 0.0, %v816
    %v818 = vpop.f32.mrb[0].mxu0
    %v819 = vadd.f32 0.0, %v818
    %820 = vdwg.mxu0
    %821 = vmatprep.subr.mxu0 %v504
    %822 = vmatpush1.msra.mxu0 %v503
    %823 = vmatprep.subr.mxu0 %v508
    %824 = vmatpush1.msra.mxu0 %v507
    %825 = vmatprep.subr.mxu0 %v512
    %826 = vmatpush1.msra.mxu0 %v511
    %827 = vmatprep.subr.mxu0 %v516
    %828 = vmatpush1.msra.mxu0 %v515
    %829 = vmatprep.subr.mxu0 %v520
    %830 = vmatpush1.msra.mxu0 %v519
    %831 = vmatprep.subr.mxu0 %v524
    %832 = vmatpush1.msra.mxu0 %v523
    %833 = vmatprep.subr.mxu0 %v528
    %834 = vmatpush1.msra.mxu0 %v527
    %835 = vmatprep.subr.mxu0 %v532
    %836 = vmatpush1.msra.mxu0 %v531
    %837 = vmatprep.subr.mxu0 %v536
    %838 = vmatpush1.msra.mxu0 %v535
    %839 = vmatprep.subr.mxu0 %v540
    %840 = vmatpush1.msra.mxu0 %v539
    %841 = vmatprep.subr.mxu0 %v544
    %842 = vmatpush1.msra.mxu0 %v543
    %843 = vmatprep.subr.mxu0 %v548
    %844 = vmatpush1.msra.mxu0 %v547
    %845 = vmatprep.subr.mxu0 %v552
    %846 = vmatpush1.msra.mxu0 %v551
    %847 = vmatprep.subr.mxu0 %v556
    %848 = vmatpush1.msra.mxu0 %v555
    %849 = vmatprep.subr.mxu0 %v560
    %850 = vmatpush1.msra.mxu0 %v559
    %851 = vmatprep.subr.mxu0 %v564
    %852 = vmatpush1.msra.mxu0 %v563
    %853 = vmatprep.subr.mxu0 0.0
    %854 = vmatpush1.msra.mxu0 0.0
    %855 = vmatprep.subr.mxu0 0.0
    %856 = vmatpush1.msra.mxu0 0.0
    %857 = vmatprep.subr.mxu0 0.0
    %858 = vmatpush1.msra.mxu0 0.0
    %859 = vmatprep.subr.mxu0 0.0
    %860 = vmatpush1.msra.mxu0 0.0
    %861 = vmatprep.subr.mxu0 0.0
    %862 = vmatpush1.msra.mxu0 0.0
    %863 = vmatprep.subr.mxu0 0.0
    %864 = vmatpush1.msra.mxu0 0.0
    %865 = vmatprep.subr.mxu0 0.0
    %866 = vmatpush1.msra.mxu0 0.0
    %867 = vmatprep.subr.mxu0 0.0
    %868 = vmatpush1.msra.mxu0 0.0
    %869 = vmatprep.subr.mxu0 0.0
    %870 = vmatpush1.msra.mxu0 0.0
    %871 = vmatprep.subr.mxu0 0.0
    %872 = vmatpush1.msra.mxu0 0.0
    %873 = vmatprep.subr.mxu0 0.0
    %874 = vmatpush1.msra.mxu0 0.0
    %875 = vmatprep.subr.mxu0 0.0
    %876 = vmatpush1.msra.mxu0 0.0
    %877 = vmatprep.subr.mxu0 0.0
    %878 = vmatpush1.msra.mxu0 0.0
    %879 = vmatprep.subr.mxu0 0.0
    %880 = vmatpush1.msra.mxu0 0.0
    %881 = vmatprep.subr.mxu0 0.0
    %882 = vmatpush1.msra.mxu0 0.0
    %883 = vmatprep.subr.mxu0 0.0
    %884 = vmatpush1.msra.mxu0 0.0
    %885 = vmatprep.mubr.f32.mxu0 0.0
    %886 = vmatmul.mubr.f32.gmra.mrb[0].mxu0 %v741
    %v887 = vpop.f32.mrb[0].mxu0
    %v888 = vadd.f32 0.0, %v887
    %v889 = vpop.f32.mrb[0].mxu0
    %v890 = vadd.f32 0.0, %v889
    %891 = vdwg.mxu0
    %v892 = vadd.f32 %v746, %v817
    %v893 = vadd.f32 %v747, %v819
    %v894 = vadd.f32 %v748, %v888
    %v895 = vadd.f32 %v749, %v890
    %v896 = vxor.u32 %v892, 2147483648
    %v897 = vxor.u32 %v893, 2147483648
    %v898 = vxor.u32 %v894, 2147483648
    %v899 = vmul.f32 %v896, 1.442695
    %v900 = vpow.pop %v899
    %v901 = vmul.f32 %v897, 1.442695
    %v902 = vpow.pop %v901
    %v903 = vmul.f32 %v898, 1.442695
    %v904 = vpow.pop %v903
    %v905 = vadd.f32 %v900, 1.0
    %v906 = vadd.f32 %v902, 1.0
    %v907 = vadd.f32 %v904, 1.0
    %v908 = vrcp.pop %v905
    %v909 = vmul.f32 1.0, %v908
    %v910 = vrcp.pop %v906
    %v911 = vmul.f32 1.0, %v910
    %v912 = vrcp.pop %v907
    %v913 = vmul.f32 1.0, %v912
    %v914 = vtanh.pop %v895
    %v915 = vmul.f32 %v911, %v739
    %v916 = vmul.f32 %v909, %v914
    %v917 = vadd.f32 %v915, %v916
    %v918 = vtanh.pop %v917
    %v919 = vmul.f32 %v913, %v918
    %s920 = scalar_lea.vmem [#allocation3], 8
    %921 = vst [vmem:[%s920] sm:$0xff] %v919
    %s922 = smul.u32 2, 4
    %s923 = smul.addr %s922, 8
    %s924 = scalar_lea.vmem [#allocation2], %s923
    %v925 = vld [vmem:[%s924] sm:$0xff]
    %v926 = vld [vmem:[%s924 + $0x8] sm:$0xff]
    %v927 = vld [vmem:[%s924 + $0x10] sm:$0xff]
    %v928 = vld [vmem:[%s924 + $0x18] sm:$0xff]
    %929 = vmatprep.subr.mxu0 %v502
    %930 = vmatpush1.msra.mxu0 %v501
    %931 = vmatprep.subr.mxu0 %v506
    %932 = vmatpush1.msra.mxu0 %v505
    %933 = vmatprep.subr.mxu0 %v510
    %934 = vmatpush1.msra.mxu0 %v509
    %935 = vmatprep.subr.mxu0 %v514
    %936 = vmatpush1.msra.mxu0 %v513
    %937 = vmatprep.subr.mxu0 %v518
    %938 = vmatpush1.msra.mxu0 %v517
    %939 = vmatprep.subr.mxu0 %v522
    %940 = vmatpush1.msra.mxu0 %v521
    %941 = vmatprep.subr.mxu0 %v526
    %942 = vmatpush1.msra.mxu0 %v525
    %943 = vmatprep.subr.mxu0 %v530
    %944 = vmatpush1.msra.mxu0 %v529
    %945 = vmatprep.subr.mxu0 %v534
    %946 = vmatpush1.msra.mxu0 %v533
    %947 = vmatprep.subr.mxu0 %v538
    %948 = vmatpush1.msra.mxu0 %v537
    %949 = vmatprep.subr.mxu0 %v542
    %950 = vmatpush1.msra.mxu0 %v541
    %951 = vmatprep.subr.mxu0 %v546
    %952 = vmatpush1.msra.mxu0 %v545
    %953 = vmatprep.subr.mxu0 %v550
    %954 = vmatpush1.msra.mxu0 %v549
    %955 = vmatprep.subr.mxu0 %v554
    %956 = vmatpush1.msra.mxu0 %v553
    %957 = vmatprep.subr.mxu0 %v558
    %958 = vmatpush1.msra.mxu0 %v557
    %959 = vmatprep.subr.mxu0 %v562
    %960 = vmatpush1.msra.mxu0 %v561
    %961 = vmatprep.subr.mxu0 0.0
    %962 = vmatpush1.msra.mxu0 0.0
    %963 = vmatprep.subr.mxu0 0.0
    %964 = vmatpush1.msra.mxu0 0.0
    %965 = vmatprep.subr.mxu0 0.0
    %966 = vmatpush1.msra.mxu0 0.0
    %967 = vmatprep.subr.mxu0 0.0
    %968 = vmatpush1.msra.mxu0 0.0
    %969 = vmatprep.subr.mxu0 0.0
    %970 = vmatpush1.msra.mxu0 0.0
    %971 = vmatprep.subr.mxu0 0.0
    %972 = vmatpush1.msra.mxu0 0.0
    %973 = vmatprep.subr.mxu0 0.0
    %974 = vmatpush1.msra.mxu0 0.0
    %975 = vmatprep.subr.mxu0 0.0
    %976 = vmatpush1.msra.mxu0 0.0
    %977 = vmatprep.subr.mxu0 0.0
    %978 = vmatpush1.msra.mxu0 0.0
    %979 = vmatprep.subr.mxu0 0.0
    %980 = vmatpush1.msra.mxu0 0.0
    %981 = vmatprep.subr.mxu0 0.0
    %982 = vmatpush1.msra.mxu0 0.0
    %983 = vmatprep.subr.mxu0 0.0
    %984 = vmatpush1.msra.mxu0 0.0
    %985 = vmatprep.subr.mxu0 0.0
    %986 = vmatpush1.msra.mxu0 0.0
    %987 = vmatprep.subr.mxu0 0.0
    %988 = vmatpush1.msra.mxu0 0.0
    %989 = vmatprep.subr.mxu0 0.0
    %990 = vmatpush1.msra.mxu0 0.0
    %991 = vmatprep.subr.mxu0 0.0
    %992 = vmatpush1.msra.mxu0 0.0
    %993 = vmatprep.mubr.f32.mxu0 0.0
    %994 = vmatmul.mubr.f32.gmra.mrb[0].mxu0 %v919
    %v995 = vpop.f32.mrb[0].mxu0
    %v996 = vadd.f32 0.0, %v995
    %v997 = vpop.f32.mrb[0].mxu0
    %v998 = vadd.f32 0.0, %v997
    %999 = vdwg.mxu0
    %1000 = vmatprep.subr.mxu0 %v504
    %1001 = vmatpush1.msra.mxu0 %v503
    %1002 = vmatprep.subr.mxu0 %v508
    %1003 = vmatpush1.msra.mxu0 %v507
    %1004 = vmatprep.subr.mxu0 %v512
    %1005 = vmatpush1.msra.mxu0 %v511
    %1006 = vmatprep.subr.mxu0 %v516
    %1007 = vmatpush1.msra.mxu0 %v515
    %1008 = vmatprep.subr.mxu0 %v520
    %1009 = vmatpush1.msra.mxu0 %v519
    %1010 = vmatprep.subr.mxu0 %v524
    %1011 = vmatpush1.msra.mxu0 %v523
    %1012 = vmatprep.subr.mxu0 %v528
    %1013 = vmatpush1.msra.mxu0 %v527
    %1014 = vmatprep.subr.mxu0 %v532
    %1015 = vmatpush1.msra.mxu0 %v531
    %1016 = vmatprep.subr.mxu0 %v536
    %1017 = vmatpush1.msra.mxu0 %v535
    %1018 = vmatprep.subr.mxu0 %v540
    %1019 = vmatpush1.msra.mxu0 %v539
    %1020 = vmatprep.subr.mxu0 %v544
    %1021 = vmatpush1.msra.mxu0 %v543
    %1022 = vmatprep.subr.mxu0 %v548
    %1023 = vmatpush1.msra.mxu0 %v547
    %1024 = vmatprep.subr.mxu0 %v552
    %1025 = vmatpush1.msra.mxu0 %v551
    %1026 = vmatprep.subr.mxu0 %v556
    %1027 = vmatpush1.msra.mxu0 %v555
    %1028 = vmatprep.subr.mxu0 %v560
    %1029 = vmatpush1.msra.mxu0 %v559
    %1030 = vmatprep.subr.mxu0 %v564
    %1031 = vmatpush1.msra.mxu0 %v563
    %1032 = vmatprep.subr.mxu0 0.0
    %1033 = vmatpush1.msra.mxu0 0.0
    %1034 = vmatprep.subr.mxu0 0.0
    %1035 = vmatpush1.msra.mxu0 0.0
    %1036 = vmatprep.subr.mxu0 0.0
    %1037 = vmatpush1.msra.mxu0 0.0
    %1038 = vmatprep.subr.mxu0 0.0
    %1039 = vmatpush1.msra.mxu0 0.0
    %1040 = vmatprep.subr.mxu0 0.0
    %1041 = vmatpush1.msra.mxu0 0.0
    %1042 = vmatprep.subr.mxu0 0.0
    %1043 = vmatpush1.msra.mxu0 0.0
    %1044 = vmatprep.subr.mxu0 0.0
    %1045 = vmatpush1.msra.mxu0 0.0
    %1046 = vmatprep.subr.mxu0 0.0
    %1047 = vmatpush1.msra.mxu0 0.0
    %1048 = vmatprep.subr.mxu0 0.0
    %1049 = vmatpush1.msra.mxu0 0.0
    %1050 = vmatprep.subr.mxu0 0.0
    %1051 = vmatpush1.msra.mxu0 0.0
    %1052 = vmatprep.subr.mxu0 0.0
    %1053 = vmatpush1.msra.mxu0 0.0
    %1054 = vmatprep.subr.mxu0 0.0
    %1055 = vmatpush1.msra.mxu0 0.0
    %1056 = vmatprep.subr.mxu0 0.0
    %1057 = vmatpush1.msra.mxu0 0.0
    %1058 = vmatprep.subr.mxu0 0.0
    %1059 = vmatpush1.msra.mxu0 0.0
    %1060 = vmatprep.subr.mxu0 0.0
    %1061 = vmatpush1.msra.mxu0 0.0
    %1062 = vmatprep.subr.mxu0 0.0
    %1063 = vmatpush1.msra.mxu0 0.0
    %1064 = vmatprep.mubr.f32.mxu0 0.0
    %1065 = vmatmul.mubr.f32.gmra.mrb[0].mxu0 %v919
    %v1066 = vpop.f32.mrb[0].mxu0
    %v1067 = vadd.f32 0.0, %v1066
    %v1068 = vpop.f32.mrb[0].mxu0
    %v1069 = vadd.f32 0.0, %v1068
    %1070 = vdwg.mxu0
    %v1071 = vadd.f32 %v925, %v996
    %v1072 = vadd.f32 %v926, %v998
    %v1073 = vadd.f32 %v927, %v1067
    %v1074 = vadd.f32 %v928, %v1069
    %v1075 = vxor.u32 %v1071, 2147483648
    %v1076 = vxor.u32 %v1072, 2147483648
    %v1077 = vxor.u32 %v1073, 2147483648
    %v1078 = vmul.f32 %v1075, 1.442695
    %v1079 = vpow.pop %v1078
    %v1080 = vmul.f32 %v1076, 1.442695
    %v1081 = vpow.pop %v1080
    %v1082 = vmul.f32 %v1077, 1.442695
    %v1083 = vpow.pop %v1082
    %v1084 = vadd.f32 %v1079, 1.0
    %v1085 = vadd.f32 %v1081, 1.0
    %v1086 = vadd.f32 %v1083, 1.0
    %v1087 = vrcp.pop %v1084
    %v1088 = vmul.f32 1.0, %v1087
    %v1089 = vrcp.pop %v1085
    %v1090 = vmul.f32 1.0, %v1089
    %v1091 = vrcp.pop %v1086
    %v1092 = vmul.f32 1.0, %v1091
    %v1093 = vtanh.pop %v1074
    %v1094 = vmul.f32 %v1090, %v917
    %v1095 = vmul.f32 %v1088, %v1093
    %v1096 = vadd.f32 %v1094, %v1095
    %v1097 = vtanh.pop %v1096
    %v1098 = vmul.f32 %v1092, %v1097
    %s1099 = scalar_lea.vmem [#allocation3], 16
    %1100 = vst [vmem:[%s1099] sm:$0xff] %v1098
    %s1101 = smul.u32 3, 4
    %s1102 = smul.addr %s1101, 8
    %s1103 = scalar_lea.vmem [#allocation2], %s1102
    %v1104 = vld [vmem:[%s1103] sm:$0xff]
    %v1105 = vld [vmem:[%s1103 + $0x8] sm:$0xff]
    %v1106 = vld [vmem:[%s1103 + $0x10] sm:$0xff]
    %v1107 = vld [vmem:[%s1103 + $0x18] sm:$0xff]
    %1108 = vmatprep.subr.mxu0 %v502
    %1109 = vmatpush1.msra.mxu0 %v501
    %1110 = vmatprep.subr.mxu0 %v506
    %1111 = vmatpush1.msra.mxu0 %v505
    %1112 = vmatprep.subr.mxu0 %v510
    %1113 = vmatpush1.msra.mxu0 %v509
    %1114 = vmatprep.subr.mxu0 %v514
    %1115 = vmatpush1.msra.mxu0 %v513
    %1116 = vmatprep.subr.mxu0 %v518
    %1117 = vmatpush1.msra.mxu0 %v517
    %1118 = vmatprep.subr.mxu0 %v522
    %1119 = vmatpush1.msra.mxu0 %v521
    %1120 = vmatprep.subr.mxu0 %v526
    %1121 = vmatpush1.msra.mxu0 %v525
    %1122 = vmatprep.subr.mxu0 %v530
    %1123 = vmatpush1.msra.mxu0 %v529
    %1124 = vmatprep.subr.mxu0 %v534
    %1125 = vmatpush1.msra.mxu0 %v533
    %1126 = vmatprep.subr.mxu0 %v538
    %1127 = vmatpush1.msra.mxu0 %v537
    %1128 = vmatprep.subr.mxu0 %v542
    %1129 = vmatpush1.msra.mxu0 %v541
    %1130 = vmatprep.subr.mxu0 %v546
    %1131 = vmatpush1.msra.mxu0 %v545
    %1132 = vmatprep.subr.mxu0 %v550
    %1133 = vmatpush1.msra.mxu0 %v549
    %1134 = vmatprep.subr.mxu0 %v554
    %1135 = vmatpush1.msra.mxu0 %v553
    %1136 = vmatprep.subr.mxu0 %v558
    %1137 = vmatpush1.msra.mxu0 %v557
    %1138 = vmatprep.subr.mxu0 %v562
    %1139 = vmatpush1.msra.mxu0 %v561
    %1140 = vmatprep.subr.mxu0 0.0
    %1141 = vmatpush1.msra.mxu0 0.0
    %1142 = vmatprep.subr.mxu0 0.0
    %1143 = vmatpush1.msra.mxu0 0.0
    %1144 = vmatprep.subr.mxu0 0.0
    %1145 = vmatpush1.msra.mxu0 0.0
    %1146 = vmatprep.subr.mxu0 0.0
    %1147 = vmatpush1.msra.mxu0 0.0
    %1148 = vmatprep.subr.mxu0 0.0
    %1149 = vmatpush1.msra.mxu0 0.0
    %1150 = vmatprep.subr.mxu0 0.0
    %1151 = vmatpush1.msra.mxu0 0.0
    %1152 = vmatprep.subr.mxu0 0.0
    %1153 = vmatpush1.msra.mxu0 0.0
    %1154 = vmatprep.subr.mxu0 0.0
    %1155 = vmatpush1.msra.mxu0 0.0
    %1156 = vmatprep.subr.mxu0 0.0
    %1157 = vmatpush1.msra.mxu0 0.0
    %1158 = vmatprep.subr.mxu0 0.0
    %1159 = vmatpush1.msra.mxu0 0.0
    %1160 = vmatprep.subr.mxu0 0.0
    %1161 = vmatpush1.msra.mxu0 0.0
    %1162 = vmatprep.subr.mxu0 0.0
    %1163 = vmatpush1.msra.mxu0 0.0
    %1164 = vmatprep.subr.mxu0 0.0
    %1165 = vmatpush1.msra.mxu0 0.0
    %1166 = vmatprep.subr.mxu0 0.0
    %1167 = vmatpush1.msra.mxu0 0.0
    %1168 = vmatprep.subr.mxu0 0.0
    %1169 = vmatpush1.msra.mxu0 0.0
    %1170 = vmatprep.subr.mxu0 0.0
    %1171 = vmatpush1.msra.mxu0 0.0
    %1172 = vmatprep.mubr.f32.mxu0 0.0
    %1173 = vmatmul.mubr.f32.gmra.mrb[0].mxu0 %v1098
    %v1174 = vpop.f32.mrb[0].mxu0
    %v1175 = vadd.f32 0.0, %v1174
    %v1176 = vpop.f32.mrb[0].mxu0
    %v1177 = vadd.f32 0.0, %v1176
    %1178 = vdwg.mxu0
    %1179 = vmatprep.subr.mxu0 %v504
    %1180 = vmatpush1.msra.mxu0 %v503
    %1181 = vmatprep.subr.mxu0 %v508
    %1182 = vmatpush1.msra.mxu0 %v507
    %1183 = vmatprep.subr.mxu0 %v512
    %1184 = vmatpush1.msra.mxu0 %v511
    %1185 = vmatprep.subr.mxu0 %v516
    %1186 = vmatpush1.msra.mxu0 %v515
    %1187 = vmatprep.subr.mxu0 %v520
    %1188 = vmatpush1.msra.mxu0 %v519
    %1189 = vmatprep.subr.mxu0 %v524
    %1190 = vmatpush1.msra.mxu0 %v523
    %1191 = vmatprep.subr.mxu0 %v528
    %1192 = vmatpush1.msra.mxu0 %v527
    %1193 = vmatprep.subr.mxu0 %v532
    %1194 = vmatpush1.msra.mxu0 %v531
    %1195 = vmatprep.subr.mxu0 %v536
    %1196 = vmatpush1.msra.mxu0 %v535
    %1197 = vmatprep.subr.mxu0 %v540
    %1198 = vmatpush1.msra.mxu0 %v539
    %1199 = vmatprep.subr.mxu0 %v544
    %1200 = vmatpush1.msra.mxu0 %v543
    %1201 = vmatprep.subr.mxu0 %v548
    %1202 = vmatpush1.msra.mxu0 %v547
    %1203 = vmatprep.subr.mxu0 %v552
    %1204 = vmatpush1.msra.mxu0 %v551
    %1205 = vmatprep.subr.mxu0 %v556
    %1206 = vmatpush1.msra.mxu0 %v555
    %1207 = vmatprep.subr.mxu0 %v560
    %1208 = vmatpush1.msra.mxu0 %v559
    %1209 = vmatprep.subr.mxu0 %v564
    %1210 = vmatpush1.msra.mxu0 %v563
    %1211 = vmatprep.subr.mxu0 0.0
    %1212 = vmatpush1.msra.mxu0 0.0
    %1213 = vmatprep.subr.mxu0 0.0
    %1214 = vmatpush1.msra.mxu0 0.0
    %1215 = vmatprep.subr.mxu0 0.0
    %1216 = vmatpush1.msra.mxu0 0.0
    %1217 = vmatprep.subr.mxu0 0.0
    %1218 = vmatpush1.msra.mxu0 0.0
    %1219 = vmatprep.subr.mxu0 0.0
    %1220 = vmatpush1.msra.mxu0 0.0
    %1221 = vmatprep.subr.mxu0 0.0
    %1222 = vmatpush1.msra.mxu0 0.0
    %1223 = vmatprep.subr.mxu0 0.0
    %1224 = vmatpush1.msra.mxu0 0.0
    %1225 = vmatprep.subr.mxu0 0.0
    %1226 = vmatpush1.msra.mxu0 0.0
    %1227 = vmatprep.subr.mxu0 0.0
    %1228 = vmatpush1.msra.mxu0 0.0
    %1229 = vmatprep.subr.mxu0 0.0
    %1230 = vmatpush1.msra.mxu0 0.0
    %1231 = vmatprep.subr.mxu0 0.0
    %1232 = vmatpush1.msra.mxu0 0.0
    %1233 = vmatprep.subr.mxu0 0.0
    %1234 = vmatpush1.msra.mxu0 0.0
    %1235 = vmatprep.subr.mxu0 0.0
    %1236 = vmatpush1.msra.mxu0 0.0
    %1237 = vmatprep.subr.mxu0 0.0
    %1238 = vmatpush1.msra.mxu0 0.0
    %1239 = vmatprep.subr.mxu0 0.0
    %1240 = vmatpush1.msra.mxu0 0.0
    %1241 = vmatprep.subr.mxu0 0.0
    %1242 = vmatpush1.msra.mxu0 0.0
    %1243 = vmatprep.mubr.f32.mxu0 0.0
    %1244 = vmatmul.mubr.f32.gmra.mrb[0].mxu0 %v1098
    %v1245 = vpop.f32.mrb[0].mxu0
    %v1246 = vadd.f32 0.0, %v1245
    %v1247 = vpop.f32.mrb[0].mxu0
    %v1248 = vadd.f32 0.0, %v1247
    %1249 = vdwg.mxu0
    %v1250 = vadd.f32 %v1104, %v1175
    %v1251 = vadd.f32 %v1105, %v1177
    %v1252 = vadd.f32 %v1106, %v1246
    %v1253 = vadd.f32 %v1107, %v1248
    %v1254 = vxor.u32 %v1250, 2147483648
    %v1255 = vxor.u32 %v1251, 2147483648
    %v1256 = vxor.u32 %v1252, 2147483648
    %v1257 = vmul.f32 %v1254, 1.442695
    %v1258 = vpow.pop %v1257
    %v1259 = vmul.f32 %v1255, 1.442695
    %v1260 = vpow.pop %v1259
    %v1261 = vmul.f32 %v1256, 1.442695
    %v1262 = vpow.pop %v1261
    %v1263 = vadd.f32 %v1258, 1.0
    %v1264 = vadd.f32 %v1260, 1.0
    %v1265 = vadd.f32 %v1262, 1.0
    %v1266 = vrcp.pop %v1263
    %v1267 = vmul.f32 1.0, %v1266
    %v1268 = vrcp.pop %v1264
    %v1269 = vmul.f32 1.0, %v1268
    %v1270 = vrcp.pop %v1265
    %v1271 = vmul.f32 1.0, %v1270
    %v1272 = vtanh.pop %v1253
    %v1273 = vmul.f32 %v1269, %v1096
    %v1274 = vmul.f32 %v1267, %v1272
    %v1275 = vadd.f32 %v1273, %v1274
    %v1276 = vtanh.pop %v1275
    %v1277 = vmul.f32 %v1271, %v1276
    %s1278 = scalar_lea.vmem [#allocation3], 24
    %1279 = vst [vmem:[%s1278] sm:$0xff] %v1277
    %s1280 = smul.u32 4, 4
    %s1281 = smul.addr %s1280, 8
    %s1282 = scalar_lea.vmem [#allocation2], %s1281
    %v1283 = vld [vmem:[%s1282] sm:$0xff]
    %v1284 = vld [vmem:[%s1282 + $0x8] sm:$0xff]
    %v1285 = vld [vmem:[%s1282 + $0x10] sm:$0xff]
    %v1286 = vld [vmem:[%s1282 + $0x18] sm:$0xff]
    %1287 = vmatprep.subr.mxu0 %v502
    %1288 = vmatpush1.msra.mxu0 %v501
    %1289 = vmatprep.subr.mxu0 %v506
    %1290 = vmatpush1.msra.mxu0 %v505
    %1291 = vmatprep.subr.mxu0 %v510
    %1292 = vmatpush1.msra.mxu0 %v509
    %1293 = vmatprep.subr.mxu0 %v514
    %1294 = vmatpush1.msra.mxu0 %v513
    %1295 = vmatprep.subr.mxu0 %v518
    %1296 = vmatpush1.msra.mxu0 %v517
    %1297 = vmatprep.subr.mxu0 %v522
    %1298 = vmatpush1.msra.mxu0 %v521
    %1299 = vmatprep.subr.mxu0 %v526
    %1300 = vmatpush1.msra.mxu0 %v525
    %1301 = vmatprep.subr.mxu0 %v530
    %1302 = vmatpush1.msra.mxu0 %v529
    %1303 = vmatprep.subr.mxu0 %v534
    %1304 = vmatpush1.msra.mxu0 %v533
    %1305 = vmatprep.subr.mxu0 %v538
    %1306 = vmatpush1.msra.mxu0 %v537
    %1307 = vmatprep.subr.mxu0 %v542
    %1308 = vmatpush1.msra.mxu0 %v541
    %1309 = vmatprep.subr.mxu0 %v546
    %1310 = vmatpush1.msra.mxu0 %v545
    %1311 = vmatprep.subr.mxu0 %v550
    %1312 = vmatpush1.msra.mxu0 %v549
    %1313 = vmatprep.subr.mxu0 %v554
    %1314 = vmatpush1.msra.mxu0 %v553
    %1315 = vmatprep.subr.mxu0 %v558
    %1316 = vmatpush1.msra.mxu0 %v557
    %1317 = vmatprep.subr.mxu0 %v562
    %1318 = vmatpush1.msra.mxu0 %v561
    %1319 = vmatprep.subr.mxu0 0.0
    %1320 = vmatpush1.msra.mxu0 0.0
    %1321 = vmatprep.subr.mxu0 0.0
    %1322 = vmatpush1.msra.mxu0 0.0
    %1323 = vmatprep.subr.mxu0 0.0
    %1324 = vmatpush1.msra.mxu0 0.0
    %1325 = vmatprep.subr.mxu0 0.0
    %1326 = vmatpush1.msra.mxu0 0.0
    %1327 = vmatprep.subr.mxu0 0.0
    %1328 = vmatpush1.msra.mxu0 0.0
    %1329 = vmatprep.subr.mxu0 0.0
    %1330 = vmatpush1.msra.mxu0 0.0
    %1331 = vmatprep.subr.mxu0 0.0
    %1332 = vmatpush1.msra.mxu0 0.0
    %1333 = vmatprep.subr.mxu0 0.0
    %1334 = vmatpush1.msra.mxu0 0.0
    %1335 = vmatprep.subr.mxu0 0.0
    %1336 = vmatpush1.msra.mxu0 0.0
    %1337 = vmatprep.subr.mxu0 0.0
    %1338 = vmatpush1.msra.mxu0 0.0
    %1339 = vmatprep.subr.mxu0 0.0
    %1340 = vmatpush1.msra.mxu0 0.0
    %1341 = vmatprep.subr.mxu0 0.0
    %1342 = vmatpush1.msra.mxu0 0.0
    %1343 = vmatprep.subr.mxu0 0.0
    %1344 = vmatpush1.msra.mxu0 0.0
    %1345 = vmatprep.subr.mxu0 0.0
    %1346 = vmatpush1.msra.mxu0 0.0
    %1347 = vmatprep.subr.mxu0 0.0
    %1348 = vmatpush1.msra.mxu0 0.0
    %1349 = vmatprep.subr.mxu0 0.0
    %1350 = vmatpush1.msra.mxu0 0.0
    %1351 = vmatprep.mubr.f32.mxu0 0.0
    %1352 = vmatmul.mubr.f32.gmra.mrb[0].mxu0 %v1277
    %v1353 = vpop.f32.mrb[0].mxu0
    %v1354 = vadd.f32 0.0, %v1353
    %v1355 = vpop.f32.mrb[0].mxu0
    %v1356 = vadd.f32 0.0, %v1355
    %1357 = vdwg.mxu0
    %1358 = vmatprep.subr.mxu0 %v504
    %1359 = vmatpush1.msra.mxu0 %v503
    %1360 = vmatprep.subr.mxu0 %v508
    %1361 = vmatpush1.msra.mxu0 %v507
    %1362 = vmatprep.subr.mxu0 %v512
    %1363 = vmatpush1.msra.mxu0 %v511
    %1364 = vmatprep.subr.mxu0 %v516
    %1365 = vmatpush1.msra.mxu0 %v515
    %1366 = vmatprep.subr.mxu0 %v520
    %1367 = vmatpush1.msra.mxu0 %v519
    %1368 = vmatprep.subr.mxu0 %v524
    %1369 = vmatpush1.msra.mxu0 %v523
    %1370 = vmatprep.subr.mxu0 %v528
    %1371 = vmatpush1.msra.mxu0 %v527
    %1372 = vmatprep.subr.mxu0 %v532
    %1373 = vmatpush1.msra.mxu0 %v531
    %1374 = vmatprep.subr.mxu0 %v536
    %1375 = vmatpush1.msra.mxu0 %v535
    %1376 = vmatprep.subr.mxu0 %v540
    %1377 = vmatpush1.msra.mxu0 %v539
    %1378 = vmatprep.subr.mxu0 %v544
    %1379 = vmatpush1.msra.mxu0 %v543
    %1380 = vmatprep.subr.mxu0 %v548
    %1381 = vmatpush1.msra.mxu0 %v547
    %1382 = vmatprep.subr.mxu0 %v552
    %1383 = vmatpush1.msra.mxu0 %v551
    %1384 = vmatprep.subr.mxu0 %v556
    %1385 = vmatpush1.msra.mxu0 %v555
    %1386 = vmatprep.subr.mxu0 %v560
    %1387 = vmatpush1.msra.mxu0 %v559
    %1388 = vmatprep.subr.mxu0 %v564
    %1389 = vmatpush1.msra.mxu0 %v563
    %1390 = vmatprep.subr.mxu0 0.0
    %1391 = vmatpush1.msra.mxu0 0.0
    %1392 = vmatprep.subr.mxu0 0.0
    %1393 = vmatpush1.msra.mxu0 0.0
    %1394 = vmatprep.subr.mxu0 0.0
    %1395 = vmatpush1.msra.mxu0 0.0
    %1396 = vmatprep.subr.mxu0 0.0
    %1397 = vmatpush1.msra.mxu0 0.0
    %1398 = vmatprep.subr.mxu0 0.0
    %1399 = vmatpush1.msra.mxu0 0.0
    %1400 = vmatprep.subr.mxu0 0.0
    %1401 = vmatpush1.msra.mxu0 0.0
    %1402 = vmatprep.subr.mxu0 0.0
    %1403 = vmatpush1.msra.mxu0 0.0
    %1404 = vmatprep.subr.mxu0 0.0
    %1405 = vmatpush1.msra.mxu0 0.0
    %1406 = vmatprep.subr.mxu0 0.0
    %1407 = vmatpush1.msra.mxu0 0.0
    %1408 = vmatprep.subr.mxu0 0.0
    %1409 = vmatpush1.msra.mxu0 0.0
    %1410 = vmatprep.subr.mxu0 0.0
    %1411 = vmatpush1.msra.mxu0 0.0
    %1412 = vmatprep.subr.mxu0 0.0
    %1413 = vmatpush1.msra.mxu0 0.0
    %1414 = vmatprep.subr.mxu0 0.0
    %1415 = vmatpush1.msra.mxu0 0.0
    %1416 = vmatprep.subr.mxu0 0.0
    %1417 = vmatpush1.msra.mxu0 0.0
    %1418 = vmatprep.subr.mxu0 0.0
    %1419 = vmatpush1.msra.mxu0 0.0
    %1420 = vmatprep.subr.mxu0 0.0
    %1421 = vmatpush1.msra.mxu0 0.0
    %1422 = vmatprep.mubr.f32.mxu0 0.0
    %1423 = vmatmul.mubr.f32.gmra.mrb[0].mxu0 %v1277
    %v1424 = vpop.f32.mrb[0].mxu0
    %v1425 = vadd.f32 0.0, %v1424
    %v1426 = vpop.f32.mrb[0].mxu0
    %v1427 = vadd.f32 0.0, %v1426
    %1428 = vdwg.mxu0
    %v1429 = vadd.f32 %v1283, %v1354
    %v1430 = vadd.f32 %v1284, %v1356
    %v1431 = vadd.f32 %v1285, %v1425
    %v1432 = vadd.f32 %v1286, %v1427
    %v1433 = vxor.u32 %v1429, 2147483648
    %v1434 = vxor.u32 %v1430, 2147483648
    %v1435 = vxor.u32 %v1431, 2147483648
    %v1436 = vmul.f32 %v1433, 1.442695
    %v1437 = vpow.pop %v1436
    %v1438 = vmul.f32 %v1434, 1.442695
    %v1439 = vpow.pop %v1438
    %v1440 = vmul.f32 %v1435, 1.442695
    %v1441 = vpow.pop %v1440
    %v1442 = vadd.f32 %v1437, 1.0
    %v1443 = vadd.f32 %v1439, 1.0
    %v1444 = vadd.f32 %v1441, 1.0
    %v1445 = vrcp.pop %v1442
    %v1446 = vmul.f32 1.0, %v1445
    %v1447 = vrcp.pop %v1443
    %v1448 = vmul.f32 1.0, %v1447
    %v1449 = vrcp.pop %v1444
    %v1450 = vmul.f32 1.0, %v1449
    %v1451 = vtanh.pop %v1432
    %v1452 = vmul.f32 %v1448, %v1275
    %v1453 = vmul.f32 %v1446, %v1451
    %v1454 = vadd.f32 %v1452, %v1453
    %v1455 = vtanh.pop %v1454
    %v1456 = vmul.f32 %v1450, %v1455
    %s1457 = scalar_lea.vmem [#allocation3], 32
    %1458 = vst [vmem:[%s1457] sm:$0xff] %v1456
    %s1459 = smul.u32 5, 4
    %s1460 = smul.addr %s1459, 8
    %s1461 = scalar_lea.vmem [#allocation2], %s1460
    %v1462 = vld [vmem:[%s1461] sm:$0xff]
    %v1463 = vld [vmem:[%s1461 + $0x8] sm:$0xff]
    %v1464 = vld [vmem:[%s1461 + $0x10] sm:$0xff]
    %v1465 = vld [vmem:[%s1461 + $0x18] sm:$0xff]
    %1466 = vmatprep.subr.mxu0 %v502
    %1467 = vmatpush1.msra.mxu0 %v501
    %1468 = vmatprep.subr.mxu0 %v506
    %1469 = vmatpush1.msra.mxu0 %v505
    %1470 = vmatprep.subr.mxu0 %v510
    %1471 = vmatpush1.msra.mxu0 %v509
    %1472 = vmatprep.subr.mxu0 %v514
    %1473 = vmatpush1.msra.mxu0 %v513
    %1474 = vmatprep.subr.mxu0 %v518
    %1475 = vmatpush1.msra.mxu0 %v517
    %1476 = vmatprep.subr.mxu0 %v522
    %1477 = vmatpush1.msra.mxu0 %v521
    %1478 = vmatprep.subr.mxu0 %v526
    %1479 = vmatpush1.msra.mxu0 %v525
    %1480 = vmatprep.subr.mxu0 %v530
    %1481 = vmatpush1.msra.mxu0 %v529
    %1482 = vmatprep.subr.mxu0 %v534
    %1483 = vmatpush1.msra.mxu0 %v533
    %1484 = vmatprep.subr.mxu0 %v538
    %1485 = vmatpush1.msra.mxu0 %v537
    %1486 = vmatprep.subr.mxu0 %v542
    %1487 = vmatpush1.msra.mxu0 %v541
    %1488 = vmatprep.subr.mxu0 %v546
    %1489 = vmatpush1.msra.mxu0 %v545
    %1490 = vmatprep.subr.mxu0 %v550
    %1491 = vmatpush1.msra.mxu0 %v549
    %1492 = vmatprep.subr.mxu0 %v554
    %1493 = vmatpush1.msra.mxu0 %v553
    %1494 = vmatprep.subr.mxu0 %v558
    %1495 = vmatpush1.msra.mxu0 %v557
    %1496 = vmatprep.subr.mxu0 %v562
    %1497 = vmatpush1.msra.mxu0 %v561
    %1498 = vmatprep.subr.mxu0 0.0
    %1499 = vmatpush1.msra.mxu0 0.0
    %1500 = vmatprep.subr.mxu0 0.0
    %1501 = vmatpush1.msra.mxu0 0.0
    %1502 = vmatprep.subr.mxu0 0.0
    %1503 = vmatpush1.msra.mxu0 0.0
    %1504 = vmatprep.subr.mxu0 0.0
    %1505 = vmatpush1.msra.mxu0 0.0
    %1506 = vmatprep.subr.mxu0 0.0
    %1507 = vmatpush1.msra.mxu0 0.0
    %1508 = vmatprep.subr.mxu0 0.0
    %1509 = vmatpush1.msra.mxu0 0.0
    %1510 = vmatprep.subr.mxu0 0.0
    %1511 = vmatpush1.msra.mxu0 0.0
    %1512 = vmatprep.subr.mxu0 0.0
    %1513 = vmatpush1.msra.mxu0 0.0
    %1514 = vmatprep.subr.mxu0 0.0
    %1515 = vmatpush1.msra.mxu0 0.0
    %1516 = vmatprep.subr.mxu0 0.0
    %1517 = vmatpush1.msra.mxu0 0.0
    %1518 = vmatprep.subr.mxu0 0.0
    %1519 = vmatpush1.msra.mxu0 0.0
    %1520 = vmatprep.subr.mxu0 0.0
    %1521 = vmatpush1.msra.mxu0 0.0
    %1522 = vmatprep.subr.mxu0 0.0
    %1523 = vmatpush1.msra.mxu0 0.0
    %1524 = vmatprep.subr.mxu0 0.0
    %1525 = vmatpush1.msra.mxu0 0.0
    %1526 = vmatprep.subr.mxu0 0.0
    %1527 = vmatpush1.msra.mxu0 0.0
    %1528 = vmatprep.subr.mxu0 0.0
    %1529 = vmatpush1.msra.mxu0 0.0
    %1530 = vmatprep.mubr.f32.mxu0 0.0
    %1531 = vmatmul.mubr.f32.gmra.mrb[0].mxu0 %v1456
    %v1532 = vpop.f32.mrb[0].mxu0
    %v1533 = vadd.f32 0.0, %v1532
    %v1534 = vpop.f32.mrb[0].mxu0
    %v1535 = vadd.f32 0.0, %v1534
    %1536 = vdwg.mxu0
    %1537 = vmatprep.subr.mxu0 %v504
    %1538 = vmatpush1.msra.mxu0 %v503
    %1539 = vmatprep.subr.mxu0 %v508
    %1540 = vmatpush1.msra.mxu0 %v507
    %1541 = vmatprep.subr.mxu0 %v512
    %1542 = vmatpush1.msra.mxu0 %v511
    %1543 = vmatprep.subr.mxu0 %v516
    %1544 = vmatpush1.msra.mxu0 %v515
    %1545 = vmatprep.subr.mxu0 %v520
    %1546 = vmatpush1.msra.mxu0 %v519
    %1547 = vmatprep.subr.mxu0 %v524
    %1548 = vmatpush1.msra.mxu0 %v523
    %1549 = vmatprep.subr.mxu0 %v528
    %1550 = vmatpush1.msra.mxu0 %v527
    %1551 = vmatprep.subr.mxu0 %v532
    %1552 = vmatpush1.msra.mxu0 %v531
    %1553 = vmatprep.subr.mxu0 %v536
    %1554 = vmatpush1.msra.mxu0 %v535
    %1555 = vmatprep.subr.mxu0 %v540
    %1556 = vmatpush1.msra.mxu0 %v539
    %1557 = vmatprep.subr.mxu0 %v544
    %1558 = vmatpush1.msra.mxu0 %v543
    %1559 = vmatprep.subr.mxu0 %v548
    %1560 = vmatpush1.msra.mxu0 %v547
    %1561 = vmatprep.subr.mxu0 %v552
    %1562 = vmatpush1.msra.mxu0 %v551
    %1563 = vmatprep.subr.mxu0 %v556
    %1564 = vmatpush1.msra.mxu0 %v555
    %1565 = vmatprep.subr.mxu0 %v560
    %1566 = vmatpush1.msra.mxu0 %v559
    %1567 = vmatprep.subr.mxu0 %v564
    %1568 = vmatpush1.msra.mxu0 %v563
    %1569 = vmatprep.subr.mxu0 0.0
    %1570 = vmatpush1.msra.mxu0 0.0
    %1571 = vmatprep.subr.mxu0 0.0
    %1572 = vmatpush1.msra.mxu0 0.0
    %1573 = vmatprep.subr.mxu0 0.0
    %1574 = vmatpush1.msra.mxu0 0.0
    %1575 = vmatprep.subr.mxu0 0.0
    %1576 = vmatpush1.msra.mxu0 0.0
    %1577 = vmatprep.subr.mxu0 0.0
    %1578 = vmatpush1.msra.mxu0 0.0
    %1579 = vmatprep.subr.mxu0 0.0
    %1580 = vmatpush1.msra.mxu0 0.0
    %1581 = vmatprep.subr.mxu0 0.0
    %1582 = vmatpush1.msra.mxu0 0.0
    %1583 = vmatprep.subr.mxu0 0.0
    %1584 = vmatpush1.msra.mxu0 0.0
    %1585 = vmatprep.subr.mxu0 0.0
    %1586 = vmatpush1.msra.mxu0 0.0
    %1587 = vmatprep.subr.mxu0 0.0
    %1588 = vmatpush1.msra.mxu0 0.0
    %1589 = vmatprep.subr.mxu0 0.0
    %1590 = vmatpush1.msra.mxu0 0.0
    %1591 = vmatprep.subr.mxu0 0.0
    %1592 = vmatpush1.msra.mxu0 0.0
    %1593 = vmatprep.subr.mxu0 0.0
    %1594 = vmatpush1.msra.mxu0 0.0
    %1595 = vmatprep.subr.mxu0 0.0
    %1596 = vmatpush1.msra.mxu0 0.0
    %1597 = vmatprep.subr.mxu0 0.0
    %1598 = vmatpush1.msra.mxu0 0.0
    %1599 = vmatprep.subr.mxu0 0.0
    %1600 = vmatpush1.msra.mxu0 0.0
    %1601 = vmatprep.mubr.f32.mxu0 0.0
    %1602 = vmatmul.mubr.f32.gmra.mrb[0].mxu0 %v1456
    %v1603 = vpop.f32.mrb[0].mxu0
    %v1604 = vadd.f32 0.0, %v1603
    %v1605 = vpop.f32.mrb[0].mxu0
    %v1606 = vadd.f32 0.0, %v1605
    %1607 = vdwg.mxu0
    %v1608 = vadd.f32 %v1462, %v1533
    %v1609 = vadd.f32 %v1463, %v1535
    %v1610 = vadd.f32 %v1464, %v1604
    %v1611 = vadd.f32 %v1465, %v1606
    %v1612 = vxor.u32 %v1608, 2147483648
    %v1613 = vxor.u32 %v1609, 2147483648
    %v1614 = vxor.u32 %v1610, 2147483648
    %v1615 = vmul.f32 %v1612, 1.442695
    %v1616 = vpow.pop %v1615
    %v1617 = vmul.f32 %v1613, 1.442695
    %v1618 = vpow.pop %v1617
    %v1619 = vmul.f32 %v1614, 1.442695
    %v1620 = vpow.pop %v1619
    %v1621 = vadd.f32 %v1616, 1.0
    %v1622 = vadd.f32 %v1618, 1.0
    %v1623 = vadd.f32 %v1620, 1.0
    %v1624 = vrcp.pop %v1621
    %v1625 = vmul.f32 1.0, %v1624
    %v1626 = vrcp.pop %v1622
    %v1627 = vmul.f32 1.0, %v1626
    %v1628 = vrcp.pop %v1623
    %v1629 = vmul.f32 1.0, %v1628
    %v1630 = vtanh.pop %v1611
    %v1631 = vmul.f32 %v1627, %v1454
    %v1632 = vmul.f32 %v1625, %v1630
    %v1633 = vadd.f32 %v1631, %v1632
    %v1634 = vtanh.pop %v1633
    %v1635 = vmul.f32 %v1629, %v1634
    %s1636 = scalar_lea.vmem [#allocation3], 40
    %1637 = vst [vmem:[%s1636] sm:$0xff] %v1635
    %s1638 = smul.u32 6, 4
    %s1639 = smul.addr %s1638, 8
    %s1640 = scalar_lea.vmem [#allocation2], %s1639
    %v1641 = vld [vmem:[%s1640] sm:$0xff]
    %v1642 = vld [vmem:[%s1640 + $0x8] sm:$0xff]
    %v1643 = vld [vmem:[%s1640 + $0x10] sm:$0xff]
    %v1644 = vld [vmem:[%s1640 + $0x18] sm:$0xff]
    %1645 = vmatprep.subr.mxu0 %v502
    %1646 = vmatpush1.msra.mxu0 %v501
    %1647 = vmatprep.subr.mxu0 %v506
    %1648 = vmatpush1.msra.mxu0 %v505
    %1649 = vmatprep.subr.mxu0 %v510
    %1650 = vmatpush1.msra.mxu0 %v509
    %1651 = vmatprep.subr.mxu0 %v514
    %1652 = vmatpush1.msra.mxu0 %v513
    %1653 = vmatprep.subr.mxu0 %v518
    %1654 = vmatpush1.msra.mxu0 %v517
    %1655 = vmatprep.subr.mxu0 %v522
    %1656 = vmatpush1.msra.mxu0 %v521
    %1657 = vmatprep.subr.mxu0 %v526
    %1658 = vmatpush1.msra.mxu0 %v525
    %1659 = vmatprep.subr.mxu0 %v530
    %1660 = vmatpush1.msra.mxu0 %v529
    %1661 = vmatprep.subr.mxu0 %v534
    %1662 = vmatpush1.msra.mxu0 %v533
    %1663 = vmatprep.subr.mxu0 %v538
    %1664 = vmatpush1.msra.mxu0 %v537
    %1665 = vmatprep.subr.mxu0 %v542
    %1666 = vmatpush1.msra.mxu0 %v541
    %1667 = vmatprep.subr.mxu0 %v546
    %1668 = vmatpush1.msra.mxu0 %v545
    %1669 = vmatprep.subr.mxu0 %v550
    %1670 = vmatpush1.msra.mxu0 %v549
    %1671 = vmatprep.subr.mxu0 %v554
    %1672 = vmatpush1.msra.mxu0 %v553
    %1673 = vmatprep.subr.mxu0 %v558
    %1674 = vmatpush1.msra.mxu0 %v557
    %1675 = vmatprep.subr.mxu0 %v562
    %1676 = vmatpush1.msra.mxu0 %v561
    %1677 = vmatprep.subr.mxu0 0.0
    %1678 = vmatpush1.msra.mxu0 0.0
    %1679 = vmatprep.subr.mxu0 0.0
    %1680 = vmatpush1.msra.mxu0 0.0
    %1681 = vmatprep.subr.mxu0 0.0
    %1682 = vmatpush1.msra.mxu0 0.0
    %1683 = vmatprep.subr.mxu0 0.0
    %1684 = vmatpush1.msra.mxu0 0.0
    %1685 = vmatprep.subr.mxu0 0.0
    %1686 = vmatpush1.msra.mxu0 0.0
    %1687 = vmatprep.subr.mxu0 0.0
    %1688 = vmatpush1.msra.mxu0 0.0
    %1689 = vmatprep.subr.mxu0 0.0
    %1690 = vmatpush1.msra.mxu0 0.0
    %1691 = vmatprep.subr.mxu0 0.0
    %1692 = vmatpush1.msra.mxu0 0.0
    %1693 = vmatprep.subr.mxu0 0.0
    %1694 = vmatpush1.msra.mxu0 0.0
    %1695 = vmatprep.subr.mxu0 0.0
    %1696 = vmatpush1.msra.mxu0 0.0
    %1697 = vmatprep.subr.mxu0 0.0
    %1698 = vmatpush1.msra.mxu0 0.0
    %1699 = vmatprep.subr.mxu0 0.0
    %1700 = vmatpush1.msra.mxu0 0.0
    %1701 = vmatprep.subr.mxu0 0.0
    %1702 = vmatpush1.msra.mxu0 0.0
    %1703 = vmatprep.subr.mxu0 0.0
    %1704 = vmatpush1.msra.mxu0 0.0
    %1705 = vmatprep.subr.mxu0 0.0
    %1706 = vmatpush1.msra.mxu0 0.0
    %1707 = vmatprep.subr.mxu0 0.0
    %1708 = vmatpush1.msra.mxu0 0.0
    %1709 = vmatprep.mubr.f32.mxu0 0.0
    %1710 = vmatmul.mubr.f32.gmra.mrb[0].mxu0 %v1635
    %v1711 = vpop.f32.mrb[0].mxu0
    %v1712 = vadd.f32 0.0, %v1711
    %v1713 = vpop.f32.mrb[0].mxu0
    %v1714 = vadd.f32 0.0, %v1713
    %1715 = vdwg.mxu0
    %1716 = vmatprep.subr.mxu0 %v504
    %1717 = vmatpush1.msra.mxu0 %v503
    %1718 = vmatprep.subr.mxu0 %v508
    %1719 = vmatpush1.msra.mxu0 %v507
    %1720 = vmatprep.subr.mxu0 %v512
    %1721 = vmatpush1.msra.mxu0 %v511
    %1722 = vmatprep.subr.mxu0 %v516
    %1723 = vmatpush1.msra.mxu0 %v515
    %1724 = vmatprep.subr.mxu0 %v520
    %1725 = vmatpush1.msra.mxu0 %v519
    %1726 = vmatprep.subr.mxu0 %v524
    %1727 = vmatpush1.msra.mxu0 %v523
    %1728 = vmatprep.subr.mxu0 %v528
    %1729 = vmatpush1.msra.mxu0 %v527
    %1730 = vmatprep.subr.mxu0 %v532
    %1731 = vmatpush1.msra.mxu0 %v531
    %1732 = vmatprep.subr.mxu0 %v536
    %1733 = vmatpush1.msra.mxu0 %v535
    %1734 = vmatprep.subr.mxu0 %v540
    %1735 = vmatpush1.msra.mxu0 %v539
    %1736 = vmatprep.subr.mxu0 %v544
    %1737 = vmatpush1.msra.mxu0 %v543
    %1738 = vmatprep.subr.mxu0 %v548
    %1739 = vmatpush1.msra.mxu0 %v547
    %1740 = vmatprep.subr.mxu0 %v552
    %1741 = vmatpush1.msra.mxu0 %v551
    %1742 = vmatprep.subr.mxu0 %v556
    %1743 = vmatpush1.msra.mxu0 %v555
    %1744 = vmatprep.subr.mxu0 %v560
    %1745 = vmatpush1.msra.mxu0 %v559
    %1746 = vmatprep.subr.mxu0 %v564
    %1747 = vmatpush1.msra.mxu0 %v563
    %1748 = vmatprep.subr.mxu0 0.0
    %1749 = vmatpush1.msra.mxu0 0.0
    %1750 = vmatprep.subr.mxu0 0.0
    %1751 = vmatpush1.msra.mxu0 0.0
    %1752 = vmatprep.subr.mxu0 0.0
    %1753 = vmatpush1.msra.mxu0 0.0
    %1754 = vmatprep.subr.mxu0 0.0
    %1755 = vmatpush1.msra.mxu0 0.0
    %1756 = vmatprep.subr.mxu0 0.0
    %1757 = vmatpush1.msra.mxu0 0.0
    %1758 = vmatprep.subr.mxu0 0.0
    %1759 = vmatpush1.msra.mxu0 0.0
    %1760 = vmatprep.subr.mxu0 0.0
    %1761 = vmatpush1.msra.mxu0 0.0
    %1762 = vmatprep.subr.mxu0 0.0
    %1763 = vmatpush1.msra.mxu0 0.0
    %1764 = vmatprep.subr.mxu0 0.0
    %1765 = vmatpush1.msra.mxu0 0.0
    %1766 = vmatprep.subr.mxu0 0.0
    %1767 = vmatpush1.msra.mxu0 0.0
    %1768 = vmatprep.subr.mxu0 0.0
    %1769 = vmatpush1.msra.mxu0 0.0
    %1770 = vmatprep.subr.mxu0 0.0
    %1771 = vmatpush1.msra.mxu0 0.0
    %1772 = vmatprep.subr.mxu0 0.0
    %1773 = vmatpush1.msra.mxu0 0.0
    %1774 = vmatprep.subr.mxu0 0.0
    %1775 = vmatpush1.msra.mxu0 0.0
    %1776 = vmatprep.subr.mxu0 0.0
    %1777 = vmatpush1.msra.mxu0 0.0
    %1778 = vmatprep.subr.mxu0 0.0
    %1779 = vmatpush1.msra.mxu0 0.0
    %1780 = vmatprep.mubr.f32.mxu0 0.0
    %1781 = vmatmul.mubr.f32.gmra.mrb[0].mxu0 %v1635
    %v1782 = vpop.f32.mrb[0].mxu0
    %v1783 = vadd.f32 0.0, %v1782
    %v1784 = vpop.f32.mrb[0].mxu0
    %v1785 = vadd.f32 0.0, %v1784
    %1786 = vdwg.mxu0
    %v1787 = vadd.f32 %v1641, %v1712
    %v1788 = vadd.f32 %v1642, %v1714
    %v1789 = vadd.f32 %v1643, %v1783
    %v1790 = vadd.f32 %v1644, %v1785
    %v1791 = vxor.u32 %v1787, 2147483648
    %v1792 = vxor.u32 %v1788, 2147483648
    %v1793 = vxor.u32 %v1789, 2147483648
    %v1794 = vmul.f32 %v1791, 1.442695
    %v1795 = vpow.pop %v1794
    %v1796 = vmul.f32 %v1792, 1.442695
    %v1797 = vpow.pop %v1796
    %v1798 = vmul.f32 %v1793, 1.442695
    %v1799 = vpow.pop %v1798
    %v1800 = vadd.f32 %v1795, 1.0
    %v1801 = vadd.f32 %v1797, 1.0
    %v1802 = vadd.f32 %v1799, 1.0
    %v1803 = vrcp.pop %v1800
    %v1804 = vmul.f32 1.0, %v1803
    %v1805 = vrcp.pop %v1801
    %v1806 = vmul.f32 1.0, %v1805
    %v1807 = vrcp.pop %v1802
    %v1808 = vmul.f32 1.0, %v1807
    %v1809 = vtanh.pop %v1790
    %v1810 = vmul.f32 %v1806, %v1633
    %v1811 = vmul.f32 %v1804, %v1809
    %v1812 = vadd.f32 %v1810, %v1811
    %v1813 = vtanh.pop %v1812
    %v1814 = vmul.f32 %v1808, %v1813
    %s1815 = scalar_lea.vmem [#allocation3], 48
    %1816 = vst [vmem:[%s1815] sm:$0xff] %v1814
    %s1817 = smul.u32 7, 4
    %s1818 = smul.addr %s1817, 8
    %s1819 = scalar_lea.vmem [#allocation2], %s1818
    %v1820 = vld [vmem:[%s1819] sm:$0xff]
    %v1821 = vld [vmem:[%s1819 + $0x8] sm:$0xff]
    %v1822 = vld [vmem:[%s1819 + $0x10] sm:$0xff]
    %v1823 = vld [vmem:[%s1819 + $0x18] sm:$0xff]
    %1824 = vmatprep.subr.mxu0 %v502
    %1825 = vmatpush1.msra.mxu0 %v501
    %1826 = vmatprep.subr.mxu0 %v506
    %1827 = vmatpush1.msra.mxu0 %v505
    %1828 = vmatprep.subr.mxu0 %v510
    %1829 = vmatpush1.msra.mxu0 %v509
    %1830 = vmatprep.subr.mxu0 %v514
    %1831 = vmatpush1.msra.mxu0 %v513
    %1832 = vmatprep.subr.mxu0 %v518
    %1833 = vmatpush1.msra.mxu0 %v517
    %1834 = vmatprep.subr.mxu0 %v522
    %1835 = vmatpush1.msra.mxu0 %v521
    %1836 = vmatprep.subr.mxu0 %v526
    %1837 = vmatpush1.msra.mxu0 %v525
    %1838 = vmatprep.subr.mxu0 %v530
    %1839 = vmatpush1.msra.mxu0 %v529
    %1840 = vmatprep.subr.mxu0 %v534
    %1841 = vmatpush1.msra.mxu0 %v533
    %1842 = vmatprep.subr.mxu0 %v538
    %1843 = vmatpush1.msra.mxu0 %v537
    %1844 = vmatprep.subr.mxu0 %v542
    %1845 = vmatpush1.msra.mxu0 %v541
    %1846 = vmatprep.subr.mxu0 %v546
    %1847 = vmatpush1.msra.mxu0 %v545
    %1848 = vmatprep.subr.mxu0 %v550
    %1849 = vmatpush1.msra.mxu0 %v549
    %1850 = vmatprep.subr.mxu0 %v554
    %1851 = vmatpush1.msra.mxu0 %v553
    %1852 = vmatprep.subr.mxu0 %v558
    %1853 = vmatpush1.msra.mxu0 %v557
    %1854 = vmatprep.subr.mxu0 %v562
    %1855 = vmatpush1.msra.mxu0 %v561
    %1856 = vmatprep.subr.mxu0 0.0
    %1857 = vmatpush1.msra.mxu0 0.0
    %1858 = vmatprep.subr.mxu0 0.0
    %1859 = vmatpush1.msra.mxu0 0.0
    %1860 = vmatprep.subr.mxu0 0.0
    %1861 = vmatpush1.msra.mxu0 0.0
    %1862 = vmatprep.subr.mxu0 0.0
    %1863 = vmatpush1.msra.mxu0 0.0
    %1864 = vmatprep.subr.mxu0 0.0
    %1865 = vmatpush1.msra.mxu0 0.0
    %1866 = vmatprep.subr.mxu0 0.0
    %1867 = vmatpush1.msra.mxu0 0.0
    %1868 = vmatprep.subr.mxu0 0.0
    %1869 = vmatpush1.msra.mxu0 0.0
    %1870 = vmatprep.subr.mxu0 0.0
    %1871 = vmatpush1.msra.mxu0 0.0
    %1872 = vmatprep.subr.mxu0 0.0
    %1873 = vmatpush1.msra.mxu0 0.0
    %1874 = vmatprep.subr.mxu0 0.0
    %1875 = vmatpush1.msra.mxu0 0.0
    %1876 = vmatprep.subr.mxu0 0.0
    %1877 = vmatpush1.msra.mxu0 0.0
    %1878 = vmatprep.subr.mxu0 0.0
    %1879 = vmatpush1.msra.mxu0 0.0
    %1880 = vmatprep.subr.mxu0 0.0
    %1881 = vmatpush1.msra.mxu0 0.0
    %1882 = vmatprep.subr.mxu0 0.0
    %1883 = vmatpush1.msra.mxu0 0.0
    %1884 = vmatprep.subr.mxu0 0.0
    %1885 = vmatpush1.msra.mxu0 0.0
    %1886 = vmatprep.subr.mxu0 0.0
    %1887 = vmatpush1.msra.mxu0 0.0
    %1888 = vmatprep.mubr.f32.mxu0 0.0
    %1889 = vmatmul.mubr.f32.gmra.mrb[0].mxu0 %v1814
    %v1890 = vpop.f32.mrb[0].mxu0
    %v1891 = vadd.f32 0.0, %v1890
    %v1892 = vpop.f32.mrb[0].mxu0
    %v1893 = vadd.f32 0.0, %v1892
    %1894 = vdwg.mxu0
    %1895 = vmatprep.subr.mxu0 %v504
    %1896 = vmatpush1.msra.mxu0 %v503
    %1897 = vmatprep.subr.mxu0 %v508
    %1898 = vmatpush1.msra.mxu0 %v507
    %1899 = vmatprep.subr.mxu0 %v512
    %1900 = vmatpush1.msra.mxu0 %v511
    %1901 = vmatprep.subr.mxu0 %v516
    %1902 = vmatpush1.msra.mxu0 %v515
    %1903 = vmatprep.subr.mxu0 %v520
    %1904 = vmatpush1.msra.mxu0 %v519
    %1905 = vmatprep.subr.mxu0 %v524
    %1906 = vmatpush1.msra.mxu0 %v523
    %1907 = vmatprep.subr.mxu0 %v528
    %1908 = vmatpush1.msra.mxu0 %v527
    %1909 = vmatprep.subr.mxu0 %v532
    %1910 = vmatpush1.msra.mxu0 %v531
    %1911 = vmatprep.subr.mxu0 %v536
    %1912 = vmatpush1.msra.mxu0 %v535
    %1913 = vmatprep.subr.mxu0 %v540
    %1914 = vmatpush1.msra.mxu0 %v539
    %1915 = vmatprep.subr.mxu0 %v544
    %1916 = vmatpush1.msra.mxu0 %v543
    %1917 = vmatprep.subr.mxu0 %v548
    %1918 = vmatpush1.msra.mxu0 %v547
    %1919 = vmatprep.subr.mxu0 %v552
    %1920 = vmatpush1.msra.mxu0 %v551
    %1921 = vmatprep.subr.mxu0 %v556
    %1922 = vmatpush1.msra.mxu0 %v555
    %1923 = vmatprep.subr.mxu0 %v560
    %1924 = vmatpush1.msra.mxu0 %v559
    %1925 = vmatprep.subr.mxu0 %v564
    %1926 = vmatpush1.msra.mxu0 %v563
    %1927 = vmatprep.subr.mxu0 0.0
    %1928 = vmatpush1.msra.mxu0 0.0
    %1929 = vmatprep.subr.mxu0 0.0
    %1930 = vmatpush1.msra.mxu0 0.0
    %1931 = vmatprep.subr.mxu0 0.0
    %1932 = vmatpush1.msra.mxu0 0.0
    %1933 = vmatprep.subr.mxu0 0.0
    %1934 = vmatpush1.msra.mxu0 0.0
    %1935 = vmatprep.subr.mxu0 0.0
    %1936 = vmatpush1.msra.mxu0 0.0
    %1937 = vmatprep.subr.mxu0 0.0
    %1938 = vmatpush1.msra.mxu0 0.0
    %1939 = vmatprep.subr.mxu0 0.0
    %1940 = vmatpush1.msra.mxu0 0.0
    %1941 = vmatprep.subr.mxu0 0.0
    %1942 = vmatpush1.msra.mxu0 0.0
    %1943 = vmatprep.subr.mxu0 0.0
    %1944 = vmatpush1.msra.mxu0 0.0
    %1945 = vmatprep.subr.mxu0 0.0
    %1946 = vmatpush1.msra.mxu0 0.0
    %1947 = vmatprep.subr.mxu0 0.0
    %1948 = vmatpush1.msra.mxu0 0.0
    %1949 = vmatprep.subr.mxu0 0.0
    %1950 = vmatpush1.msra.mxu0 0.0
    %1951 = vmatprep.subr.mxu0 0.0
    %1952 = vmatpush1.msra.mxu0 0.0
    %1953 = vmatprep.subr.mxu0 0.0
    %1954 = vmatpush1.msra.mxu0 0.0
    %1955 = vmatprep.subr.mxu0 0.0
    %1956 = vmatpush1.msra.mxu0 0.0
    %1957 = vmatprep.subr.mxu0 0.0
    %1958 = vmatpush1.msra.mxu0 0.0
    %1959 = vmatprep.mubr.f32.mxu0 0.0
    %1960 = vmatmul.mubr.f32.gmra.mrb[0].mxu0 %v1814
    %v1961 = vpop.f32.mrb[0].mxu0
    %v1962 = vadd.f32 0.0, %v1961
    %v1963 = vpop.f32.mrb[0].mxu0
    %v1964 = vadd.f32 0.0, %v1963
    %1965 = vdwg.mxu0
    %v1966 = vadd.f32 %v1820, %v1891
    %v1967 = vadd.f32 %v1821, %v1893
    %v1968 = vadd.f32 %v1822, %v1962
    %v1969 = vadd.f32 %v1823, %v1964
    %v1970 = vxor.u32 %v1966, 2147483648
    %v1971 = vxor.u32 %v1967, 2147483648
    %v1972 = vxor.u32 %v1968, 2147483648
    %v1973 = vmul.f32 %v1970, 1.442695
    %v1974 = vpow.pop %v1973
    %v1975 = vmul.f32 %v1971, 1.442695
    %v1976 = vpow.pop %v1975
    %v1977 = vmul.f32 %v1972, 1.442695
    %v1978 = vpow.pop %v1977
    %v1979 = vadd.f32 %v1974, 1.0
    %v1980 = vadd.f32 %v1976, 1.0
    %v1981 = vadd.f32 %v1978, 1.0
    %v1982 = vrcp.pop %v1979
    %v1983 = vmul.f32 1.0, %v1982
    %v1984 = vrcp.pop %v1980
    %v1985 = vmul.f32 1.0, %v1984
    %v1986 = vrcp.pop %v1981
    %v1987 = vmul.f32 1.0, %v1986
    %v1988 = vtanh.pop %v1969
    %v1989 = vmul.f32 %v1985, %v1812
    %v1990 = vmul.f32 %v1983, %v1988
    %v1991 = vadd.f32 %v1989, %v1990
    %v1992 = vtanh.pop %v1991
    %v1993 = vmul.f32 %v1987, %v1992
    %s1994 = scalar_lea.vmem [#allocation3], 56
    %1995 = vst [vmem:[%s1994] sm:$0xff] %v1993
    %v1996 = vld [vmem:[#allocation3] sm:$0xff]
    %v1997 = vld [vmem:[#allocation3 + $0x8] sm:$0xff]
    %v1998 = vld [vmem:[#allocation3 + $0x10] sm:$0xff]
    %v1999 = vld [vmem:[#allocation3 + $0x18] sm:$0xff]
    %v2000 = vld [vmem:[#allocation3 + $0x20] sm:$0xff]
    %v2001 = vld [vmem:[#allocation3 + $0x28] sm:$0xff]
    %v2002 = vld [vmem:[#allocation3 + $0x30] sm:$0xff]
    %v2003 = vld [vmem:[#allocation3 + $0x38] sm:$0xff]
    %v2004 = vld [vmem:[#allocation12] sm:$0xff]
    %v2005 = vld [vmem:[#allocation12 + $0x8] sm:$0xff]
    %v2006 = vld [vmem:[#allocation12 + $0x10] sm:$0xff]
    %v2007 = vld [vmem:[#allocation12 + $0x18] sm:$0xff]
    %v2008 = vld [vmem:[#allocation12 + $0x20] sm:$0xff]
    %v2009 = vld [vmem:[#allocation12 + $0x28] sm:$0xff]
    %v2010 = vld [vmem:[#allocation12 + $0x30] sm:$0xff]
    %v2011 = vld [vmem:[#allocation12 + $0x38] sm:$0xff]
    %v2012 = vld [vmem:[#allocation12 + $0x40] sm:$0xff]
    %v2013 = vld [vmem:[#allocation12 + $0x48] sm:$0xff]
    %v2014 = vld [vmem:[#allocation12 + $0x50] sm:$0xff]
    %v2015 = vld [vmem:[#allocation12 + $0x58] sm:$0xff]
    %v2016 = vld [vmem:[#allocation12 + $0x60] sm:$0xff]
    %v2017 = vld [vmem:[#allocation12 + $0x68] sm:$0xff]
    %v2018 = vld [vmem:[#allocation12 + $0x70] sm:$0xff]
    %v2019 = vld [vmem:[#allocation12 + $0x78] sm:$0xff]
    %v2020 = vld [vmem:[#allocation12 + $0x80] sm:$0xff]
    %v2021 = vld [vmem:[#allocation12 + $0x88] sm:$0xff]
    %v2022 = vld [vmem:[#allocation12 + $0x90] sm:$0xff]
    %v2023 = vld [vmem:[#allocation12 + $0x98] sm:$0xff]
    %v2024 = vld [vmem:[#allocation12 + $0xa0] sm:$0xff]
    %v2025 = vld [vmem:[#allocation12 + $0xa8] sm:$0xff]
    %v2026 = vld [vmem:[#allocation12 + $0xb0] sm:$0xff]
    %v2027 = vld [vmem:[#allocation12 + $0xb8] sm:$0xff]
    %v2028 = vld [vmem:[#allocation12 + $0xc0] sm:$0xff]
    %v2029 = vld [vmem:[#allocation12 + $0xc8] sm:$0xff]
    %v2030 = vld [vmem:[#allocation12 + $0xd0] sm:$0xff]
    %v2031 = vld [vmem:[#allocation12 + $0xd8] sm:$0xff]
    %v2032 = vld [vmem:[#allocation12 + $0xe0] sm:$0xff]
    %v2033 = vld [vmem:[#allocation12 + $0xe8] sm:$0xff]
    %v2034 = vld [vmem:[#allocation12 + $0xf0] sm:$0xff]
    %v2035 = vld [vmem:[#allocation12 + $0xf8] sm:$0xff]
    %v2036 = vld [vmem:[#allocation12 + $0x100] sm:$0xff]
    %v2037 = vld [vmem:[#allocation12 + $0x108] sm:$0xff]
    %v2038 = vld [vmem:[#allocation12 + $0x110] sm:$0xff]
    %v2039 = vld [vmem:[#allocation12 + $0x118] sm:$0xff]
    %v2040 = vld [vmem:[#allocation12 + $0x120] sm:$0xff]
    %v2041 = vld [vmem:[#allocation12 + $0x128] sm:$0xff]
    %v2042 = vld [vmem:[#allocation12 + $0x130] sm:$0xff]
    %v2043 = vld [vmem:[#allocation12 + $0x138] sm:$0xff]
    %v2044 = vld [vmem:[#allocation12 + $0x140] sm:$0xff]
    %v2045 = vld [vmem:[#allocation12 + $0x148] sm:$0xff]
    %v2046 = vld [vmem:[#allocation12 + $0x150] sm:$0xff]
    %v2047 = vld [vmem:[#allocation12 + $0x158] sm:$0xff]
    %v2048 = vld [vmem:[#allocation12 + $0x160] sm:$0xff]
    %v2049 = vld [vmem:[#allocation12 + $0x168] sm:$0xff]
    %v2050 = vld [vmem:[#allocation12 + $0x170] sm:$0xff]
    %v2051 = vld [vmem:[#allocation12 + $0x178] sm:$0xff]
    %v2052 = vld [vmem:[#allocation12 + $0x180] sm:$0xff]
    %v2053 = vld [vmem:[#allocation12 + $0x188] sm:$0xff]
    %v2054 = vld [vmem:[#allocation12 + $0x190] sm:$0xff]
    %v2055 = vld [vmem:[#allocation12 + $0x198] sm:$0xff]
    %v2056 = vld [vmem:[#allocation12 + $0x1a0] sm:$0xff]
    %v2057 = vld [vmem:[#allocation12 + $0x1a8] sm:$0xff]
    %v2058 = vld [vmem:[#allocation12 + $0x1b0] sm:$0xff]
    %v2059 = vld [vmem:[#allocation12 + $0x1b8] sm:$0xff]
    %v2060 = vld [vmem:[#allocation12 + $0x1c0] sm:$0xff]
    %v2061 = vld [vmem:[#allocation12 + $0x1c8] sm:$0xff]
    %v2062 = vld [vmem:[#allocation12 + $0x1d0] sm:$0xff]
    %v2063 = vld [vmem:[#allocation12 + $0x1d8] sm:$0xff]
    %v2064 = vld [vmem:[#allocation12 + $0x1e0] sm:$0xff]
    %v2065 = vld [vmem:[#allocation12 + $0x1e8] sm:$0xff]
    %v2066 = vld [vmem:[#allocation12 + $0x1f0] sm:$0xff]
    %v2067 = vld [vmem:[#allocation12 + $0x1f8] sm:$0xff]
    %v2068 = vld [vmem:[#allocation15] sm:$0xf]
    %v2070 = vlaneseq
    %v2071 = vshrl.u32 %v2070, 7
    %v2072 = vsub.s32 0, %v2071
    %v2073 = vrot.slane %v2068, %v2072
    %v2074 = vlaneseq
    %v2075 = vshrl.u32 %v2074, 7
    %v2076 = vsub.s32 1, %v2075
    %v2077 = vrot.slane %v2068, %v2076
    %v2078 = vlaneseq
    %v2079 = vshrl.u32 %v2078, 7
    %v2080 = vsub.s32 2, %v2079
    %v2081 = vrot.slane %v2068, %v2080
    %v2082 = vlaneseq
    %v2083 = vshrl.u32 %v2082, 7
    %v2084 = vsub.s32 3, %v2083
    %v2085 = vrot.slane %v2068, %v2084
    %2090 = vmatprep.subr.mxu0 %v2005
    %2091 = vmatpush1.msra.mxu0 %v2004
    %2092 = vmatprep.subr.mxu0 %v2009
    %2093 = vmatpush1.msra.mxu0 %v2008
    %2094 = vmatprep.subr.mxu0 %v2013
    %2095 = vmatpush1.msra.mxu0 %v2012
    %2096 = vmatprep.subr.mxu0 %v2017
    %2097 = vmatpush1.msra.mxu0 %v2016
    %2098 = vmatprep.subr.mxu0 %v2021
    %2099 = vmatpush1.msra.mxu0 %v2020
    %2100 = vmatprep.subr.mxu0 %v2025
    %2101 = vmatpush1.msra.mxu0 %v2024
    %2102 = vmatprep.subr.mxu0 %v2029
    %2103 = vmatpush1.msra.mxu0 %v2028
    %2104 = vmatprep.subr.mxu0 %v2033
    %2105 = vmatpush1.msra.mxu0 %v2032
    %2106 = vmatprep.subr.mxu0 %v2037
    %2107 = vmatpush1.msra.mxu0 %v2036
    %2108 = vmatprep.subr.mxu0 %v2041
    %2109 = vmatpush1.msra.mxu0 %v2040
    %2110 = vmatprep.subr.mxu0 %v2045
    %2111 = vmatpush1.msra.mxu0 %v2044
    %2112 = vmatprep.subr.mxu0 %v2049
    %2113 = vmatpush1.msra.mxu0 %v2048
    %2114 = vmatprep.subr.mxu0 %v2053
    %2115 = vmatpush1.msra.mxu0 %v2052
    %2116 = vmatprep.subr.mxu0 %v2057
    %2117 = vmatpush1.msra.mxu0 %v2056
    %2118 = vmatprep.subr.mxu0 %v2061
    %2119 = vmatpush1.msra.mxu0 %v2060
    %2120 = vmatprep.subr.mxu0 %v2065
    %2121 = vmatpush1.msra.mxu0 %v2064
    %2122 = vmatprep.subr.mxu0 0.0
    %2123 = vmatpush1.msra.mxu0 0.0
    %2124 = vmatprep.subr.mxu0 0.0
    %2125 = vmatpush1.msra.mxu0 0.0
    %2126 = vmatprep.subr.mxu0 0.0
    %2127 = vmatpush1.msra.mxu0 0.0
    %2128 = vmatprep.subr.mxu0 0.0
    %2129 = vmatpush1.msra.mxu0 0.0
    %2130 = vmatprep.subr.mxu0 0.0
    %2131 = vmatpush1.msra.mxu0 0.0
    %2132 = vmatprep.subr.mxu0 0.0
    %2133 = vmatpush1.msra.mxu0 0.0
    %2134 = vmatprep.subr.mxu0 0.0
    %2135 = vmatpush1.msra.mxu0 0.0
    %2136 = vmatprep.subr.mxu0 0.0
    %2137 = vmatpush1.msra.mxu0 0.0
    %2138 = vmatprep.subr.mxu0 0.0
    %2139 = vmatpush1.msra.mxu0 0.0
    %2140 = vmatprep.subr.mxu0 0.0
    %2141 = vmatpush1.msra.mxu0 0.0
    %2142 = vmatprep.subr.mxu0 0.0
    %2143 = vmatpush1.msra.mxu0 0.0
    %2144 = vmatprep.subr.mxu0 0.0
    %2145 = vmatpush1.msra.mxu0 0.0
    %2146 = vmatprep.subr.mxu0 0.0
    %2147 = vmatpush1.msra.mxu0 0.0
    %2148 = vmatprep.subr.mxu0 0.0
    %2149 = vmatpush1.msra.mxu0 0.0
    %2150 = vmatprep.subr.mxu0 0.0
    %2151 = vmatpush1.msra.mxu0 0.0
    %2152 = vmatprep.subr.mxu0 0.0
    %2153 = vmatpush1.msra.mxu0 0.0
    %2154 = vmatprep.mubr.f32.mxu0 0.0
    %2155 = vmatmul.mubr.f32.gmra.mrb[0].mxu0 %v1996
    %v2156 = vpop.f32.mrb[0].mxu0
    %v2157 = vadd.f32 %v2073, %v2156
    %v2158 = vpop.f32.mrb[0].mxu0
    %v2159 = vadd.f32 %v2077, %v2158
    %2160 = vmatprep.mubr.f32.mxu0 0.0
    %2161 = vmatmul.mubr.f32.gmra.mrb[0].mxu0 %v1997
    %v2162 = vpop.f32.mrb[0].mxu0
    %v2163 = vadd.f32 %v2073, %v2162
    %v2164 = vpop.f32.mrb[0].mxu0
    %v2165 = vadd.f32 %v2077, %v2164
    %2166 = vmatprep.mubr.f32.mxu0 0.0
    %2167 = vmatmul.mubr.f32.gmra.mrb[0].mxu0 %v1998
    %v2168 = vpop.f32.mrb[0].mxu0
    %v2169 = vadd.f32 %v2073, %v2168
    %v2170 = vpop.f32.mrb[0].mxu0
    %v2171 = vadd.f32 %v2077, %v2170
    %2172 = vmatprep.mubr.f32.mxu0 0.0
    %2173 = vmatmul.mubr.f32.gmra.mrb[0].mxu0 %v1999
    %v2174 = vpop.f32.mrb[0].mxu0
    %v2175 = vadd.f32 %v2073, %v2174
    %v2176 = vpop.f32.mrb[0].mxu0
    %v2177 = vadd.f32 %v2077, %v2176
    %2178 = vmatprep.mubr.f32.mxu0 0.0
    %2179 = vmatmul.mubr.f32.gmra.mrb[0].mxu0 %v2000
    %v2180 = vpop.f32.mrb[0].mxu0
    %v2181 = vadd.f32 %v2073, %v2180
    %v2182 = vpop.f32.mrb[0].mxu0
    %v2183 = vadd.f32 %v2077, %v2182
    %2184 = vmatprep.mubr.f32.mxu0 0.0
    %2185 = vmatmul.mubr.f32.gmra.mrb[0].mxu0 %v2001
    %v2186 = vpop.f32.mrb[0].mxu0
    %v2187 = vadd.f32 %v2073, %v2186
    %v2188 = vpop.f32.mrb[0].mxu0
    %v2189 = vadd.f32 %v2077, %v2188
    %2190 = vmatprep.mubr.f32.mxu0 0.0
    %2191 = vmatmul.mubr.f32.gmra.mrb[0].mxu0 %v2002
    %v2192 = vpop.f32.mrb[0].mxu0
    %v2193 = vadd.f32 %v2073, %v2192
    %v2194 = vpop.f32.mrb[0].mxu0
    %v2195 = vadd.f32 %v2077, %v2194
    %2196 = vmatprep.mubr.f32.mxu0 0.0
    %2197 = vmatmul.mubr.f32.gmra.mrb[0].mxu0 %v2003
    %v2198 = vpop.f32.mrb[0].mxu0
    %v2199 = vadd.f32 %v2073, %v2198
    %v2200 = vpop.f32.mrb[0].mxu0
    %v2201 = vadd.f32 %v2077, %v2200
    %2202 = vdwg.mxu0
    %2203 = vmatprep.subr.mxu0 %v2007
    %2204 = vmatpush1.msra.mxu0 %v2006
    %2205 = vmatprep.subr.mxu0 %v2011
    %2206 = vmatpush1.msra.mxu0 %v2010
    %2207 = vmatprep.subr.mxu0 %v2015
    %2208 = vmatpush1.msra.mxu0 %v2014
    %2209 = vmatprep.subr.mxu0 %v2019
    %2210 = vmatpush1.msra.mxu0 %v2018
    %2211 = vmatprep.subr.mxu0 %v2023
    %2212 = vmatpush1.msra.mxu0 %v2022
    %2213 = vmatprep.subr.mxu0 %v2027
    %2214 = vmatpush1.msra.mxu0 %v2026
    %2215 = vmatprep.subr.mxu0 %v2031
    %2216 = vmatpush1.msra.mxu0 %v2030
    %2217 = vmatprep.subr.mxu0 %v2035
    %2218 = vmatpush1.msra.mxu0 %v2034
    %2219 = vmatprep.subr.mxu0 %v2039
    %2220 = vmatpush1.msra.mxu0 %v2038
    %2221 = vmatprep.subr.mxu0 %v2043
    %2222 = vmatpush1.msra.mxu0 %v2042
    %2223 = vmatprep.subr.mxu0 %v2047
    %2224 = vmatpush1.msra.mxu0 %v2046
    %2225 = vmatprep.subr.mxu0 %v2051
    %2226 = vmatpush1.msra.mxu0 %v2050
    %2227 = vmatprep.subr.mxu0 %v2055
    %2228 = vmatpush1.msra.mxu0 %v2054
    %2229 = vmatprep.subr.mxu0 %v2059
    %2230 = vmatpush1.msra.mxu0 %v2058
    %2231 = vmatprep.subr.mxu0 %v2063
    %2232 = vmatpush1.msra.mxu0 %v2062
    %2233 = vmatprep.subr.mxu0 %v2067
    %2234 = vmatpush1.msra.mxu0 %v2066
    %2235 = vmatprep.subr.mxu0 0.0
    %2236 = vmatpush1.msra.mxu0 0.0
    %2237 = vmatprep.subr.mxu0 0.0
    %2238 = vmatpush1.msra.mxu0 0.0
    %2239 = vmatprep.subr.mxu0 0.0
    %2240 = vmatpush1.msra.mxu0 0.0
    %2241 = vmatprep.subr.mxu0 0.0
    %2242 = vmatpush1.msra.mxu0 0.0
    %2243 = vmatprep.subr.mxu0 0.0
    %2244 = vmatpush1.msra.mxu0 0.0
    %2245 = vmatprep.subr.mxu0 0.0
    %2246 = vmatpush1.msra.mxu0 0.0
    %2247 = vmatprep.subr.mxu0 0.0
    %2248 = vmatpush1.msra.mxu0 0.0
    %2249 = vmatprep.subr.mxu0 0.0
    %2250 = vmatpush1.msra.mxu0 0.0
    %2251 = vmatprep.subr.mxu0 0.0
    %2252 = vmatpush1.msra.mxu0 0.0
    %2253 = vmatprep.subr.mxu0 0.0
    %2254 = vmatpush1.msra.mxu0 0.0
    %2255 = vmatprep.subr.mxu0 0.0
    %2256 = vmatpush1.msra.mxu0 0.0
    %2257 = vmatprep.subr.mxu0 0.0
    %2258 = vmatpush1.msra.mxu0 0.0
    %2259 = vmatprep.subr.mxu0 0.0
    %2260 = vmatpush1.msra.mxu0 0.0
    %2261 = vmatprep.subr.mxu0 0.0
    %2262 = vmatpush1.msra.mxu0 0.0
    %2263 = vmatprep.subr.mxu0 0.0
    %2264 = vmatpush1.msra.mxu0 0.0
    %2265 = vmatprep.subr.mxu0 0.0
    %2266 = vmatpush1.msra.mxu0 0.0
    %2267 = vmatprep.mubr.f32.mxu0 0.0
    %2268 = vmatmul.mubr.f32.gmra.mrb[0].mxu0 %v1996
    %v2269 = vpop.f32.mrb[0].mxu0
    %v2270 = vadd.f32 %v2081, %v2269
    %v2271 = vpop.f32.mrb[0].mxu0
    %v2272 = vadd.f32 %v2085, %v2271
    %2273 = vmatprep.mubr.f32.mxu0 0.0
    %2274 = vmatmul.mubr.f32.gmra.mrb[0].mxu0 %v1997
    %v2275 = vpop.f32.mrb[0].mxu0
    %v2276 = vadd.f32 %v2081, %v2275
    %v2277 = vpop.f32.mrb[0].mxu0
    %v2278 = vadd.f32 %v2085, %v2277
    %2279 = vmatprep.mubr.f32.mxu0 0.0
    %2280 = vmatmul.mubr.f32.gmra.mrb[0].mxu0 %v1998
    %v2281 = vpop.f32.mrb[0].mxu0
    %v2282 = vadd.f32 %v2081, %v2281
    %v2283 = vpop.f32.mrb[0].mxu0
    %v2284 = vadd.f32 %v2085, %v2283
    %2285 = vmatprep.mubr.f32.mxu0 0.0
    %2286 = vmatmul.mubr.f32.gmra.mrb[0].mxu0 %v1999
    %v2287 = vpop.f32.mrb[0].mxu0
    %v2288 = vadd.f32 %v2081, %v2287
    %v2289 = vpop.f32.mrb[0].mxu0
    %v2290 = vadd.f32 %v2085, %v2289
    %2291 = vmatprep.mubr.f32.mxu0 0.0
    %2292 = vmatmul.mubr.f32.gmra.mrb[0].mxu0 %v2000
    %v2293 = vpop.f32.mrb[0].mxu0
    %v2294 = vadd.f32 %v2081, %v2293
    %v2295 = vpop.f32.mrb[0].mxu0
    %v2296 = vadd.f32 %v2085, %v2295
    %2297 = vmatprep.mubr.f32.mxu0 0.0
    %2298 = vmatmul.mubr.f32.gmra.mrb[0].mxu0 %v2001
    %v2299 = vpop.f32.mrb[0].mxu0
    %v2300 = vadd.f32 %v2081, %v2299
    %v2301 = vpop.f32.mrb[0].mxu0
    %v2302 = vadd.f32 %v2085, %v2301
    %2303 = vmatprep.mubr.f32.mxu0 0.0
    %2304 = vmatmul.mubr.f32.gmra.mrb[0].mxu0 %v2002
    %v2305 = vpop.f32.mrb[0].mxu0
    %v2306 = vadd.f32 %v2081, %v2305
    %v2307 = vpop.f32.mrb[0].mxu0
    %v2308 = vadd.f32 %v2085, %v2307
    %2309 = vmatprep.mubr.f32.mxu0 0.0
    %2310 = vmatmul.mubr.f32.gmra.mrb[0].mxu0 %v2003
    %v2311 = vpop.f32.mrb[0].mxu0
    %v2312 = vadd.f32 %v2081, %v2311
    %v2313 = vpop.f32.mrb[0].mxu0
    %v2314 = vadd.f32 %v2085, %v2313
    %2315 = vdwg.mxu0
    %2316 = vst [vmem:[#allocation2] sm:$0xff] %v2157
    %2317 = vst [vmem:[#allocation2 + $0x8] sm:$0xff] %v2159
    %2318 = vst [vmem:[#allocation2 + $0x10] sm:$0xff] %v2270
    %2319 = vst [vmem:[#allocation2 + $0x18] sm:$0xff] %v2272
    %2320 = vst [vmem:[#allocation2 + $0x20] sm:$0xff] %v2163
    %2321 = vst [vmem:[#allocation2 + $0x28] sm:$0xff] %v2165
    %2322 = vst [vmem:[#allocation2 + $0x30] sm:$0xff] %v2276
    %2323 = vst [vmem:[#allocation2 + $0x38] sm:$0xff] %v2278
    %2324 = vst [vmem:[#allocation2 + $0x40] sm:$0xff] %v2169
    %2325 = vst [vmem:[#allocation2 + $0x48] sm:$0xff] %v2171
    %2326 = vst [vmem:[#allocation2 + $0x50] sm:$0xff] %v2282
    %2327 = vst [vmem:[#allocation2 + $0x58] sm:$0xff] %v2284
    %2328 = vst [vmem:[#allocation2 + $0x60] sm:$0xff] %v2175
    %2329 = vst [vmem:[#allocation2 + $0x68] sm:$0xff] %v2177
    %2330 = vst [vmem:[#allocation2 + $0x70] sm:$0xff] %v2288
    %2331 = vst [vmem:[#allocation2 + $0x78] sm:$0xff] %v2290
    %2332 = vst [vmem:[#allocation2 + $0x80] sm:$0xff] %v2181
    %2333 = vst [vmem:[#allocation2 + $0x88] sm:$0xff] %v2183
    %2334 = vst [vmem:[#allocation2 + $0x90] sm:$0xff] %v2294
    %2335 = vst [vmem:[#allocation2 + $0x98] sm:$0xff] %v2296
    %2336 = vst [vmem:[#allocation2 + $0xa0] sm:$0xff] %v2187
    %2337 = vst [vmem:[#allocation2 + $0xa8] sm:$0xff] %v2189
    %2338 = vst [vmem:[#allocation2 + $0xb0] sm:$0xff] %v2300
    %2339 = vst [vmem:[#allocation2 + $0xb8] sm:$0xff] %v2302
    %2340 = vst [vmem:[#allocation2 + $0xc0] sm:$0xff] %v2193
    %2341 = vst [vmem:[#allocation2 + $0xc8] sm:$0xff] %v2195
    %2342 = vst [vmem:[#allocation2 + $0xd0] sm:$0xff] %v2306
    %2343 = vst [vmem:[#allocation2 + $0xd8] sm:$0xff] %v2308
    %2344 = vst [vmem:[#allocation2 + $0xe0] sm:$0xff] %v2199
    %2345 = vst [vmem:[#allocation2 + $0xe8] sm:$0xff] %v2201
    %2346 = vst [vmem:[#allocation2 + $0xf0] sm:$0xff] %v2312
    %2347 = vst [vmem:[#allocation2 + $0xf8] sm:$0xff] %v2314
    %v2348 = vld [vmem:[#allocation13] sm:$0xff]
    %v2349 = vld [vmem:[#allocation13 + $0x8] sm:$0xff]
    %v2350 = vld [vmem:[#allocation13 + $0x10] sm:$0xff]
    %v2351 = vld [vmem:[#allocation13 + $0x18] sm:$0xff]
    %v2352 = vld [vmem:[#allocation13 + $0x20] sm:$0xff]
    %v2353 = vld [vmem:[#allocation13 + $0x28] sm:$0xff]
    %v2354 = vld [vmem:[#allocation13 + $0x30] sm:$0xff]
    %v2355 = vld [vmem:[#allocation13 + $0x38] sm:$0xff]
    %v2356 = vld [vmem:[#allocation13 + $0x40] sm:$0xff]
    %v2357 = vld [vmem:[#allocation13 + $0x48] sm:$0xff]
    %v2358 = vld [vmem:[#allocation13 + $0x50] sm:$0xff]
    %v2359 = vld [vmem:[#allocation13 + $0x58] sm:$0xff]
    %v2360 = vld [vmem:[#allocation13 + $0x60] sm:$0xff]
    %v2361 = vld [vmem:[#allocation13 + $0x68] sm:$0xff]
    %v2362 = vld [vmem:[#allocation13 + $0x70] sm:$0xff]
    %v2363 = vld [vmem:[#allocation13 + $0x78] sm:$0xff]
    %v2364 = vld [vmem:[#allocation13 + $0x80] sm:$0xff]
    %v2365 = vld [vmem:[#allocation13 + $0x88] sm:$0xff]
    %v2366 = vld [vmem:[#allocation13 + $0x90] sm:$0xff]
    %v2367 = vld [vmem:[#allocation13 + $0x98] sm:$0xff]
    %v2368 = vld [vmem:[#allocation13 + $0xa0] sm:$0xff]
    %v2369 = vld [vmem:[#allocation13 + $0xa8] sm:$0xff]
    %v2370 = vld [vmem:[#allocation13 + $0xb0] sm:$0xff]
    %v2371 = vld [vmem:[#allocation13 + $0xb8] sm:$0xff]
    %v2372 = vld [vmem:[#allocation13 + $0xc0] sm:$0xff]
    %v2373 = vld [vmem:[#allocation13 + $0xc8] sm:$0xff]
    %v2374 = vld [vmem:[#allocation13 + $0xd0] sm:$0xff]
    %v2375 = vld [vmem:[#allocation13 + $0xd8] sm:$0xff]
    %v2376 = vld [vmem:[#allocation13 + $0xe0] sm:$0xff]
    %v2377 = vld [vmem:[#allocation13 + $0xe8] sm:$0xff]
    %v2378 = vld [vmem:[#allocation13 + $0xf0] sm:$0xff]
    %v2379 = vld [vmem:[#allocation13 + $0xf8] sm:$0xff]
    %v2380 = vld [vmem:[#allocation13 + $0x100] sm:$0xff]
    %v2381 = vld [vmem:[#allocation13 + $0x108] sm:$0xff]
    %v2382 = vld [vmem:[#allocation13 + $0x110] sm:$0xff]
    %v2383 = vld [vmem:[#allocation13 + $0x118] sm:$0xff]
    %v2384 = vld [vmem:[#allocation13 + $0x120] sm:$0xff]
    %v2385 = vld [vmem:[#allocation13 + $0x128] sm:$0xff]
    %v2386 = vld [vmem:[#allocation13 + $0x130] sm:$0xff]
    %v2387 = vld [vmem:[#allocation13 + $0x138] sm:$0xff]
    %v2388 = vld [vmem:[#allocation13 + $0x140] sm:$0xff]
    %v2389 = vld [vmem:[#allocation13 + $0x148] sm:$0xff]
    %v2390 = vld [vmem:[#allocation13 + $0x150] sm:$0xff]
    %v2391 = vld [vmem:[#allocation13 + $0x158] sm:$0xff]
    %v2392 = vld [vmem:[#allocation13 + $0x160] sm:$0xff]
    %v2393 = vld [vmem:[#allocation13 + $0x168] sm:$0xff]
    %v2394 = vld [vmem:[#allocation13 + $0x170] sm:$0xff]
    %v2395 = vld [vmem:[#allocation13 + $0x178] sm:$0xff]
    %v2396 = vld [vmem:[#allocation13 + $0x180] sm:$0xff]
    %v2397 = vld [vmem:[#allocation13 + $0x188] sm:$0xff]
    %v2398 = vld [vmem:[#allocation13 + $0x190] sm:$0xff]
    %v2399 = vld [vmem:[#allocation13 + $0x198] sm:$0xff]
    %v2400 = vld [vmem:[#allocation13 + $0x1a0] sm:$0xff]
    %v2401 = vld [vmem:[#allocation13 + $0x1a8] sm:$0xff]
    %v2402 = vld [vmem:[#allocation13 + $0x1b0] sm:$0xff]
    %v2403 = vld [vmem:[#allocation13 + $0x1b8] sm:$0xff]
    %v2404 = vld [vmem:[#allocation13 + $0x1c0] sm:$0xff]
    %v2405 = vld [vmem:[#allocation13 + $0x1c8] sm:$0xff]
    %v2406 = vld [vmem:[#allocation13 + $0x1d0] sm:$0xff]
    %v2407 = vld [vmem:[#allocation13 + $0x1d8] sm:$0xff]
    %v2408 = vld [vmem:[#allocation13 + $0x1e0] sm:$0xff]
    %v2409 = vld [vmem:[#allocation13 + $0x1e8] sm:$0xff]
    %v2410 = vld [vmem:[#allocation13 + $0x1f0] sm:$0xff]
    %v2411 = vld [vmem:[#allocation13 + $0x1f8] sm:$0xff]
    %v2412 = vld [vmem:[%s567] sm:$0xff]
    %v2413 = vld [vmem:[%s567 + $0x8] sm:$0xff]
    %v2414 = vld [vmem:[%s567 + $0x10] sm:$0xff]
    %v2415 = vld [vmem:[%s567 + $0x18] sm:$0xff]
    %2416 = vmatprep.subr.mxu0 %v2349
    %2417 = vmatpush1.msra.mxu0 %v2348
    %2418 = vmatprep.subr.mxu0 %v2353
    %2419 = vmatpush1.msra.mxu0 %v2352
    %2420 = vmatprep.subr.mxu0 %v2357
    %2421 = vmatpush1.msra.mxu0 %v2356
    %2422 = vmatprep.subr.mxu0 %v2361
    %2423 = vmatpush1.msra.mxu0 %v2360
    %2424 = vmatprep.subr.mxu0 %v2365
    %2425 = vmatpush1.msra.mxu0 %v2364
    %2426 = vmatprep.subr.mxu0 %v2369
    %2427 = vmatpush1.msra.mxu0 %v2368
    %2428 = vmatprep.subr.mxu0 %v2373
    %2429 = vmatpush1.msra.mxu0 %v2372
    %2430 = vmatprep.subr.mxu0 %v2377
    %2431 = vmatpush1.msra.mxu0 %v2376
    %2432 = vmatprep.subr.mxu0 %v2381
    %2433 = vmatpush1.msra.mxu0 %v2380
    %2434 = vmatprep.subr.mxu0 %v2385
    %2435 = vmatpush1.msra.mxu0 %v2384
    %2436 = vmatprep.subr.mxu0 %v2389
    %2437 = vmatpush1.msra.mxu0 %v2388
    %2438 = vmatprep.subr.mxu0 %v2393
    %2439 = vmatpush1.msra.mxu0 %v2392
    %2440 = vmatprep.subr.mxu0 %v2397
    %2441 = vmatpush1.msra.mxu0 %v2396
    %2442 = vmatprep.subr.mxu0 %v2401
    %2443 = vmatpush1.msra.mxu0 %v2400
    %2444 = vmatprep.subr.mxu0 %v2405
    %2445 = vmatpush1.msra.mxu0 %v2404
    %2446 = vmatprep.subr.mxu0 %v2409
    %2447 = vmatpush1.msra.mxu0 %v2408
    %2448 = vmatprep.subr.mxu0 0.0
    %2449 = vmatpush1.msra.mxu0 0.0
    %2450 = vmatprep.subr.mxu0 0.0
    %2451 = vmatpush1.msra.mxu0 0.0
    %2452 = vmatprep.subr.mxu0 0.0
    %2453 = vmatpush1.msra.mxu0 0.0
    %2454 = vmatprep.subr.mxu0 0.0
    %2455 = vmatpush1.msra.mxu0 0.0
    %2456 = vmatprep.subr.mxu0 0.0
    %2457 = vmatpush1.msra.mxu0 0.0
    %2458 = vmatprep.subr.mxu0 0.0
    %2459 = vmatpush1.msra.mxu0 0.0
    %2460 = vmatprep.subr.mxu0 0.0
    %2461 = vmatpush1.msra.mxu0 0.0
    %2462 = vmatprep.subr.mxu0 0.0
    %2463 = vmatpush1.msra.mxu0 0.0
    %2464 = vmatprep.subr.mxu0 0.0
    %2465 = vmatpush1.msra.mxu0 0.0
    %2466 = vmatprep.subr.mxu0 0.0
    %2467 = vmatpush1.msra.mxu0 0.0
    %2468 = vmatprep.subr.mxu0 0.0
    %2469 = vmatpush1.msra.mxu0 0.0
    %2470 = vmatprep.subr.mxu0 0.0
    %2471 = vmatpush1.msra.mxu0 0.0
    %2472 = vmatprep.subr.mxu0 0.0
    %2473 = vmatpush1.msra.mxu0 0.0
    %2474 = vmatprep.subr.mxu0 0.0
    %2475 = vmatpush1.msra.mxu0 0.0
    %2476 = vmatprep.subr.mxu0 0.0
    %2477 = vmatpush1.msra.mxu0 0.0
    %2478 = vmatprep.subr.mxu0 0.0
    %2479 = vmatpush1.msra.mxu0 0.0
    %2480 = vmatprep.mubr.f32.mxu0 0.0
    %2481 = vmatmul.mubr.f32.gmra.mrb[0].mxu0 0.0
    %v2482 = vpop.f32.mrb[0].mxu0
    %v2483 = vadd.f32 0.0, %v2482
    %v2484 = vpop.f32.mrb[0].mxu0
    %v2485 = vadd.f32 0.0, %v2484
    %2486 = vdwg.mxu0
    %2487 = vmatprep.subr.mxu0 %v2351
    %2488 = vmatpush1.msra.mxu0 %v2350
    %2489 = vmatprep.subr.mxu0 %v2355
    %2490 = vmatpush1.msra.mxu0 %v2354
    %2491 = vmatprep.subr.mxu0 %v2359
    %2492 = vmatpush1.msra.mxu0 %v2358
    %2493 = vmatprep.subr.mxu0 %v2363
    %2494 = vmatpush1.msra.mxu0 %v2362
    %2495 = vmatprep.subr.mxu0 %v2367
    %2496 = vmatpush1.msra.mxu0 %v2366
    %2497 = vmatprep.subr.mxu0 %v2371
    %2498 = vmatpush1.msra.mxu0 %v2370
    %2499 = vmatprep.subr.mxu0 %v2375
    %2500 = vmatpush1.msra.mxu0 %v2374
    %2501 = vmatprep.subr.mxu0 %v2379
    %2502 = vmatpush1.msra.mxu0 %v2378
    %2503 = vmatprep.subr.mxu0 %v2383
    %2504 = vmatpush1.msra.mxu0 %v2382
    %2505 = vmatprep.subr.mxu0 %v2387
    %2506 = vmatpush1.msra.mxu0 %v2386
    %2507 = vmatprep.subr.mxu0 %v2391
    %2508 = vmatpush1.msra.mxu0 %v2390
    %2509 = vmatprep.subr.mxu0 %v2395
    %2510 = vmatpush1.msra.mxu0 %v2394
    %2511 = vmatprep.subr.mxu0 %v2399
    %2512 = vmatpush1.msra.mxu0 %v2398
    %2513 = vmatprep.subr.mxu0 %v2403
    %2514 = vmatpush1.msra.mxu0 %v2402
    %2515 = vmatprep.subr.mxu0 %v2407
    %2516 = vmatpush1.msra.mxu0 %v2406
    %2517 = vmatprep.subr.mxu0 %v2411
    %2518 = vmatpush1.msra.mxu0 %v2410
    %2519 = vmatprep.subr.mxu0 0.0
    %2520 = vmatpush1.msra.mxu0 0.0
    %2521 = vmatprep.subr.mxu0 0.0
    %2522 = vmatpush1.msra.mxu0 0.0
    %2523 = vmatprep.subr.mxu0 0.0
    %2524 = vmatpush1.msra.mxu0 0.0
    %2525 = vmatprep.subr.mxu0 0.0
    %2526 = vmatpush1.msra.mxu0 0.0
    %2527 = vmatprep.subr.mxu0 0.0
    %2528 = vmatpush1.msra.mxu0 0.0
    %2529 = vmatprep.subr.mxu0 0.0
    %2530 = vmatpush1.msra.mxu0 0.0
    %2531 = vmatprep.subr.mxu0 0.0
    %2532 = vmatpush1.msra.mxu0 0.0
    %2533 = vmatprep.subr.mxu0 0.0
    %2534 = vmatpush1.msra.mxu0 0.0
    %2535 = vmatprep.subr.mxu0 0.0
    %2536 = vmatpush1.msra.mxu0 0.0
    %2537 = vmatprep.subr.mxu0 0.0
    %2538 = vmatpush1.msra.mxu0 0.0
    %2539 = vmatprep.subr.mxu0 0.0
    %2540 = vmatpush1.msra.mxu0 0.0
    %2541 = vmatprep.subr.mxu0 0.0
    %2542 = vmatpush1.msra.mxu0 0.0
    %2543 = vmatprep.subr.mxu0 0.0
    %2544 = vmatpush1.msra.mxu0 0.0
    %2545 = vmatprep.subr.mxu0 0.0
    %2546 = vmatpush1.msra.mxu0 0.0
    %2547 = vmatprep.subr.mxu0 0.0
    %2548 = vmatpush1.msra.mxu0 0.0
    %2549 = vmatprep.subr.mxu0 0.0
    %2550 = vmatpush1.msra.mxu0 0.0
    %2551 = vmatprep.mubr.f32.mxu0 0.0
    %2552 = vmatmul.mubr.f32.gmra.mrb[0].mxu0 0.0
    %v2553 = vpop.f32.mrb[0].mxu0
    %v2554 = vadd.f32 0.0, %v2553
    %v2555 = vpop.f32.mrb[0].mxu0
    %v2556 = vadd.f32 0.0, %v2555
    %2557 = vdwg.mxu0
    %v2558 = vadd.f32 %v2412, %v2483
    %v2559 = vadd.f32 %v2413, %v2485
    %v2560 = vadd.f32 %v2414, %v2554
    %v2561 = vadd.f32 %v2415, %v2556
    %v2562 = vxor.u32 %v2558, 2147483648
    %v2563 = vxor.u32 %v2559, 2147483648
    %v2564 = vxor.u32 %v2560, 2147483648
    %v2565 = vmul.f32 %v2562, 1.442695
    %v2566 = vpow.pop %v2565
    %v2567 = vmul.f32 %v2563, 1.442695
    %v2568 = vpow.pop %v2567
    %v2569 = vmul.f32 %v2564, 1.442695
    %v2570 = vpow.pop %v2569
    %v2571 = vadd.f32 %v2566, 1.0
    %v2572 = vadd.f32 %v2568, 1.0
    %v2573 = vadd.f32 %v2570, 1.0
    %v2574 = vrcp.pop %v2571
    %v2575 = vmul.f32 1.0, %v2574
    %v2576 = vrcp.pop %v2572
    %v2577 = vmul.f32 1.0, %v2576
    %v2578 = vrcp.pop %v2573
    %v2579 = vmul.f32 1.0, %v2578
    %v2580 = vtanh.pop %v2561
    %v2581 = vmul.f32 %v2577, 0.0
    %v2582 = vmul.f32 %v2575, %v2580
    %v2583 = vadd.f32 %v2581, %v2582
    %v2584 = vtanh.pop %v2583
    %v2585 = vmul.f32 %v2579, %v2584
    %v2586 = vld [vmem:[%s745] sm:$0xff]
    %v2587 = vld [vmem:[%s745 + $0x8] sm:$0xff]
    %v2588 = vld [vmem:[%s745 + $0x10] sm:$0xff]
    %v2589 = vld [vmem:[%s745 + $0x18] sm:$0xff]
    %2590 = vmatprep.subr.mxu0 %v2349
    %2591 = vmatpush1.msra.mxu0 %v2348
    %2592 = vmatprep.subr.mxu0 %v2353
    %2593 = vmatpush1.msra.mxu0 %v2352
    %2594 = vmatprep.subr.mxu0 %v2357
    %2595 = vmatpush1.msra.mxu0 %v2356
    %2596 = vmatprep.subr.mxu0 %v2361
    %2597 = vmatpush1.msra.mxu0 %v2360
    %2598 = vmatprep.subr.mxu0 %v2365
    %2599 = vmatpush1.msra.mxu0 %v2364
    %2600 = vmatprep.subr.mxu0 %v2369
    %2601 = vmatpush1.msra.mxu0 %v2368
    %2602 = vmatprep.subr.mxu0 %v2373
    %2603 = vmatpush1.msra.mxu0 %v2372
    %2604 = vmatprep.subr.mxu0 %v2377
    %2605 = vmatpush1.msra.mxu0 %v2376
    %2606 = vmatprep.subr.mxu0 %v2381
    %2607 = vmatpush1.msra.mxu0 %v2380
    %2608 = vmatprep.subr.mxu0 %v2385
    %2609 = vmatpush1.msra.mxu0 %v2384
    %2610 = vmatprep.subr.mxu0 %v2389
    %2611 = vmatpush1.msra.mxu0 %v2388
    %2612 = vmatprep.subr.mxu0 %v2393
    %2613 = vmatpush1.msra.mxu0 %v2392
    %2614 = vmatprep.subr.mxu0 %v2397
    %2615 = vmatpush1.msra.mxu0 %v2396
    %2616 = vmatprep.subr.mxu0 %v2401
    %2617 = vmatpush1.msra.mxu0 %v2400
    %2618 = vmatprep.subr.mxu0 %v2405
    %2619 = vmatpush1.msra.mxu0 %v2404
    %2620 = vmatprep.subr.mxu0 %v2409
    %2621 = vmatpush1.msra.mxu0 %v2408
    %2622 = vmatprep.subr.mxu0 0.0
    %2623 = vmatpush1.msra.mxu0 0.0
    %2624 = vmatprep.subr.mxu0 0.0
    %2625 = vmatpush1.msra.mxu0 0.0
    %2626 = vmatprep.subr.mxu0 0.0
    %2627 = vmatpush1.msra.mxu0 0.0
    %2628 = vmatprep.subr.mxu0 0.0
    %2629 = vmatpush1.msra.mxu0 0.0
    %2630 = vmatprep.subr.mxu0 0.0
    %2631 = vmatpush1.msra.mxu0 0.0
    %2632 = vmatprep.subr.mxu0 0.0
    %2633 = vmatpush1.msra.mxu0 0.0
    %2634 = vmatprep.subr.mxu0 0.0
    %2635 = vmatpush1.msra.mxu0 0.0
    %2636 = vmatprep.subr.mxu0 0.0
    %2637 = vmatpush1.msra.mxu0 0.0
    %2638 = vmatprep.subr.mxu0 0.0
    %2639 = vmatpush1.msra.mxu0 0.0
    %2640 = vmatprep.subr.mxu0 0.0
    %2641 = vmatpush1.msra.mxu0 0.0
    %2642 = vmatprep.subr.mxu0 0.0
    %2643 = vmatpush1.msra.mxu0 0.0
    %2644 = vmatprep.subr.mxu0 0.0
    %2645 = vmatpush1.msra.mxu0 0.0
    %2646 = vmatprep.subr.mxu0 0.0
    %2647 = vmatpush1.msra.mxu0 0.0
    %2648 = vmatprep.subr.mxu0 0.0
    %2649 = vmatpush1.msra.mxu0 0.0
    %2650 = vmatprep.subr.mxu0 0.0
    %2651 = vmatpush1.msra.mxu0 0.0
    %2652 = vmatprep.subr.mxu0 0.0
    %2653 = vmatpush1.msra.mxu0 0.0
    %2654 = vmatprep.mubr.f32.mxu0 0.0
    %2655 = vmatmul.mubr.f32.gmra.mrb[0].mxu0 %v2585
    %v2656 = vpop.f32.mrb[0].mxu0
    %v2657 = vadd.f32 0.0, %v2656
    %v2658 = vpop.f32.mrb[0].mxu0
    %v2659 = vadd.f32 0.0, %v2658
    %2660 = vdwg.mxu0
    %2661 = vmatprep.subr.mxu0 %v2351
    %2662 = vmatpush1.msra.mxu0 %v2350
    %2663 = vmatprep.subr.mxu0 %v2355
    %2664 = vmatpush1.msra.mxu0 %v2354
    %2665 = vmatprep.subr.mxu0 %v2359
    %2666 = vmatpush1.msra.mxu0 %v2358
    %2667 = vmatprep.subr.mxu0 %v2363
    %2668 = vmatpush1.msra.mxu0 %v2362
    %2669 = vmatprep.subr.mxu0 %v2367
    %2670 = vmatpush1.msra.mxu0 %v2366
    %2671 = vmatprep.subr.mxu0 %v2371
    %2672 = vmatpush1.msra.mxu0 %v2370
    %2673 = vmatprep.subr.mxu0 %v2375
    %2674 = vmatpush1.msra.mxu0 %v2374
    %2675 = vmatprep.subr.mxu0 %v2379
    %2676 = vmatpush1.msra.mxu0 %v2378
    %2677 = vmatprep.subr.mxu0 %v2383
    %2678 = vmatpush1.msra.mxu0 %v2382
    %2679 = vmatprep.subr.mxu0 %v2387
    %2680 = vmatpush1.msra.mxu0 %v2386
    %2681 = vmatprep.subr.mxu0 %v2391
    %2682 = vmatpush1.msra.mxu0 %v2390
    %2683 = vmatprep.subr.mxu0 %v2395
    %2684 = vmatpush1.msra.mxu0 %v2394
    %2685 = vmatprep.subr.mxu0 %v2399
    %2686 = vmatpush1.msra.mxu0 %v2398
    %2687 = vmatprep.subr.mxu0 %v2403
    %2688 = vmatpush1.msra.mxu0 %v2402
    %2689 = vmatprep.subr.mxu0 %v2407
    %2690 = vmatpush1.msra.mxu0 %v2406
    %2691 = vmatprep.subr.mxu0 %v2411
    %2692 = vmatpush1.msra.mxu0 %v2410
    %2693 = vmatprep.subr.mxu0 0.0
    %2694 = vmatpush1.msra.mxu0 0.0
    %2695 = vmatprep.subr.mxu0 0.0
    %2696 = vmatpush1.msra.mxu0 0.0
    %2697 = vmatprep.subr.mxu0 0.0
    %2698 = vmatpush1.msra.mxu0 0.0
    %2699 = vmatprep.subr.mxu0 0.0
    %2700 = vmatpush1.msra.mxu0 0.0
    %2701 = vmatprep.subr.mxu0 0.0
    %2702 = vmatpush1.msra.mxu0 0.0
    %2703 = vmatprep.subr.mxu0 0.0
    %2704 = vmatpush1.msra.mxu0 0.0
    %2705 = vmatprep.subr.mxu0 0.0
    %2706 = vmatpush1.msra.mxu0 0.0
    %2707 = vmatprep.subr.mxu0 0.0
    %2708 = vmatpush1.msra.mxu0 0.0
    %2709 = vmatprep.subr.mxu0 0.0
    %2710 = vmatpush1.msra.mxu0 0.0
    %2711 = vmatprep.subr.mxu0 0.0
    %2712 = vmatpush1.msra.mxu0 0.0
    %2713 = vmatprep.subr.mxu0 0.0
    %2714 = vmatpush1.msra.mxu0 0.0
    %2715 = vmatprep.subr.mxu0 0.0
    %2716 = vmatpush1.msra.mxu0 0.0
    %2717 = vmatprep.subr.mxu0 0.0
    %2718 = vmatpush1.msra.mxu0 0.0
    %2719 = vmatprep.subr.mxu0 0.0
    %2720 = vmatpush1.msra.mxu0 0.0
    %2721 = vmatprep.subr.mxu0 0.0
    %2722 = vmatpush1.msra.mxu0 0.0
    %2723 = vmatprep.subr.mxu0 0.0
    %2724 = vmatpush1.msra.mxu0 0.0
    %2725 = vmatprep.mubr.f32.mxu0 0.0
    %2726 = vmatmul.mubr.f32.gmra.mrb[0].mxu0 %v2585
    %v2727 = vpop.f32.mrb[0].mxu0
    %v2728 = vadd.f32 0.0, %v2727
    %v2729 = vpop.f32.mrb[0].mxu0
    %v2730 = vadd.f32 0.0, %v2729
    %2731 = vdwg.mxu0
    %v2732 = vadd.f32 %v2586, %v2657
    %v2733 = vadd.f32 %v2587, %v2659
    %v2734 = vadd.f32 %v2588, %v2728
    %v2735 = vadd.f32 %v2589, %v2730
    %v2736 = vxor.u32 %v2732, 2147483648
    %v2737 = vxor.u32 %v2733, 2147483648
    %v2738 = vxor.u32 %v2734, 2147483648
    %v2739 = vmul.f32 %v2736, 1.442695
    %v2740 = vpow.pop %v2739
    %v2741 = vmul.f32 %v2737, 1.442695
    %v2742 = vpow.pop %v2741
    %v2743 = vmul.f32 %v2738, 1.442695
    %v2744 = vpow.pop %v2743
    %v2745 = vadd.f32 %v2740, 1.0
    %v2746 = vadd.f32 %v2742, 1.0
    %v2747 = vadd.f32 %v2744, 1.0
    %v2748 = vrcp.pop %v2745
    %v2749 = vmul.f32 1.0, %v2748
    %v2750 = vrcp.pop %v2746
    %v2751 = vmul.f32 1.0, %v2750
    %v2752 = vrcp.pop %v2747
    %v2753 = vmul.f32 1.0, %v2752
    %v2754 = vtanh.pop %v2735
    %v2755 = vmul.f32 %v2751, %v2583
    %v2756 = vmul.f32 %v2749, %v2754
    %v2757 = vadd.f32 %v2755, %v2756
    %v2758 = vtanh.pop %v2757
    %v2759 = vmul.f32 %v2753, %v2758
    %v2760 = vld [vmem:[%s924] sm:$0xff]
    %v2761 = vld [vmem:[%s924 + $0x8] sm:$0xff]
    %v2762 = vld [vmem:[%s924 + $0x10] sm:$0xff]
    %v2763 = vld [vmem:[%s924 + $0x18] sm:$0xff]
    %2764 = vmatprep.subr.mxu0 %v2349
    %2765 = vmatpush1.msra.mxu0 %v2348
    %2766 = vmatprep.subr.mxu0 %v2353
    %2767 = vmatpush1.msra.mxu0 %v2352
    %2768 = vmatprep.subr.mxu0 %v2357
    %2769 = vmatpush1.msra.mxu0 %v2356
    %2770 = vmatprep.subr.mxu0 %v2361
    %2771 = vmatpush1.msra.mxu0 %v2360
    %2772 = vmatprep.subr.mxu0 %v2365
    %2773 = vmatpush1.msra.mxu0 %v2364
    %2774 = vmatprep.subr.mxu0 %v2369
    %2775 = vmatpush1.msra.mxu0 %v2368
    %2776 = vmatprep.subr.mxu0 %v2373
    %2777 = vmatpush1.msra.mxu0 %v2372
    %2778 = vmatprep.subr.mxu0 %v2377
    %2779 = vmatpush1.msra.mxu0 %v2376
    %2780 = vmatprep.subr.mxu0 %v2381
    %2781 = vmatpush1.msra.mxu0 %v2380
    %2782 = vmatprep.subr.mxu0 %v2385
    %2783 = vmatpush1.msra.mxu0 %v2384
    %2784 = vmatprep.subr.mxu0 %v2389
    %2785 = vmatpush1.msra.mxu0 %v2388
    %2786 = vmatprep.subr.mxu0 %v2393
    %2787 = vmatpush1.msra.mxu0 %v2392
    %2788 = vmatprep.subr.mxu0 %v2397
    %2789 = vmatpush1.msra.mxu0 %v2396
    %2790 = vmatprep.subr.mxu0 %v2401
    %2791 = vmatpush1.msra.mxu0 %v2400
    %2792 = vmatprep.subr.mxu0 %v2405
    %2793 = vmatpush1.msra.mxu0 %v2404
    %2794 = vmatprep.subr.mxu0 %v2409
    %2795 = vmatpush1.msra.mxu0 %v2408
    %2796 = vmatprep.subr.mxu0 0.0
    %2797 = vmatpush1.msra.mxu0 0.0
    %2798 = vmatprep.subr.mxu0 0.0
    %2799 = vmatpush1.msra.mxu0 0.0
    %2800 = vmatprep.subr.mxu0 0.0
    %2801 = vmatpush1.msra.mxu0 0.0
    %2802 = vmatprep.subr.mxu0 0.0
    %2803 = vmatpush1.msra.mxu0 0.0
    %2804 = vmatprep.subr.mxu0 0.0
    %2805 = vmatpush1.msra.mxu0 0.0
    %2806 = vmatprep.subr.mxu0 0.0
    %2807 = vmatpush1.msra.mxu0 0.0
    %2808 = vmatprep.subr.mxu0 0.0
    %2809 = vmatpush1.msra.mxu0 0.0
    %2810 = vmatprep.subr.mxu0 0.0
    %2811 = vmatpush1.msra.mxu0 0.0
    %2812 = vmatprep.subr.mxu0 0.0
    %2813 = vmatpush1.msra.mxu0 0.0
    %2814 = vmatprep.subr.mxu0 0.0
    %2815 = vmatpush1.msra.mxu0 0.0
    %2816 = vmatprep.subr.mxu0 0.0
    %2817 = vmatpush1.msra.mxu0 0.0
    %2818 = vmatprep.subr.mxu0 0.0
    %2819 = vmatpush1.msra.mxu0 0.0
    %2820 = vmatprep.subr.mxu0 0.0
    %2821 = vmatpush1.msra.mxu0 0.0
    %2822 = vmatprep.subr.mxu0 0.0
    %2823 = vmatpush1.msra.mxu0 0.0
    %2824 = vmatprep.subr.mxu0 0.0
    %2825 = vmatpush1.msra.mxu0 0.0
    %2826 = vmatprep.subr.mxu0 0.0
    %2827 = vmatpush1.msra.mxu0 0.0
    %2828 = vmatprep.mubr.f32.mxu0 0.0
    %2829 = vmatmul.mubr.f32.gmra.mrb[0].mxu0 %v2759
    %v2830 = vpop.f32.mrb[0].mxu0
    %v2831 = vadd.f32 0.0, %v2830
    %v2832 = vpop.f32.mrb[0].mxu0
    %v2833 = vadd.f32 0.0, %v2832
    %2834 = vdwg.mxu0
    %2835 = vmatprep.subr.mxu0 %v2351
    %2836 = vmatpush1.msra.mxu0 %v2350
    %2837 = vmatprep.subr.mxu0 %v2355
    %2838 = vmatpush1.msra.mxu0 %v2354
    %2839 = vmatprep.subr.mxu0 %v2359
    %2840 = vmatpush1.msra.mxu0 %v2358
    %2841 = vmatprep.subr.mxu0 %v2363
    %2842 = vmatpush1.msra.mxu0 %v2362
    %2843 = vmatprep.subr.mxu0 %v2367
    %2844 = vmatpush1.msra.mxu0 %v2366
    %2845 = vmatprep.subr.mxu0 %v2371
    %2846 = vmatpush1.msra.mxu0 %v2370
    %2847 = vmatprep.subr.mxu0 %v2375
    %2848 = vmatpush1.msra.mxu0 %v2374
    %2849 = vmatprep.subr.mxu0 %v2379
    %2850 = vmatpush1.msra.mxu0 %v2378
    %2851 = vmatprep.subr.mxu0 %v2383
    %2852 = vmatpush1.msra.mxu0 %v2382
    %2853 = vmatprep.subr.mxu0 %v2387
    %2854 = vmatpush1.msra.mxu0 %v2386
    %2855 = vmatprep.subr.mxu0 %v2391
    %2856 = vmatpush1.msra.mxu0 %v2390
    %2857 = vmatprep.subr.mxu0 %v2395
    %2858 = vmatpush1.msra.mxu0 %v2394
    %2859 = vmatprep.subr.mxu0 %v2399
    %2860 = vmatpush1.msra.mxu0 %v2398
    %2861 = vmatprep.subr.mxu0 %v2403
    %2862 = vmatpush1.msra.mxu0 %v2402
    %2863 = vmatprep.subr.mxu0 %v2407
    %2864 = vmatpush1.msra.mxu0 %v2406
    %2865 = vmatprep.subr.mxu0 %v2411
    %2866 = vmatpush1.msra.mxu0 %v2410
    %2867 = vmatprep.subr.mxu0 0.0
    %2868 = vmatpush1.msra.mxu0 0.0
    %2869 = vmatprep.subr.mxu0 0.0
    %2870 = vmatpush1.msra.mxu0 0.0
    %2871 = vmatprep.subr.mxu0 0.0
    %2872 = vmatpush1.msra.mxu0 0.0
    %2873 = vmatprep.subr.mxu0 0.0
    %2874 = vmatpush1.msra.mxu0 0.0
    %2875 = vmatprep.subr.mxu0 0.0
    %2876 = vmatpush1.msra.mxu0 0.0
    %2877 = vmatprep.subr.mxu0 0.0
    %2878 = vmatpush1.msra.mxu0 0.0
    %2879 = vmatprep.subr.mxu0 0.0
    %2880 = vmatpush1.msra.mxu0 0.0
    %2881 = vmatprep.subr.mxu0 0.0
    %2882 = vmatpush1.msra.mxu0 0.0
    %2883 = vmatprep.subr.mxu0 0.0
    %2884 = vmatpush1.msra.mxu0 0.0
    %2885 = vmatprep.subr.mxu0 0.0
    %2886 = vmatpush1.msra.mxu0 0.0
    %2887 = vmatprep.subr.mxu0 0.0
    %2888 = vmatpush1.msra.mxu0 0.0
    %2889 = vmatprep.subr.mxu0 0.0
    %2890 = vmatpush1.msra.mxu0 0.0
    %2891 = vmatprep.subr.mxu0 0.0
    %2892 = vmatpush1.msra.mxu0 0.0
    %2893 = vmatprep.subr.mxu0 0.0
    %2894 = vmatpush1.msra.mxu0 0.0
    %2895 = vmatprep.subr.mxu0 0.0
    %2896 = vmatpush1.msra.mxu0 0.0
    %2897 = vmatprep.subr.mxu0 0.0
    %2898 = vmatpush1.msra.mxu0 0.0
    %2899 = vmatprep.mubr.f32.mxu0 0.0
    %2900 = vmatmul.mubr.f32.gmra.mrb[0].mxu0 %v2759
    %v2901 = vpop.f32.mrb[0].mxu0
    %v2902 = vadd.f32 0.0, %v2901
    %v2903 = vpop.f32.mrb[0].mxu0
    %v2904 = vadd.f32 0.0, %v2903
    %2905 = vdwg.mxu0
    %v2906 = vadd.f32 %v2760, %v2831
    %v2907 = vadd.f32 %v2761, %v2833
    %v2908 = vadd.f32 %v2762, %v2902
    %v2909 = vadd.f32 %v2763, %v2904
    %v2910 = vxor.u32 %v2906, 2147483648
    %v2911 = vxor.u32 %v2907, 2147483648
    %v2912 = vxor.u32 %v2908, 2147483648
    %v2913 = vmul.f32 %v2910, 1.442695
    %v2914 = vpow.pop %v2913
    %v2915 = vmul.f32 %v2911, 1.442695
    %v2916 = vpow.pop %v2915
    %v2917 = vmul.f32 %v2912, 1.442695
    %v2918 = vpow.pop %v2917
    %v2919 = vadd.f32 %v2914, 1.0
    %v2920 = vadd.f32 %v2916, 1.0
    %v2921 = vadd.f32 %v2918, 1.0
    %v2922 = vrcp.pop %v2919
    %v2923 = vmul.f32 1.0, %v2922
    %v2924 = vrcp.pop %v2920
    %v2925 = vmul.f32 1.0, %v2924
    %v2926 = vrcp.pop %v2921
    %v2927 = vmul.f32 1.0, %v2926
    %v2928 = vtanh.pop %v2909
    %v2929 = vmul.f32 %v2925, %v2757
    %v2930 = vmul.f32 %v2923, %v2928
    %v2931 = vadd.f32 %v2929, %v2930
    %v2932 = vtanh.pop %v2931
    %v2933 = vmul.f32 %v2927, %v2932
    %v2934 = vld [vmem:[%s1103] sm:$0xff]
    %v2935 = vld [vmem:[%s1103 + $0x8] sm:$0xff]
    %v2936 = vld [vmem:[%s1103 + $0x10] sm:$0xff]
    %v2937 = vld [vmem:[%s1103 + $0x18] sm:$0xff]
    %2938 = vmatprep.subr.mxu0 %v2349
    %2939 = vmatpush1.msra.mxu0 %v2348
    %2940 = vmatprep.subr.mxu0 %v2353
    %2941 = vmatpush1.msra.mxu0 %v2352
    %2942 = vmatprep.subr.mxu0 %v2357
    %2943 = vmatpush1.msra.mxu0 %v2356
    %2944 = vmatprep.subr.mxu0 %v2361
    %2945 = vmatpush1.msra.mxu0 %v2360
    %2946 = vmatprep.subr.mxu0 %v2365
    %2947 = vmatpush1.msra.mxu0 %v2364
    %2948 = vmatprep.subr.mxu0 %v2369
    %2949 = vmatpush1.msra.mxu0 %v2368
    %2950 = vmatprep.subr.mxu0 %v2373
    %2951 = vmatpush1.msra.mxu0 %v2372
    %2952 = vmatprep.subr.mxu0 %v2377
    %2953 = vmatpush1.msra.mxu0 %v2376
    %2954 = vmatprep.subr.mxu0 %v2381
    %2955 = vmatpush1.msra.mxu0 %v2380
    %2956 = vmatprep.subr.mxu0 %v2385
    %2957 = vmatpush1.msra.mxu0 %v2384
    %2958 = vmatprep.subr.mxu0 %v2389
    %2959 = vmatpush1.msra.mxu0 %v2388
    %2960 = vmatprep.subr.mxu0 %v2393
    %2961 = vmatpush1.msra.mxu0 %v2392
    %2962 = vmatprep.subr.mxu0 %v2397
    %2963 = vmatpush1.msra.mxu0 %v2396
    %2964 = vmatprep.subr.mxu0 %v2401
    %2965 = vmatpush1.msra.mxu0 %v2400
    %2966 = vmatprep.subr.mxu0 %v2405
    %2967 = vmatpush1.msra.mxu0 %v2404
    %2968 = vmatprep.subr.mxu0 %v2409
    %2969 = vmatpush1.msra.mxu0 %v2408
    %2970 = vmatprep.subr.mxu0 0.0
    %2971 = vmatpush1.msra.mxu0 0.0
    %2972 = vmatprep.subr.mxu0 0.0
    %2973 = vmatpush1.msra.mxu0 0.0
    %2974 = vmatprep.subr.mxu0 0.0
    %2975 = vmatpush1.msra.mxu0 0.0
    %2976 = vmatprep.subr.mxu0 0.0
    %2977 = vmatpush1.msra.mxu0 0.0
    %2978 = vmatprep.subr.mxu0 0.0
    %2979 = vmatpush1.msra.mxu0 0.0
    %2980 = vmatprep.subr.mxu0 0.0
    %2981 = vmatpush1.msra.mxu0 0.0
    %2982 = vmatprep.subr.mxu0 0.0
    %2983 = vmatpush1.msra.mxu0 0.0
    %2984 = vmatprep.subr.mxu0 0.0
    %2985 = vmatpush1.msra.mxu0 0.0
    %2986 = vmatprep.subr.mxu0 0.0
    %2987 = vmatpush1.msra.mxu0 0.0
    %2988 = vmatprep.subr.mxu0 0.0
    %2989 = vmatpush1.msra.mxu0 0.0
    %2990 = vmatprep.subr.mxu0 0.0
    %2991 = vmatpush1.msra.mxu0 0.0
    %2992 = vmatprep.subr.mxu0 0.0
    %2993 = vmatpush1.msra.mxu0 0.0
    %2994 = vmatprep.subr.mxu0 0.0
    %2995 = vmatpush1.msra.mxu0 0.0
    %2996 = vmatprep.subr.mxu0 0.0
    %2997 = vmatpush1.msra.mxu0 0.0
    %2998 = vmatprep.subr.mxu0 0.0
    %2999 = vmatpush1.msra.mxu0 0.0
    %3000 = vmatprep.subr.mxu0 0.0
    %3001 = vmatpush1.msra.mxu0 0.0
    %3002 = vmatprep.mubr.f32.mxu0 0.0
    %3003 = vmatmul.mubr.f32.gmra.mrb[0].mxu0 %v2933
    %v3004 = vpop.f32.mrb[0].mxu0
    %v3005 = vadd.f32 0.0, %v3004
    %v3006 = vpop.f32.mrb[0].mxu0
    %v3007 = vadd.f32 0.0, %v3006
    %3008 = vdwg.mxu0
    %3009 = vmatprep.subr.mxu0 %v2351
    %3010 = vmatpush1.msra.mxu0 %v2350
    %3011 = vmatprep.subr.mxu0 %v2355
    %3012 = vmatpush1.msra.mxu0 %v2354
    %3013 = vmatprep.subr.mxu0 %v2359
    %3014 = vmatpush1.msra.mxu0 %v2358
    %3015 = vmatprep.subr.mxu0 %v2363
    %3016 = vmatpush1.msra.mxu0 %v2362
    %3017 = vmatprep.subr.mxu0 %v2367
    %3018 = vmatpush1.msra.mxu0 %v2366
    %3019 = vmatprep.subr.mxu0 %v2371
    %3020 = vmatpush1.msra.mxu0 %v2370
    %3021 = vmatprep.subr.mxu0 %v2375
    %3022 = vmatpush1.msra.mxu0 %v2374
    %3023 = vmatprep.subr.mxu0 %v2379
    %3024 = vmatpush1.msra.mxu0 %v2378
    %3025 = vmatprep.subr.mxu0 %v2383
    %3026 = vmatpush1.msra.mxu0 %v2382
    %3027 = vmatprep.subr.mxu0 %v2387
    %3028 = vmatpush1.msra.mxu0 %v2386
    %3029 = vmatprep.subr.mxu0 %v2391
    %3030 = vmatpush1.msra.mxu0 %v2390
    %3031 = vmatprep.subr.mxu0 %v2395
    %3032 = vmatpush1.msra.mxu0 %v2394
    %3033 = vmatprep.subr.mxu0 %v2399
    %3034 = vmatpush1.msra.mxu0 %v2398
    %3035 = vmatprep.subr.mxu0 %v2403
    %3036 = vmatpush1.msra.mxu0 %v2402
    %3037 = vmatprep.subr.mxu0 %v2407
    %3038 = vmatpush1.msra.mxu0 %v2406
    %3039 = vmatprep.subr.mxu0 %v2411
    %3040 = vmatpush1.msra.mxu0 %v2410
    %3041 = vmatprep.subr.mxu0 0.0
    %3042 = vmatpush1.msra.mxu0 0.0
    %3043 = vmatprep.subr.mxu0 0.0
    %3044 = vmatpush1.msra.mxu0 0.0
    %3045 = vmatprep.subr.mxu0 0.0
    %3046 = vmatpush1.msra.mxu0 0.0
    %3047 = vmatprep.subr.mxu0 0.0
    %3048 = vmatpush1.msra.mxu0 0.0
    %3049 = vmatprep.subr.mxu0 0.0
    %3050 = vmatpush1.msra.mxu0 0.0
    %3051 = vmatprep.subr.mxu0 0.0
    %3052 = vmatpush1.msra.mxu0 0.0
    %3053 = vmatprep.subr.mxu0 0.0
    %3054 = vmatpush1.msra.mxu0 0.0
    %3055 = vmatprep.subr.mxu0 0.0
    %3056 = vmatpush1.msra.mxu0 0.0
    %3057 = vmatprep.subr.mxu0 0.0
    %3058 = vmatpush1.msra.mxu0 0.0
    %3059 = vmatprep.subr.mxu0 0.0
    %3060 = vmatpush1.msra.mxu0 0.0
    %3061 = vmatprep.subr.mxu0 0.0
    %3062 = vmatpush1.msra.mxu0 0.0
    %3063 = vmatprep.subr.mxu0 0.0
    %3064 = vmatpush1.msra.mxu0 0.0
    %3065 = vmatprep.subr.mxu0 0.0
    %3066 = vmatpush1.msra.mxu0 0.0
    %3067 = vmatprep.subr.mxu0 0.0
    %3068 = vmatpush1.msra.mxu0 0.0
    %3069 = vmatprep.subr.mxu0 0.0
    %3070 = vmatpush1.msra.mxu0 0.0
    %3071 = vmatprep.subr.mxu0 0.0
    %3072 = vmatpush1.msra.mxu0 0.0
    %3073 = vmatprep.mubr.f32.mxu0 0.0
    %3074 = vmatmul.mubr.f32.gmra.mrb[0].mxu0 %v2933
    %v3075 = vpop.f32.mrb[0].mxu0
    %v3076 = vadd.f32 0.0, %v3075
    %v3077 = vpop.f32.mrb[0].mxu0
    %v3078 = vadd.f32 0.0, %v3077
    %3079 = vdwg.mxu0
    %v3080 = vadd.f32 %v2934, %v3005
    %v3081 = vadd.f32 %v2935, %v3007
    %v3082 = vadd.f32 %v2936, %v3076
    %v3083 = vadd.f32 %v2937, %v3078
    %v3084 = vxor.u32 %v3080, 2147483648
    %v3085 = vxor.u32 %v3081, 2147483648
    %v3086 = vxor.u32 %v3082, 2147483648
    %v3087 = vmul.f32 %v3084, 1.442695
    %v3088 = vpow.pop %v3087
    %v3089 = vmul.f32 %v3085, 1.442695
    %v3090 = vpow.pop %v3089
    %v3091 = vmul.f32 %v3086, 1.442695
    %v3092 = vpow.pop %v3091
    %v3093 = vadd.f32 %v3088, 1.0
    %v3094 = vadd.f32 %v3090, 1.0
    %v3095 = vadd.f32 %v3092, 1.0
    %v3096 = vrcp.pop %v3093
    %v3097 = vmul.f32 1.0, %v3096
    %v3098 = vrcp.pop %v3094
    %v3099 = vmul.f32 1.0, %v3098
    %v3100 = vrcp.pop %v3095
    %v3101 = vmul.f32 1.0, %v3100
    %v3102 = vtanh.pop %v3083
    %v3103 = vmul.f32 %v3099, %v2931
    %v3104 = vmul.f32 %v3097, %v3102
    %v3105 = vadd.f32 %v3103, %v3104
    %v3106 = vtanh.pop %v3105
    %v3107 = vmul.f32 %v3101, %v3106
    %v3108 = vld [vmem:[%s1282] sm:$0xff]
    %v3109 = vld [vmem:[%s1282 + $0x8] sm:$0xff]
    %v3110 = vld [vmem:[%s1282 + $0x10] sm:$0xff]
    %v3111 = vld [vmem:[%s1282 + $0x18] sm:$0xff]
    %3112 = vmatprep.subr.mxu0 %v2349
    %3113 = vmatpush1.msra.mxu0 %v2348
    %3114 = vmatprep.subr.mxu0 %v2353
    %3115 = vmatpush1.msra.mxu0 %v2352
    %3116 = vmatprep.subr.mxu0 %v2357
    %3117 = vmatpush1.msra.mxu0 %v2356
    %3118 = vmatprep.subr.mxu0 %v2361
    %3119 = vmatpush1.msra.mxu0 %v2360
    %3120 = vmatprep.subr.mxu0 %v2365
    %3121 = vmatpush1.msra.mxu0 %v2364
    %3122 = vmatprep.subr.mxu0 %v2369
    %3123 = vmatpush1.msra.mxu0 %v2368
    %3124 = vmatprep.subr.mxu0 %v2373
    %3125 = vmatpush1.msra.mxu0 %v2372
    %3126 = vmatprep.subr.mxu0 %v2377
    %3127 = vmatpush1.msra.mxu0 %v2376
    %3128 = vmatprep.subr.mxu0 %v2381
    %3129 = vmatpush1.msra.mxu0 %v2380
    %3130 = vmatprep.subr.mxu0 %v2385
    %3131 = vmatpush1.msra.mxu0 %v2384
    %3132 = vmatprep.subr.mxu0 %v2389
    %3133 = vmatpush1.msra.mxu0 %v2388
    %3134 = vmatprep.subr.mxu0 %v2393
    %3135 = vmatpush1.msra.mxu0 %v2392
    %3136 = vmatprep.subr.mxu0 %v2397
    %3137 = vmatpush1.msra.mxu0 %v2396
    %3138 = vmatprep.subr.mxu0 %v2401
    %3139 = vmatpush1.msra.mxu0 %v2400
    %3140 = vmatprep.subr.mxu0 %v2405
    %3141 = vmatpush1.msra.mxu0 %v2404
    %3142 = vmatprep.subr.mxu0 %v2409
    %3143 = vmatpush1.msra.mxu0 %v2408
    %3144 = vmatprep.subr.mxu0 0.0
    %3145 = vmatpush1.msra.mxu0 0.0
    %3146 = vmatprep.subr.mxu0 0.0
    %3147 = vmatpush1.msra.mxu0 0.0
    %3148 = vmatprep.subr.mxu0 0.0
    %3149 = vmatpush1.msra.mxu0 0.0
    %3150 = vmatprep.subr.mxu0 0.0
    %3151 = vmatpush1.msra.mxu0 0.0
    %3152 = vmatprep.subr.mxu0 0.0
    %3153 = vmatpush1.msra.mxu0 0.0
    %3154 = vmatprep.subr.mxu0 0.0
    %3155 = vmatpush1.msra.mxu0 0.0
    %3156 = vmatprep.subr.mxu0 0.0
    %3157 = vmatpush1.msra.mxu0 0.0
    %3158 = vmatprep.subr.mxu0 0.0
    %3159 = vmatpush1.msra.mxu0 0.0
    %3160 = vmatprep.subr.mxu0 0.0
    %3161 = vmatpush1.msra.mxu0 0.0
    %3162 = vmatprep.subr.mxu0 0.0
    %3163 = vmatpush1.msra.mxu0 0.0
    %3164 = vmatprep.subr.mxu0 0.0
    %3165 = vmatpush1.msra.mxu0 0.0
    %3166 = vmatprep.subr.mxu0 0.0
    %3167 = vmatpush1.msra.mxu0 0.0
    %3168 = vmatprep.subr.mxu0 0.0
    %3169 = vmatpush1.msra.mxu0 0.0
    %3170 = vmatprep.subr.mxu0 0.0
    %3171 = vmatpush1.msra.mxu0 0.0
    %3172 = vmatprep.subr.mxu0 0.0
    %3173 = vmatpush1.msra.mxu0 0.0
    %3174 = vmatprep.subr.mxu0 0.0
    %3175 = vmatpush1.msra.mxu0 0.0
    %3176 = vmatprep.mubr.f32.mxu0 0.0
    %3177 = vmatmul.mubr.f32.gmra.mrb[0].mxu0 %v3107
    %v3178 = vpop.f32.mrb[0].mxu0
    %v3179 = vadd.f32 0.0, %v3178
    %v3180 = vpop.f32.mrb[0].mxu0
    %v3181 = vadd.f32 0.0, %v3180
    %3182 = vdwg.mxu0
    %3183 = vmatprep.subr.mxu0 %v2351
    %3184 = vmatpush1.msra.mxu0 %v2350
    %3185 = vmatprep.subr.mxu0 %v2355
    %3186 = vmatpush1.msra.mxu0 %v2354
    %3187 = vmatprep.subr.mxu0 %v2359
    %3188 = vmatpush1.msra.mxu0 %v2358
    %3189 = vmatprep.subr.mxu0 %v2363
    %3190 = vmatpush1.msra.mxu0 %v2362
    %3191 = vmatprep.subr.mxu0 %v2367
    %3192 = vmatpush1.msra.mxu0 %v2366
    %3193 = vmatprep.subr.mxu0 %v2371
    %3194 = vmatpush1.msra.mxu0 %v2370
    %3195 = vmatprep.subr.mxu0 %v2375
    %3196 = vmatpush1.msra.mxu0 %v2374
    %3197 = vmatprep.subr.mxu0 %v2379
    %3198 = vmatpush1.msra.mxu0 %v2378
    %3199 = vmatprep.subr.mxu0 %v2383
    %3200 = vmatpush1.msra.mxu0 %v2382
    %3201 = vmatprep.subr.mxu0 %v2387
    %3202 = vmatpush1.msra.mxu0 %v2386
    %3203 = vmatprep.subr.mxu0 %v2391
    %3204 = vmatpush1.msra.mxu0 %v2390
    %3205 = vmatprep.subr.mxu0 %v2395
    %3206 = vmatpush1.msra.mxu0 %v2394
    %3207 = vmatprep.subr.mxu0 %v2399
    %3208 = vmatpush1.msra.mxu0 %v2398
    %3209 = vmatprep.subr.mxu0 %v2403
    %3210 = vmatpush1.msra.mxu0 %v2402
    %3211 = vmatprep.subr.mxu0 %v2407
    %3212 = vmatpush1.msra.mxu0 %v2406
    %3213 = vmatprep.subr.mxu0 %v2411
    %3214 = vmatpush1.msra.mxu0 %v2410
    %3215 = vmatprep.subr.mxu0 0.0
    %3216 = vmatpush1.msra.mxu0 0.0
    %3217 = vmatprep.subr.mxu0 0.0
    %3218 = vmatpush1.msra.mxu0 0.0
    %3219 = vmatprep.subr.mxu0 0.0
    %3220 = vmatpush1.msra.mxu0 0.0
    %3221 = vmatprep.subr.mxu0 0.0
    %3222 = vmatpush1.msra.mxu0 0.0
    %3223 = vmatprep.subr.mxu0 0.0
    %3224 = vmatpush1.msra.mxu0 0.0
    %3225 = vmatprep.subr.mxu0 0.0
    %3226 = vmatpush1.msra.mxu0 0.0
    %3227 = vmatprep.subr.mxu0 0.0
    %3228 = vmatpush1.msra.mxu0 0.0
    %3229 = vmatprep.subr.mxu0 0.0
    %3230 = vmatpush1.msra.mxu0 0.0
    %3231 = vmatprep.subr.mxu0 0.0
    %3232 = vmatpush1.msra.mxu0 0.0
    %3233 = vmatprep.subr.mxu0 0.0
    %3234 = vmatpush1.msra.mxu0 0.0
    %3235 = vmatprep.subr.mxu0 0.0
    %3236 = vmatpush1.msra.mxu0 0.0
    %3237 = vmatprep.subr.mxu0 0.0
    %3238 = vmatpush1.msra.mxu0 0.0
    %3239 = vmatprep.subr.mxu0 0.0
    %3240 = vmatpush1.msra.mxu0 0.0
    %3241 = vmatprep.subr.mxu0 0.0
    %3242 = vmatpush1.msra.mxu0 0.0
    %3243 = vmatprep.subr.mxu0 0.0
    %3244 = vmatpush1.msra.mxu0 0.0
    %3245 = vmatprep.subr.mxu0 0.0
    %3246 = vmatpush1.msra.mxu0 0.0
    %3247 = vmatprep.mubr.f32.mxu0 0.0
    %3248 = vmatmul.mubr.f32.gmra.mrb[0].mxu0 %v3107
    %v3249 = vpop.f32.mrb[0].mxu0
    %v3250 = vadd.f32 0.0, %v3249
    %v3251 = vpop.f32.mrb[0].mxu0
    %v3252 = vadd.f32 0.0, %v3251
    %3253 = vdwg.mxu0
    %v3254 = vadd.f32 %v3108, %v3179
    %v3255 = vadd.f32 %v3109, %v3181
    %v3256 = vadd.f32 %v3110, %v3250
    %v3257 = vadd.f32 %v3111, %v3252
    %v3258 = vxor.u32 %v3254, 2147483648
    %v3259 = vxor.u32 %v3255, 2147483648
    %v3260 = vxor.u32 %v3256, 2147483648
    %v3261 = vmul.f32 %v3258, 1.442695
    %v3262 = vpow.pop %v3261
    %v3263 = vmul.f32 %v3259, 1.442695
    %v3264 = vpow.pop %v3263
    %v3265 = vmul.f32 %v3260, 1.442695
    %v3266 = vpow.pop %v3265
    %v3267 = vadd.f32 %v3262, 1.0
    %v3268 = vadd.f32 %v3264, 1.0
    %v3269 = vadd.f32 %v3266, 1.0
    %v3270 = vrcp.pop %v3267
    %v3271 = vmul.f32 1.0, %v3270
    %v3272 = vrcp.pop %v3268
    %v3273 = vmul.f32 1.0, %v3272
    %v3274 = vrcp.pop %v3269
    %v3275 = vmul.f32 1.0, %v3274
    %v3276 = vtanh.pop %v3257
    %v3277 = vmul.f32 %v3273, %v3105
    %v3278 = vmul.f32 %v3271, %v3276
    %v3279 = vadd.f32 %v3277, %v3278
    %v3280 = vtanh.pop %v3279
    %v3281 = vmul.f32 %v3275, %v3280
    %v3282 = vld [vmem:[%s1461] sm:$0xff]
    %v3283 = vld [vmem:[%s1461 + $0x8] sm:$0xff]
    %v3284 = vld [vmem:[%s1461 + $0x10] sm:$0xff]
    %v3285 = vld [vmem:[%s1461 + $0x18] sm:$0xff]
    %3286 = vmatprep.subr.mxu0 %v2349
    %3287 = vmatpush1.msra.mxu0 %v2348
    %3288 = vmatprep.subr.mxu0 %v2353
    %3289 = vmatpush1.msra.mxu0 %v2352
    %3290 = vmatprep.subr.mxu0 %v2357
    %3291 = vmatpush1.msra.mxu0 %v2356
    %3292 = vmatprep.subr.mxu0 %v2361
    %3293 = vmatpush1.msra.mxu0 %v2360
    %3294 = vmatprep.subr.mxu0 %v2365
    %3295 = vmatpush1.msra.mxu0 %v2364
    %3296 = vmatprep.subr.mxu0 %v2369
    %3297 = vmatpush1.msra.mxu0 %v2368
    %3298 = vmatprep.subr.mxu0 %v2373
    %3299 = vmatpush1.msra.mxu0 %v2372
    %3300 = vmatprep.subr.mxu0 %v2377
    %3301 = vmatpush1.msra.mxu0 %v2376
    %3302 = vmatprep.subr.mxu0 %v2381
    %3303 = vmatpush1.msra.mxu0 %v2380
    %3304 = vmatprep.subr.mxu0 %v2385
    %3305 = vmatpush1.msra.mxu0 %v2384
    %3306 = vmatprep.subr.mxu0 %v2389
    %3307 = vmatpush1.msra.mxu0 %v2388
    %3308 = vmatprep.subr.mxu0 %v2393
    %3309 = vmatpush1.msra.mxu0 %v2392
    %3310 = vmatprep.subr.mxu0 %v2397
    %3311 = vmatpush1.msra.mxu0 %v2396
    %3312 = vmatprep.subr.mxu0 %v2401
    %3313 = vmatpush1.msra.mxu0 %v2400
    %3314 = vmatprep.subr.mxu0 %v2405
    %3315 = vmatpush1.msra.mxu0 %v2404
    %3316 = vmatprep.subr.mxu0 %v2409
    %3317 = vmatpush1.msra.mxu0 %v2408
    %3318 = vmatprep.subr.mxu0 0.0
    %3319 = vmatpush1.msra.mxu0 0.0
    %3320 = vmatprep.subr.mxu0 0.0
    %3321 = vmatpush1.msra.mxu0 0.0
    %3322 = vmatprep.subr.mxu0 0.0
    %3323 = vmatpush1.msra.mxu0 0.0
    %3324 = vmatprep.subr.mxu0 0.0
    %3325 = vmatpush1.msra.mxu0 0.0
    %3326 = vmatprep.subr.mxu0 0.0
    %3327 = vmatpush1.msra.mxu0 0.0
    %3328 = vmatprep.subr.mxu0 0.0
    %3329 = vmatpush1.msra.mxu0 0.0
    %3330 = vmatprep.subr.mxu0 0.0
    %3331 = vmatpush1.msra.mxu0 0.0
    %3332 = vmatprep.subr.mxu0 0.0
    %3333 = vmatpush1.msra.mxu0 0.0
    %3334 = vmatprep.subr.mxu0 0.0
    %3335 = vmatpush1.msra.mxu0 0.0
    %3336 = vmatprep.subr.mxu0 0.0
    %3337 = vmatpush1.msra.mxu0 0.0
    %3338 = vmatprep.subr.mxu0 0.0
    %3339 = vmatpush1.msra.mxu0 0.0
    %3340 = vmatprep.subr.mxu0 0.0
    %3341 = vmatpush1.msra.mxu0 0.0
    %3342 = vmatprep.subr.mxu0 0.0
    %3343 = vmatpush1.msra.mxu0 0.0
    %3344 = vmatprep.subr.mxu0 0.0
    %3345 = vmatpush1.msra.mxu0 0.0
    %3346 = vmatprep.subr.mxu0 0.0
    %3347 = vmatpush1.msra.mxu0 0.0
    %3348 = vmatprep.subr.mxu0 0.0
    %3349 = vmatpush1.msra.mxu0 0.0
    %3350 = vmatprep.mubr.f32.mxu0 0.0
    %3351 = vmatmul.mubr.f32.gmra.mrb[0].mxu0 %v3281
    %v3352 = vpop.f32.mrb[0].mxu0
    %v3353 = vadd.f32 0.0, %v3352
    %v3354 = vpop.f32.mrb[0].mxu0
    %v3355 = vadd.f32 0.0, %v3354
    %3356 = vdwg.mxu0
    %3357 = vmatprep.subr.mxu0 %v2351
    %3358 = vmatpush1.msra.mxu0 %v2350
    %3359 = vmatprep.subr.mxu0 %v2355
    %3360 = vmatpush1.msra.mxu0 %v2354
    %3361 = vmatprep.subr.mxu0 %v2359
    %3362 = vmatpush1.msra.mxu0 %v2358
    %3363 = vmatprep.subr.mxu0 %v2363
    %3364 = vmatpush1.msra.mxu0 %v2362
    %3365 = vmatprep.subr.mxu0 %v2367
    %3366 = vmatpush1.msra.mxu0 %v2366
    %3367 = vmatprep.subr.mxu0 %v2371
    %3368 = vmatpush1.msra.mxu0 %v2370
    %3369 = vmatprep.subr.mxu0 %v2375
    %3370 = vmatpush1.msra.mxu0 %v2374
    %3371 = vmatprep.subr.mxu0 %v2379
    %3372 = vmatpush1.msra.mxu0 %v2378
    %3373 = vmatprep.subr.mxu0 %v2383
    %3374 = vmatpush1.msra.mxu0 %v2382
    %3375 = vmatprep.subr.mxu0 %v2387
    %3376 = vmatpush1.msra.mxu0 %v2386
    %3377 = vmatprep.subr.mxu0 %v2391
    %3378 = vmatpush1.msra.mxu0 %v2390
    %3379 = vmatprep.subr.mxu0 %v2395
    %3380 = vmatpush1.msra.mxu0 %v2394
    %3381 = vmatprep.subr.mxu0 %v2399
    %3382 = vmatpush1.msra.mxu0 %v2398
    %3383 = vmatprep.subr.mxu0 %v2403
    %3384 = vmatpush1.msra.mxu0 %v2402
    %3385 = vmatprep.subr.mxu0 %v2407
    %3386 = vmatpush1.msra.mxu0 %v2406
    %3387 = vmatprep.subr.mxu0 %v2411
    %3388 = vmatpush1.msra.mxu0 %v2410
    %3389 = vmatprep.subr.mxu0 0.0
    %3390 = vmatpush1.msra.mxu0 0.0
    %3391 = vmatprep.subr.mxu0 0.0
    %3392 = vmatpush1.msra.mxu0 0.0
    %3393 = vmatprep.subr.mxu0 0.0
    %3394 = vmatpush1.msra.mxu0 0.0
    %3395 = vmatprep.subr.mxu0 0.0
    %3396 = vmatpush1.msra.mxu0 0.0
    %3397 = vmatprep.subr.mxu0 0.0
    %3398 = vmatpush1.msra.mxu0 0.0
    %3399 = vmatprep.subr.mxu0 0.0
    %3400 = vmatpush1.msra.mxu0 0.0
    %3401 = vmatprep.subr.mxu0 0.0
    %3402 = vmatpush1.msra.mxu0 0.0
    %3403 = vmatprep.subr.mxu0 0.0
    %3404 = vmatpush1.msra.mxu0 0.0
    %3405 = vmatprep.subr.mxu0 0.0
    %3406 = vmatpush1.msra.mxu0 0.0
    %3407 = vmatprep.subr.mxu0 0.0
    %3408 = vmatpush1.msra.mxu0 0.0
    %3409 = vmatprep.subr.mxu0 0.0
    %3410 = vmatpush1.msra.mxu0 0.0
    %3411 = vmatprep.subr.mxu0 0.0
    %3412 = vmatpush1.msra.mxu0 0.0
    %3413 = vmatprep.subr.mxu0 0.0
    %3414 = vmatpush1.msra.mxu0 0.0
    %3415 = vmatprep.subr.mxu0 0.0
    %3416 = vmatpush1.msra.mxu0 0.0
    %3417 = vmatprep.subr.mxu0 0.0
    %3418 = vmatpush1.msra.mxu0 0.0
    %3419 = vmatprep.subr.mxu0 0.0
    %3420 = vmatpush1.msra.mxu0 0.0
    %3421 = vmatprep.mubr.f32.mxu0 0.0
    %3422 = vmatmul.mubr.f32.gmra.mrb[0].mxu0 %v3281
    %v3423 = vpop.f32.mrb[0].mxu0
    %v3424 = vadd.f32 0.0, %v3423
    %v3425 = vpop.f32.mrb[0].mxu0
    %v3426 = vadd.f32 0.0, %v3425
    %3427 = vdwg.mxu0
    %v3428 = vadd.f32 %v3282, %v3353
    %v3429 = vadd.f32 %v3283, %v3355
    %v3430 = vadd.f32 %v3284, %v3424
    %v3431 = vadd.f32 %v3285, %v3426
    %v3432 = vxor.u32 %v3428, 2147483648
    %v3433 = vxor.u32 %v3429, 2147483648
    %v3434 = vxor.u32 %v3430, 2147483648
    %v3435 = vmul.f32 %v3432, 1.442695
    %v3436 = vpow.pop %v3435
    %v3437 = vmul.f32 %v3433, 1.442695
    %v3438 = vpow.pop %v3437
    %v3439 = vmul.f32 %v3434, 1.442695
    %v3440 = vpow.pop %v3439
    %v3441 = vadd.f32 %v3436, 1.0
    %v3442 = vadd.f32 %v3438, 1.0
    %v3443 = vadd.f32 %v3440, 1.0
    %v3444 = vrcp.pop %v3441
    %v3445 = vmul.f32 1.0, %v3444
    %v3446 = vrcp.pop %v3442
    %v3447 = vmul.f32 1.0, %v3446
    %v3448 = vrcp.pop %v3443
    %v3449 = vmul.f32 1.0, %v3448
    %v3450 = vtanh.pop %v3431
    %v3451 = vmul.f32 %v3447, %v3279
    %v3452 = vmul.f32 %v3445, %v3450
    %v3453 = vadd.f32 %v3451, %v3452
    %v3454 = vtanh.pop %v3453
    %v3455 = vmul.f32 %v3449, %v3454
    %v3456 = vld [vmem:[%s1640] sm:$0xff]
    %v3457 = vld [vmem:[%s1640 + $0x8] sm:$0xff]
    %v3458 = vld [vmem:[%s1640 + $0x10] sm:$0xff]
    %v3459 = vld [vmem:[%s1640 + $0x18] sm:$0xff]
    %3460 = vmatprep.subr.mxu0 %v2349
    %3461 = vmatpush1.msra.mxu0 %v2348
    %3462 = vmatprep.subr.mxu0 %v2353
    %3463 = vmatpush1.msra.mxu0 %v2352
    %3464 = vmatprep.subr.mxu0 %v2357
    %3465 = vmatpush1.msra.mxu0 %v2356
    %3466 = vmatprep.subr.mxu0 %v2361
    %3467 = vmatpush1.msra.mxu0 %v2360
    %3468 = vmatprep.subr.mxu0 %v2365
    %3469 = vmatpush1.msra.mxu0 %v2364
    %3470 = vmatprep.subr.mxu0 %v2369
    %3471 = vmatpush1.msra.mxu0 %v2368
    %3472 = vmatprep.subr.mxu0 %v2373
    %3473 = vmatpush1.msra.mxu0 %v2372
    %3474 = vmatprep.subr.mxu0 %v2377
    %3475 = vmatpush1.msra.mxu0 %v2376
    %3476 = vmatprep.subr.mxu0 %v2381
    %3477 = vmatpush1.msra.mxu0 %v2380
    %3478 = vmatprep.subr.mxu0 %v2385
    %3479 = vmatpush1.msra.mxu0 %v2384
    %3480 = vmatprep.subr.mxu0 %v2389
    %3481 = vmatpush1.msra.mxu0 %v2388
    %3482 = vmatprep.subr.mxu0 %v2393
    %3483 = vmatpush1.msra.mxu0 %v2392
    %3484 = vmatprep.subr.mxu0 %v2397
    %3485 = vmatpush1.msra.mxu0 %v2396
    %3486 = vmatprep.subr.mxu0 %v2401
    %3487 = vmatpush1.msra.mxu0 %v2400
    %3488 = vmatprep.subr.mxu0 %v2405
    %3489 = vmatpush1.msra.mxu0 %v2404
    %3490 = vmatprep.subr.mxu0 %v2409
    %3491 = vmatpush1.msra.mxu0 %v2408
    %3492 = vmatprep.subr.mxu0 0.0
    %3493 = vmatpush1.msra.mxu0 0.0
    %3494 = vmatprep.subr.mxu0 0.0
    %3495 = vmatpush1.msra.mxu0 0.0
    %3496 = vmatprep.subr.mxu0 0.0
    %3497 = vmatpush1.msra.mxu0 0.0
    %3498 = vmatprep.subr.mxu0 0.0
    %3499 = vmatpush1.msra.mxu0 0.0
    %3500 = vmatprep.subr.mxu0 0.0
    %3501 = vmatpush1.msra.mxu0 0.0
    %3502 = vmatprep.subr.mxu0 0.0
    %3503 = vmatpush1.msra.mxu0 0.0
    %3504 = vmatprep.subr.mxu0 0.0
    %3505 = vmatpush1.msra.mxu0 0.0
    %3506 = vmatprep.subr.mxu0 0.0
    %3507 = vmatpush1.msra.mxu0 0.0
    %3508 = vmatprep.subr.mxu0 0.0
    %3509 = vmatpush1.msra.mxu0 0.0
    %3510 = vmatprep.subr.mxu0 0.0
    %3511 = vmatpush1.msra.mxu0 0.0
    %3512 = vmatprep.subr.mxu0 0.0
    %3513 = vmatpush1.msra.mxu0 0.0
    %3514 = vmatprep.subr.mxu0 0.0
    %3515 = vmatpush1.msra.mxu0 0.0
    %3516 = vmatprep.subr.mxu0 0.0
    %3517 = vmatpush1.msra.mxu0 0.0
    %3518 = vmatprep.subr.mxu0 0.0
    %3519 = vmatpush1.msra.mxu0 0.0
    %3520 = vmatprep.subr.mxu0 0.0
    %3521 = vmatpush1.msra.mxu0 0.0
    %3522 = vmatprep.subr.mxu0 0.0
    %3523 = vmatpush1.msra.mxu0 0.0
    %3524 = vmatprep.mubr.f32.mxu0 0.0
    %3525 = vmatmul.mubr.f32.gmra.mrb[0].mxu0 %v3455
    %v3526 = vpop.f32.mrb[0].mxu0
    %v3527 = vadd.f32 0.0, %v3526
    %v3528 = vpop.f32.mrb[0].mxu0
    %v3529 = vadd.f32 0.0, %v3528
    %3530 = vdwg.mxu0
    %3531 = vmatprep.subr.mxu0 %v2351
    %3532 = vmatpush1.msra.mxu0 %v2350
    %3533 = vmatprep.subr.mxu0 %v2355
    %3534 = vmatpush1.msra.mxu0 %v2354
    %3535 = vmatprep.subr.mxu0 %v2359
    %3536 = vmatpush1.msra.mxu0 %v2358
    %3537 = vmatprep.subr.mxu0 %v2363
    %3538 = vmatpush1.msra.mxu0 %v2362
    %3539 = vmatprep.subr.mxu0 %v2367
    %3540 = vmatpush1.msra.mxu0 %v2366
    %3541 = vmatprep.subr.mxu0 %v2371
    %3542 = vmatpush1.msra.mxu0 %v2370
    %3543 = vmatprep.subr.mxu0 %v2375
    %3544 = vmatpush1.msra.mxu0 %v2374
    %3545 = vmatprep.subr.mxu0 %v2379
    %3546 = vmatpush1.msra.mxu0 %v2378
    %3547 = vmatprep.subr.mxu0 %v2383
    %3548 = vmatpush1.msra.mxu0 %v2382
    %3549 = vmatprep.subr.mxu0 %v2387
    %3550 = vmatpush1.msra.mxu0 %v2386
    %3551 = vmatprep.subr.mxu0 %v2391
    %3552 = vmatpush1.msra.mxu0 %v2390
    %3553 = vmatprep.subr.mxu0 %v2395
    %3554 = vmatpush1.msra.mxu0 %v2394
    %3555 = vmatprep.subr.mxu0 %v2399
    %3556 = vmatpush1.msra.mxu0 %v2398
    %3557 = vmatprep.subr.mxu0 %v2403
    %3558 = vmatpush1.msra.mxu0 %v2402
    %3559 = vmatprep.subr.mxu0 %v2407
    %3560 = vmatpush1.msra.mxu0 %v2406
    %3561 = vmatprep.subr.mxu0 %v2411
    %3562 = vmatpush1.msra.mxu0 %v2410
    %3563 = vmatprep.subr.mxu0 0.0
    %3564 = vmatpush1.msra.mxu0 0.0
    %3565 = vmatprep.subr.mxu0 0.0
    %3566 = vmatpush1.msra.mxu0 0.0
    %3567 = vmatprep.subr.mxu0 0.0
    %3568 = vmatpush1.msra.mxu0 0.0
    %3569 = vmatprep.subr.mxu0 0.0
    %3570 = vmatpush1.msra.mxu0 0.0
    %3571 = vmatprep.subr.mxu0 0.0
    %3572 = vmatpush1.msra.mxu0 0.0
    %3573 = vmatprep.subr.mxu0 0.0
    %3574 = vmatpush1.msra.mxu0 0.0
    %3575 = vmatprep.subr.mxu0 0.0
    %3576 = vmatpush1.msra.mxu0 0.0
    %3577 = vmatprep.subr.mxu0 0.0
    %3578 = vmatpush1.msra.mxu0 0.0
    %3579 = vmatprep.subr.mxu0 0.0
    %3580 = vmatpush1.msra.mxu0 0.0
    %3581 = vmatprep.subr.mxu0 0.0
    %3582 = vmatpush1.msra.mxu0 0.0
    %3583 = vmatprep.subr.mxu0 0.0
    %3584 = vmatpush1.msra.mxu0 0.0
    %3585 = vmatprep.subr.mxu0 0.0
    %3586 = vmatpush1.msra.mxu0 0.0
    %3587 = vmatprep.subr.mxu0 0.0
    %3588 = vmatpush1.msra.mxu0 0.0
    %3589 = vmatprep.subr.mxu0 0.0
    %3590 = vmatpush1.msra.mxu0 0.0
    %3591 = vmatprep.subr.mxu0 0.0
    %3592 = vmatpush1.msra.mxu0 0.0
    %3593 = vmatprep.subr.mxu0 0.0
    %3594 = vmatpush1.msra.mxu0 0.0
    %3595 = vmatprep.mubr.f32.mxu0 0.0
    %3596 = vmatmul.mubr.f32.gmra.mrb[0].mxu0 %v3455
    %v3597 = vpop.f32.mrb[0].mxu0
    %v3598 = vadd.f32 0.0, %v3597
    %v3599 = vpop.f32.mrb[0].mxu0
    %v3600 = vadd.f32 0.0, %v3599
    %3601 = vdwg.mxu0
    %v3602 = vadd.f32 %v3456, %v3527
    %v3603 = vadd.f32 %v3457, %v3529
    %v3604 = vadd.f32 %v3458, %v3598
    %v3605 = vadd.f32 %v3459, %v3600
    %v3606 = vxor.u32 %v3602, 2147483648
    %v3607 = vxor.u32 %v3603, 2147483648
    %v3608 = vxor.u32 %v3604, 2147483648
    %v3609 = vmul.f32 %v3606, 1.442695
    %v3610 = vpow.pop %v3609
    %v3611 = vmul.f32 %v3607, 1.442695
    %v3612 = vpow.pop %v3611
    %v3613 = vmul.f32 %v3608, 1.442695
    %v3614 = vpow.pop %v3613
    %v3615 = vadd.f32 %v3610, 1.0
    %v3616 = vadd.f32 %v3612, 1.0
    %v3617 = vadd.f32 %v3614, 1.0
    %v3618 = vrcp.pop %v3615
    %v3619 = vmul.f32 1.0, %v3618
    %v3620 = vrcp.pop %v3616
    %v3621 = vmul.f32 1.0, %v3620
    %v3622 = vrcp.pop %v3617
    %v3623 = vmul.f32 1.0, %v3622
    %v3624 = vtanh.pop %v3605
    %v3625 = vmul.f32 %v3621, %v3453
    %v3626 = vmul.f32 %v3619, %v3624
    %v3627 = vadd.f32 %v3625, %v3626
    %v3628 = vtanh.pop %v3627
    %v3629 = vmul.f32 %v3623, %v3628
    %v3630 = vld [vmem:[%s1819] sm:$0xff]
    %v3631 = vld [vmem:[%s1819 + $0x8] sm:$0xff]
    %v3632 = vld [vmem:[%s1819 + $0x10] sm:$0xff]
    %v3633 = vld [vmem:[%s1819 + $0x18] sm:$0xff]
    %3634 = vmatprep.subr.mxu0 %v2349
    %3635 = vmatpush1.msra.mxu0 %v2348
    %3636 = vmatprep.subr.mxu0 %v2353
    %3637 = vmatpush1.msra.mxu0 %v2352
    %3638 = vmatprep.subr.mxu0 %v2357
    %3639 = vmatpush1.msra.mxu0 %v2356
    %3640 = vmatprep.subr.mxu0 %v2361
    %3641 = vmatpush1.msra.mxu0 %v2360
    %3642 = vmatprep.subr.mxu0 %v2365
    %3643 = vmatpush1.msra.mxu0 %v2364
    %3644 = vmatprep.subr.mxu0 %v2369
    %3645 = vmatpush1.msra.mxu0 %v2368
    %3646 = vmatprep.subr.mxu0 %v2373
    %3647 = vmatpush1.msra.mxu0 %v2372
    %3648 = vmatprep.subr.mxu0 %v2377
    %3649 = vmatpush1.msra.mxu0 %v2376
    %3650 = vmatprep.subr.mxu0 %v2381
    %3651 = vmatpush1.msra.mxu0 %v2380
    %3652 = vmatprep.subr.mxu0 %v2385
    %3653 = vmatpush1.msra.mxu0 %v2384
    %3654 = vmatprep.subr.mxu0 %v2389
    %3655 = vmatpush1.msra.mxu0 %v2388
    %3656 = vmatprep.subr.mxu0 %v2393
    %3657 = vmatpush1.msra.mxu0 %v2392
    %3658 = vmatprep.subr.mxu0 %v2397
    %3659 = vmatpush1.msra.mxu0 %v2396
    %3660 = vmatprep.subr.mxu0 %v2401
    %3661 = vmatpush1.msra.mxu0 %v2400
    %3662 = vmatprep.subr.mxu0 %v2405
    %3663 = vmatpush1.msra.mxu0 %v2404
    %3664 = vmatprep.subr.mxu0 %v2409
    %3665 = vmatpush1.msra.mxu0 %v2408
    %3666 = vmatprep.subr.mxu0 0.0
    %3667 = vmatpush1.msra.mxu0 0.0
    %3668 = vmatprep.subr.mxu0 0.0
    %3669 = vmatpush1.msra.mxu0 0.0
    %3670 = vmatprep.subr.mxu0 0.0
    %3671 = vmatpush1.msra.mxu0 0.0
    %3672 = vmatprep.subr.mxu0 0.0
    %3673 = vmatpush1.msra.mxu0 0.0
    %3674 = vmatprep.subr.mxu0 0.0
    %3675 = vmatpush1.msra.mxu0 0.0
    %3676 = vmatprep.subr.mxu0 0.0
    %3677 = vmatpush1.msra.mxu0 0.0
    %3678 = vmatprep.subr.mxu0 0.0
    %3679 = vmatpush1.msra.mxu0 0.0
    %3680 = vmatprep.subr.mxu0 0.0
    %3681 = vmatpush1.msra.mxu0 0.0
    %3682 = vmatprep.subr.mxu0 0.0
    %3683 = vmatpush1.msra.mxu0 0.0
    %3684 = vmatprep.subr.mxu0 0.0
    %3685 = vmatpush1.msra.mxu0 0.0
    %3686 = vmatprep.subr.mxu0 0.0
    %3687 = vmatpush1.msra.mxu0 0.0
    %3688 = vmatprep.subr.mxu0 0.0
    %3689 = vmatpush1.msra.mxu0 0.0
    %3690 = vmatprep.subr.mxu0 0.0
    %3691 = vmatpush1.msra.mxu0 0.0
    %3692 = vmatprep.subr.mxu0 0.0
    %3693 = vmatpush1.msra.mxu0 0.0
    %3694 = vmatprep.subr.mxu0 0.0
    %3695 = vmatpush1.msra.mxu0 0.0
    %3696 = vmatprep.subr.mxu0 0.0
    %3697 = vmatpush1.msra.mxu0 0.0
    %3698 = vmatprep.mubr.f32.mxu0 0.0
    %3699 = vmatmul.mubr.f32.gmra.mrb[0].mxu0 %v3629
    %v3700 = vpop.f32.mrb[0].mxu0
    %v3701 = vadd.f32 0.0, %v3700
    %v3702 = vpop.f32.mrb[0].mxu0
    %v3703 = vadd.f32 0.0, %v3702
    %3704 = vdwg.mxu0
    %3705 = vmatprep.subr.mxu0 %v2351
    %3706 = vmatpush1.msra.mxu0 %v2350
    %3707 = vmatprep.subr.mxu0 %v2355
    %3708 = vmatpush1.msra.mxu0 %v2354
    %3709 = vmatprep.subr.mxu0 %v2359
    %3710 = vmatpush1.msra.mxu0 %v2358
    %3711 = vmatprep.subr.mxu0 %v2363
    %3712 = vmatpush1.msra.mxu0 %v2362
    %3713 = vmatprep.subr.mxu0 %v2367
    %3714 = vmatpush1.msra.mxu0 %v2366
    %3715 = vmatprep.subr.mxu0 %v2371
    %3716 = vmatpush1.msra.mxu0 %v2370
    %3717 = vmatprep.subr.mxu0 %v2375
    %3718 = vmatpush1.msra.mxu0 %v2374
    %3719 = vmatprep.subr.mxu0 %v2379
    %3720 = vmatpush1.msra.mxu0 %v2378
    %3721 = vmatprep.subr.mxu0 %v2383
    %3722 = vmatpush1.msra.mxu0 %v2382
    %3723 = vmatprep.subr.mxu0 %v2387
    %3724 = vmatpush1.msra.mxu0 %v2386
    %3725 = vmatprep.subr.mxu0 %v2391
    %3726 = vmatpush1.msra.mxu0 %v2390
    %3727 = vmatprep.subr.mxu0 %v2395
    %3728 = vmatpush1.msra.mxu0 %v2394
    %3729 = vmatprep.subr.mxu0 %v2399
    %3730 = vmatpush1.msra.mxu0 %v2398
    %3731 = vmatprep.subr.mxu0 %v2403
    %3732 = vmatpush1.msra.mxu0 %v2402
    %3733 = vmatprep.subr.mxu0 %v2407
    %3734 = vmatpush1.msra.mxu0 %v2406
    %3735 = vmatprep.subr.mxu0 %v2411
    %3736 = vmatpush1.msra.mxu0 %v2410
    %3737 = vmatprep.subr.mxu0 0.0
    %3738 = vmatpush1.msra.mxu0 0.0
    %3739 = vmatprep.subr.mxu0 0.0
    %3740 = vmatpush1.msra.mxu0 0.0
    %3741 = vmatprep.subr.mxu0 0.0
    %3742 = vmatpush1.msra.mxu0 0.0
    %3743 = vmatprep.subr.mxu0 0.0
    %3744 = vmatpush1.msra.mxu0 0.0
    %3745 = vmatprep.subr.mxu0 0.0
    %3746 = vmatpush1.msra.mxu0 0.0
    %3747 = vmatprep.subr.mxu0 0.0
    %3748 = vmatpush1.msra.mxu0 0.0
    %3749 = vmatprep.subr.mxu0 0.0
    %3750 = vmatpush1.msra.mxu0 0.0
    %3751 = vmatprep.subr.mxu0 0.0
    %3752 = vmatpush1.msra.mxu0 0.0
    %3753 = vmatprep.subr.mxu0 0.0
    %3754 = vmatpush1.msra.mxu0 0.0
    %3755 = vmatprep.subr.mxu0 0.0
    %3756 = vmatpush1.msra.mxu0 0.0
    %3757 = vmatprep.subr.mxu0 0.0
    %3758 = vmatpush1.msra.mxu0 0.0
    %3759 = vmatprep.subr.mxu0 0.0
    %3760 = vmatpush1.msra.mxu0 0.0
    %3761 = vmatprep.subr.mxu0 0.0
    %3762 = vmatpush1.msra.mxu0 0.0
    %3763 = vmatprep.subr.mxu0 0.0
    %3764 = vmatpush1.msra.mxu0 0.0
    %3765 = vmatprep.subr.mxu0 0.0
    %3766 = vmatpush1.msra.mxu0 0.0
    %3767 = vmatprep.subr.mxu0 0.0
    %3768 = vmatpush1.msra.mxu0 0.0
    %3769 = vmatprep.mubr.f32.mxu0 0.0
    %3770 = vmatmul.mubr.f32.gmra.mrb[0].mxu0 %v3629
    %v3771 = vpop.f32.mrb[0].mxu0
    %v3772 = vadd.f32 0.0, %v3771
    %v3773 = vpop.f32.mrb[0].mxu0
    %v3774 = vadd.f32 0.0, %v3773
    %3775 = vdwg.mxu0
    %v3776 = vadd.f32 %v3630, %v3701
    %v3777 = vadd.f32 %v3631, %v3703
    %v3778 = vadd.f32 %v3632, %v3772
    %v3779 = vadd.f32 %v3633, %v3774
    %v3780 = vxor.u32 %v3776, 2147483648
    %v3781 = vxor.u32 %v3777, 2147483648
    %v3782 = vxor.u32 %v3778, 2147483648
    %v3783 = vmul.f32 %v3780, 1.442695
    %v3784 = vpow.pop %v3783
    %v3785 = vmul.f32 %v3781, 1.442695
    %v3786 = vpow.pop %v3785
    %v3787 = vmul.f32 %v3782, 1.442695
    %v3788 = vpow.pop %v3787
    %v3789 = vadd.f32 %v3784, 1.0
    %v3790 = vadd.f32 %v3786, 1.0
    %v3791 = vadd.f32 %v3788, 1.0
    %v3792 = vrcp.pop %v3789
    %v3793 = vmul.f32 1.0, %v3792
    %v3794 = vrcp.pop %v3790
    %v3795 = vmul.f32 1.0, %v3794
    %v3796 = vrcp.pop %v3791
    %v3797 = vmul.f32 1.0, %v3796
    %v3798 = vtanh.pop %v3779
    %v3799 = vmul.f32 %v3795, %v3627
    %v3800 = vmul.f32 %v3793, %v3798
    %v3801 = vadd.f32 %v3799, %v3800
    %v3802 = vtanh.pop %v3801
    %v3803 = vmul.f32 %v3797, %v3802
    %v3804 = vld [vmem:[#allocation16] sm:$0xff]
    %v3805 = vld [vmem:[#allocation16 + $0x8] sm:$0xff]
    %v3806 = vld [vmem:[#allocation16 + $0x10] sm:$0xff]
    %v3807 = vld [vmem:[#allocation16 + $0x18] sm:$0xff]
    %v3808 = vld [vmem:[#allocation16 + $0x20] sm:$0xff]
    %v3809 = vld [vmem:[#allocation16 + $0x28] sm:$0xff]
    %v3810 = vld [vmem:[#allocation16 + $0x30] sm:$0xff]
    %v3811 = vld [vmem:[#allocation16 + $0x38] sm:$0xff]
    %v3812 = vld [vmem:[#allocation16 + $0x40] sm:$0xff]
    %v3813 = vld [vmem:[#allocation16 + $0x48] sm:$0xff]
    %v3814 = vld [vmem:[#allocation16 + $0x50] sm:$0xff]
    %v3815 = vld [vmem:[#allocation16 + $0x58] sm:$0xff]
    %v3816 = vld [vmem:[#allocation16 + $0x60] sm:$0xff]
    %v3817 = vld [vmem:[#allocation16 + $0x68] sm:$0xff]
    %v3818 = vld [vmem:[#allocation16 + $0x70] sm:$0xff]
    %v3819 = vld [vmem:[#allocation16 + $0x78] sm:$0xff]
    %v3820 = vld [vmem:[#allocation18] sm:$0x1]
    %v3822 = vlaneseq
    %v3823 = vshrl.u32 %v3822, 7
    %v3824 = vsub.s32 0, %v3823
    %v3825 = vrot.slane %v3820, %v3824
    %3827 = vmatprep.subr.mxu0 0.0
    %3828 = vmatpush1.msra.mxu0 %v3804
    %3829 = vmatprep.subr.mxu0 0.0
    %3830 = vmatpush1.msra.mxu0 %v3805
    %3831 = vmatprep.subr.mxu0 0.0
    %3832 = vmatpush1.msra.mxu0 %v3806
    %3833 = vmatprep.subr.mxu0 0.0
    %3834 = vmatpush1.msra.mxu0 %v3807
    %3835 = vmatprep.subr.mxu0 0.0
    %3836 = vmatpush1.msra.mxu0 %v3808
    %3837 = vmatprep.subr.mxu0 0.0
    %3838 = vmatpush1.msra.mxu0 %v3809
    %3839 = vmatprep.subr.mxu0 0.0
    %3840 = vmatpush1.msra.mxu0 %v3810
    %3841 = vmatprep.subr.mxu0 0.0
    %3842 = vmatpush1.msra.mxu0 %v3811
    %3843 = vmatprep.subr.mxu0 0.0
    %3844 = vmatpush1.msra.mxu0 %v3812
    %3845 = vmatprep.subr.mxu0 0.0
    %3846 = vmatpush1.msra.mxu0 %v3813
    %3847 = vmatprep.subr.mxu0 0.0
    %3848 = vmatpush1.msra.mxu0 %v3814
    %3849 = vmatprep.subr.mxu0 0.0
    %3850 = vmatpush1.msra.mxu0 %v3815
    %3851 = vmatprep.subr.mxu0 0.0
    %3852 = vmatpush1.msra.mxu0 %v3816
    %3853 = vmatprep.subr.mxu0 0.0
    %3854 = vmatpush1.msra.mxu0 %v3817
    %3855 = vmatprep.subr.mxu0 0.0
    %3856 = vmatpush1.msra.mxu0 %v3818
    %3857 = vmatprep.subr.mxu0 0.0
    %3858 = vmatpush1.msra.mxu0 %v3819
    %3859 = vmatprep.subr.mxu0 0.0
    %3860 = vmatpush1.msra.mxu0 0.0
    %3861 = vmatprep.subr.mxu0 0.0
    %3862 = vmatpush1.msra.mxu0 0.0
    %3863 = vmatprep.subr.mxu0 0.0
    %3864 = vmatpush1.msra.mxu0 0.0
    %3865 = vmatprep.subr.mxu0 0.0
    %3866 = vmatpush1.msra.mxu0 0.0
    %3867 = vmatprep.subr.mxu0 0.0
    %3868 = vmatpush1.msra.mxu0 0.0
    %3869 = vmatprep.subr.mxu0 0.0
    %3870 = vmatpush1.msra.mxu0 0.0
    %3871 = vmatprep.subr.mxu0 0.0
    %3872 = vmatpush1.msra.mxu0 0.0
    %3873 = vmatprep.subr.mxu0 0.0
    %3874 = vmatpush1.msra.mxu0 0.0
    %3875 = vmatprep.subr.mxu0 0.0
    %3876 = vmatpush1.msra.mxu0 0.0
    %3877 = vmatprep.subr.mxu0 0.0
    %3878 = vmatpush1.msra.mxu0 0.0
    %3879 = vmatprep.subr.mxu0 0.0
    %3880 = vmatpush1.msra.mxu0 0.0
    %3881 = vmatprep.subr.mxu0 0.0
    %3882 = vmatpush1.msra.mxu0 0.0
    %3883 = vmatprep.subr.mxu0 0.0
    %3884 = vmatpush1.msra.mxu0 0.0
    %3885 = vmatprep.subr.mxu0 0.0
    %3886 = vmatpush1.msra.mxu0 0.0
    %3887 = vmatprep.subr.mxu0 0.0
    %3888 = vmatpush1.msra.mxu0 0.0
    %3889 = vmatprep.subr.mxu0 0.0
    %3890 = vmatpush1.msra.mxu0 0.0
    %3891 = vmatprep.mubr.f32.mxu0 0.0
    %3892 = vmatmul.mubr.f32.gmra.mrb[0].mxu0 %v3803
    %v3893 = vpop.f32.mrb[0].mxu0
    %v3894 = vadd.f32 %v3825, %v3893
    %v3895 = vpop.f32.mrb[0].mxu0
    %3896 = vdwg.mxu0
    %3897 = vst [vmem:[#allocation19] sm:$0xff] %v3894
    // Predicated region
    $region74: #{lstm_model_forward.1} parent=1 // pred_check
      _
    $region75: #{lstm_model_forward.1} parent=1 // pred_check_branch
      %3899 = sbr.rel (0) target = $region77
    $region76: #{lstm_model_forward.1} parent=1 // pred_region
      %s3901 = ssub.s32 128, 128
      %3902 = vsyncadd [#allocation6], %s3901
      %s3904 = sshll.u32 [#allocation19], 4
      %s3905 = int_to_ptr.vmem [resolvable:$true] %s3904
      %3907 = dma.vmem_to_hbm [thread:$0]  %s3905, 128, %s9, [#allocation6]
    $region77: #{lstm_model_forward.1} parent=1 // pred_fallthru
      _
    // Predicated region
    $region78: #{lstm_model_forward.1} parent=1 // pred_check
      _
    $region79: #{lstm_model_forward.1} parent=1 // pred_check_branch
      %3909 = sbr.rel (0) target = $region81
    $region80: #{lstm_model_forward.1} parent=1 // pred_region
      %3910 = dma.done [#allocation6], 128
    $region81: #{lstm_model_forward.1} parent=1 // pred_fallthru
      _
    %3911 = vsyncpa [#allocation5], 1
    %3912 = vsyncpa [#allocation8], 1
    %3913 = vsyncpa [#allocation11], 1
    %3914 = vsyncpa [#allocation14], 1
    %3915 = vsyncpa [#allocation17], 1
    %3916 = vsyncpa [#allocation6], 1

</llo_original>
